<compile_context>
chip_gen: v5e
topology: v5e:2x2
jax: 0.10.0
libtpu: 0.0.40
codegen_flags: <defaults>
</compile_context>

<pallas_src>
import functools

import jax
import jax.numpy as jnp
from jax.experimental import pallas as pl
from jax.experimental.pallas import tpu as pltpu


def _row_tile(m, cap=512):
    """Largest multiple of 8 (<= cap, >= 2 tiles when possible) dividing m."""
    t = min(cap, max(8, m // 2))
    t -= t % 8
    while t >= 8:
        if m % t == 0:
            return t
        t -= 8
    return m


# ---------------------------------------------------------------------------
# K1 / K3: pointwise (1x1) conv [+ ReLU] + per-tile BN partial statistics
# ---------------------------------------------------------------------------
def _pointwise_kernel(x_ref, w_ref, b_ref, y_ref, s_ref, q_ref, *, relu):
    # x_ref: (TM, Cin)  w_ref: (Cin, Cout)  b_ref: (1, Cout)
    y = jnp.dot(x_ref[...], w_ref[...], preferred_element_type=jnp.float32)
    y = y + b_ref[...]
    if relu:
        y = jnp.maximum(y, 0.0)
    y_ref[...] = y.astype(y_ref.dtype)
    # Pass 1 of the two-pass BatchNorm: per-tile sum / sum-of-squares.
    s_ref[0] = jnp.sum(y, axis=0, keepdims=True)
    q_ref[0] = jnp.sum(y * y, axis=0, keepdims=True)


def _pointwise_conv(x, w, b, *, relu):
    """x: (M, Cin) channels-last rows; w: (Cin, Cout); b: (Cout,)."""
    m, cin = x.shape
    cout = w.shape[1]
    tm = _row_tile(m)
    g = m // tm
    out_shape = (
        jax.ShapeDtypeStruct((m, cout), x.dtype),
        jax.ShapeDtypeStruct((g, 1, cout), jnp.float32),
        jax.ShapeDtypeStruct((g, 1, cout), jnp.float32),
    )
    y, s, q = pl.pallas_call(
        functools.partial(_pointwise_kernel, relu=relu),
        out_shape=out_shape,
        grid=(g,),
        in_specs=[
            pl.BlockSpec((tm, cin), lambda i: (i, 0)),
            pl.BlockSpec((cin, cout), lambda i: (0, 0)),
            pl.BlockSpec((1, cout), lambda i: (0, 0)),
        ],
        out_specs=(
            pl.BlockSpec((tm, cout), lambda i: (i, 0)),
            pl.BlockSpec((1, 1, cout), lambda i: (i, 0, 0)),
            pl.BlockSpec((1, 1, cout), lambda i: (i, 0, 0)),
        ),
        compiler_params=pltpu.CompilerParams(
            dimension_semantics=("parallel",)),
    )(x, w, b.reshape(1, cout).astype(jnp.float32))
    return y, s, q


# ---------------------------------------------------------------------------
# K2: BN1-affine -> zero-pad (VMEM scratch) -> 3x3 conv + bias + ReLU
# ---------------------------------------------------------------------------
def _conv3x3_kernel(y1_ref, a_ref, c_ref, w_ref, b_ref,
                    y2_ref, s_ref, q_ref, zpad_ref, *, relu):
    # y1_ref : (1, H, W, Cin)  pre-BN1 stage-1 activations (one sample)
    # a/c    : (1, 1, Cin)     BN1 scale / shift from global batch statistics
    # w_ref  : (3, 3, Cin, Cout), b_ref: (1, Cout)
    # zpad   : (H+2, W+2, Cin) VMEM scratch (zero-padded, post-BN1 domain)
    _, h, w_dim, cin = y1_ref.shape
    cout = y2_ref.shape[3]

    # Padding must be zero *after* BN1 (PyTorch pads the BN output).  Re-zeroed
    # every step so correctness does not depend on grid->core assignment.
    zpad_ref[...] = jnp.zeros_like(zpad_ref)
    zpad_ref[1:h + 1, 1:w_dim + 1, :] = y1_ref[0] * a_ref[...] + c_ref[...]

    zp = zpad_ref[...]
    wt = w_ref[...]
    acc = jnp.zeros((h * w_dim, cout), jnp.float32)
    # 3x3 conv as 9 shifted (H*W, Cin) x (Cin, Cout) MXU matmuls.
    # TODO(synk): im2col (K = 9*Cin) single matmul for larger channel counts.
    for kh in range(3):
        for kw in range(3):
            patch = zp[kh:kh + h, kw:kw + w_dim, :].reshape(h * w_dim, cin)
            acc = acc + jnp.dot(patch, wt[kh, kw],
                                preferred_element_type=jnp.float32)
    acc = acc + b_ref[...]
    if relu:
        acc = jnp.maximum(acc, 0.0)
    y2_ref[0] = acc.reshape(h, w_dim, cout).astype(y2_ref.dtype)
    s_ref[0] = jnp.sum(acc, axis=0, keepdims=True)
    q_ref[0] = jnp.sum(acc * acc, axis=0, keepdims=True)


def _conv3x3(y1_nhwc, a1, c1, w_hwio, b, *, relu):
    n, h, w_dim, cin = y1_nhwc.shape
    cout = w_hwio.shape[3]
    out_shape = (
        jax.ShapeDtypeStruct((n, h, w_dim, cout), y1_nhwc.dtype),
        jax.ShapeDtypeStruct((n, 1, cout), jnp.float32),
        jax.ShapeDtypeStruct((n, 1, cout), jnp.float32),
    )
    y2, s, q = pl.pallas_call(
        functools.partial(_conv3x3_kernel, relu=relu),
        out_shape=out_shape,
        grid=(n,),
        in_specs=[
            pl.BlockSpec((1, h, w_dim, cin), lambda i: (i, 0, 0, 0)),
            pl.BlockSpec((1, 1, cin), lambda i: (0, 0, 0)),
            pl.BlockSpec((1, 1, cin), lambda i: (0, 0, 0)),
            pl.BlockSpec((3, 3, cin, cout), lambda i: (0, 0, 0, 0)),
            pl.BlockSpec((1, cout), lambda i: (0, 0)),
        ],
        out_specs=(
            pl.BlockSpec((1, h, w_dim, cout), lambda i: (i, 0, 0, 0)),
            pl.BlockSpec((1, 1, cout), lambda i: (i, 0, 0)),
            pl.BlockSpec((1, 1, cout), lambda i: (i, 0, 0)),
        ),
        scratch_shapes=[pltpu.VMEM((h + 2, w_dim + 2, cin), jnp.float32)],
        compiler_params=pltpu.CompilerParams(
            dimension_semantics=("parallel",)),
    )(y1_nhwc,
      a1.reshape(1, 1, cin).astype(jnp.float32),
      c1.reshape(1, 1, cin).astype(jnp.float32),
      w_hwio,
      b.reshape(1, cout).astype(jnp.float32))
    return y2, s, q


# ---------------------------------------------------------------------------
# K4: BN3 affine + residual add + final ReLU
# ---------------------------------------------------------------------------
def _bn_add_relu_kernel(t_ref, skip_ref, a_ref, c_ref, o_ref):
    y = t_ref[...] * a_ref[...] + c_ref[...] + skip_ref[...]
    o_ref[...] = jnp.maximum(y, 0.0).astype(o_ref.dtype)


def _bn_add_relu(t, skip, a, c):
    m, ch = t.shape
    tm = _row_tile(m)
    return pl.pallas_call(
        _bn_add_relu_kernel,
        out_shape=jax.ShapeDtypeStruct((m, ch), skip.dtype),
        grid=(m // tm,),
        in_specs=[
            pl.BlockSpec((tm, ch), lambda i: (i, 0)),
            pl.BlockSpec((tm, ch), lambda i: (i, 0)),
            pl.BlockSpec((1, ch), lambda i: (0, 0)),
            pl.BlockSpec((1, ch), lambda i: (0, 0)),
        ],
        out_specs=pl.BlockSpec((tm, ch), lambda i: (i, 0)),
        compiler_params=pltpu.CompilerParams(
            dimension_semantics=("parallel",)),
    )(t, skip, a.reshape(1, ch).astype(jnp.float32),
      c.reshape(1, ch).astype(jnp.float32))


# ---------------------------------------------------------------------------
# BN finalisation (tiny O(C) math): sum/sumsq -> per-channel scale & shift
# ---------------------------------------------------------------------------
def _bn_scale_shift(psum, psumsq, count, gamma, beta, eps):
    s = jnp.sum(psum, axis=(0, 1))
    q = jnp.sum(psumsq, axis=(0, 1))
    mean = s / count
    var = jnp.maximum(q / count - mean * mean, 0.0)   # biased batch variance
    a = gamma.astype(jnp.float32) * jax.lax.rsqrt(var + eps)
    c = beta.astype(jnp.float32) - a * mean
    return a, c


# ---------------------------------------------------------------------------
# Full bottleneck block
# ---------------------------------------------------------------------------
def resnet_bottleneck_block(x_nchw, w1, b1, g1, be1, w2, b2, g2, be2,
                            w3, b3, g3, be3, *, eps=1e-5):
    n, cin, h, w_dim = x_nchw.shape
    cb = w1.shape[0]
    m = n * h * w_dim

    # NCHW (PyTorch) -> NHWC so channels sit on the lane axis.
    # TODO(synk): keep the surrounding model NHWC end-to-end to drop these two
    # boundary transposes.
    x_nhwc = jnp.transpose(x_nchw, (0, 2, 3, 1))
    x_flat = x_nhwc.reshape(m, cin)

    # --- stage 1: 1x1 conv + bias + ReLU (+ BN1 partial stats) --------------
    y1, s1, q1 = _pointwise_conv(x_flat, w1.reshape(cb, cin).T, b1, relu=True)
    a1, c1 = _bn_scale_shift(s1, q1, m, g1, be1, eps)

    # --- stage 2: BN1 -> 3x3 conv + bias + ReLU (+ BN2 partial stats) -------
    w2_hwio = jnp.transpose(w2, (2, 3, 1, 0))          # (3,3,Cb_in,Cb_out)
    y2, s2, q2 = _conv3x3(y1.reshape(n, h, w_dim, cb), a1, c1, w2_hwio, b2,
                          relu=True)
    a2, c2 = _bn_scale_shift(s2, q2, m, g2, be2, eps)

    # --- stage 3: BN2 folded exactly into the 1x1 conv (k=1, no padding) ----
    w3m = w3.reshape(cin, cb)                          # [out, in]
    w3_folded = (w3m * a2[None, :]).T.astype(w3.dtype)  # (Cb, Cin)
    b3_folded = w3m.astype(jnp.float32) @ c2 + b3.astype(jnp.float32)
    t3, s3, q3 = _pointwise_conv(y2.reshape(m, cb), w3_folded, b3_folded,
                                 relu=False)
    a3, c3 = _bn_scale_shift(s3, q3, m, g3, be3, eps)

    # --- stage 4: BN3 + residual add + final ReLU ---------------------------
    out_flat = _bn_add_relu(t3, x_flat, a3, c3)
    return jnp.transpose(out_flat.reshape(n, h, w_dim, cin), (0, 3, 1, 2))


# ---------------------------------------------------------------------------
# Pure-JAX reference (matches PyTorch training-mode forward) for verification
# ---------------------------------------------------------------------------
def _reference(x, w1, b1, g1, be1, w2, b2, g2, be2, w3, b3, g3, be3, eps=1e-5):
    def conv(x, w, b, pad):
        y = jax.lax.conv_general_dilated(
            x, w, window_strides=(1, 1), padding=((pad, pad), (pad, pad)),
            dimension_numbers=("NCHW", "OIHW", "NCHW"),
            precision=jax.lax.Precision.HIGHEST)
        return y + b.reshape(1, -1, 1, 1)

    def bn(y, g, be):
        mean = jnp.mean(y, axis=(0, 2, 3), keepdims=True)
        var = jnp.mean((y - mean) ** 2, axis=(0, 2, 3), keepdims=True)
        yhat = (y - mean) * jax.lax.rsqrt(var + eps)
        return yhat * g.reshape(1, -1, 1, 1) + be.reshape(1, -1, 1, 1)

    skip = x
    y = bn(jnp.maximum(conv(x, w1, b1, 0), 0.0), g1, be1)
    y = bn(jnp.maximum(conv(y, w2, b2, 1), 0.0), g2, be2)
    y = bn(conv(y, w3, b3, 0), g3, be3)
    return jnp.maximum(y + skip, 0.0)


if __name__ == "__main__":
    key = jax.random.PRNGKey(0)
    ks = jax.random.split(key, 13)

    N, CIN, H, W = 2, 32, 16, 16
    CB = CIN // 4

    x = jax.random.normal(ks[0], (N, CIN, H, W), jnp.float32)

    w1 = 0.1 * jax.random.normal(ks[1], (CB, CIN, 1, 1), jnp.float32)
    b1 = 0.1 * jax.random.normal(ks[2], (CB,), jnp.float32)
    g1 = 1.0 + 0.1 * jax.random.normal(ks[3], (CB,), jnp.float32)
    be1 = 0.1 * jax.random.normal(ks[4], (CB,), jnp.float32)

    w2 = 0.1 * jax.random.normal(ks[5], (CB, CB, 3, 3), jnp.float32)
    b2 = 0.1 * jax.random.normal(ks[6], (CB,), jnp.float32)
    g2 = 1.0 + 0.1 * jax.random.normal(ks[7], (CB,), jnp.float32)
    be2 = 0.1 * jax.random.normal(ks[8], (CB,), jnp.float32)

    w3 = 0.1 * jax.random.normal(ks[9], (CIN, CB, 1, 1), jnp.float32)
    b3 = 0.1 * jax.random.normal(ks[10], (CIN,), jnp.float32)
    g3 = 1.0 + 0.1 * jax.random.normal(ks[11], (CIN,), jnp.float32)
    be3 = 0.1 * jax.random.normal(ks[12], (CIN,), jnp.float32)

    fwd = jax.jit(resnet_bottleneck_block)
    out = fwd(x, w1, b1, g1, be1, w2, b2, g2, be2, w3, b3, g3, be3)
    out = jax.block_until_ready(out)

    ref = _reference(x, w1, b1, g1, be1, w2, b2, g2, be2, w3, b3, g3, be3)
    assert out.shape == (N, CIN, H, W)
    assert bool(jnp.allclose(out, ref, atol=2e-3, rtol=2e-3)), \
        "mismatch vs reference"

    print("KERNEL_OK")
</pallas_src>

<mosaic_0001>
module attributes {stable_mosaic.version = 11 : i64} {
  func.func @_pointwise_kernel(%arg0: i32, %arg1: memref<256x32xf32, #tpu.memory_space<vmem>>, %arg2: memref<32x8xf32, #tpu.memory_space<vmem>>, %arg3: memref<1x8xf32, #tpu.memory_space<vmem>>, %arg4: memref<256x8xf32, #tpu.memory_space<vmem>>, %arg5: memref<1x1x8xf32, #tpu.memory_space<vmem>>, %arg6: memref<1x1x8xf32, #tpu.memory_space<vmem>>) attributes {dimension_semantics = [#tpu.dimension_semantics<parallel>], iteration_bounds = array<i64: 2>, scalar_prefetch = 0 : i64, scratch_operands = 0 : i64, tpu.core_type = #tpu.core_type<tc>, window_params = [{transform_indices = @transform_0, window_bounds = array<i64: 256, 32>}, {pipeline_mode = #tpu.pipeline_mode<synchronous>, transform_indices = @transform_1, window_bounds = array<i64: 32, 8>}, {pipeline_mode = #tpu.pipeline_mode<synchronous>, transform_indices = @transform_2, window_bounds = array<i64: 1, 8>}, {transform_indices = @transform_3, window_bounds = array<i64: 256, 8>}, {transform_indices = @transform_4, window_bounds = array<i64: 1, 1, 8>}, {transform_indices = @transform_5, window_bounds = array<i64: 1, 1, 8>}]} {
    %c0 = arith.constant 0 : index
    %c0_0 = arith.constant 0 : index
    %0 = vector.load %arg1[%c0, %c0_0] : memref<256x32xf32, #tpu.memory_space<vmem>>, vector<256x32xf32>
    %c0_1 = arith.constant 0 : index
    %c0_2 = arith.constant 0 : index
    %1 = vector.load %arg2[%c0_1, %c0_2] : memref<32x8xf32, #tpu.memory_space<vmem>>, vector<32x8xf32>
    %cst = arith.constant dense<0.000000e+00> : vector<256x8xf32>
    %2 = tpu.matmul %0, %1, %cst {dimension_numbers = #tpu.dot_dimension_numbers<[1], [0], [0], [1], [0, 0, 1, 1], [], []>} : vector<256x32xf32>, vector<32x8xf32>, vector<256x8xf32> -> vector<256x8xf32>
    %c0_3 = arith.constant 0 : index
    %c0_4 = arith.constant 0 : index
    %3 = vector.load %arg3[%c0_3, %c0_4] : memref<1x8xf32, #tpu.memory_space<vmem>>, vector<1x8xf32>
    %4 = vector.broadcast %3 : vector<1x8xf32> to vector<256x8xf32>
    %5 = arith.addf %2, %4 : vector<256x8xf32>
    %cst_5 = arith.constant 0.000000e+00 : f32
    %6 = vector.broadcast %cst_5 : f32 to vector<256x8xf32>
    %7 = arith.maximumf %5, %6 : vector<256x8xf32>
    %c0_6 = arith.constant 0 : index
    %c0_7 = arith.constant 0 : index
    %8 = vector.load %arg4[%c0_6, %c0_7] : memref<256x8xf32, #tpu.memory_space<vmem>>, vector<256x8xf32>
    tpu.vector_store %arg4[%c0_6, %c0_7], %7 {strides = array<i32>} : memref<256x8xf32, #tpu.memory_space<vmem>>, vector<256x8xf32>,
    %cst_8 = arith.constant dense<0.000000e+00> : vector<8xf32>
    %9 = vector.multi_reduction <add>, %7, %cst_8 [0] : vector<256x8xf32> to vector<8xf32>
    %10 = vector.shape_cast %9 : vector<8xf32> to vector<1x8xf32>
    %c0_9 = arith.constant 0 : index
    %c0_10 = arith.constant 0 : index
    %c0_11 = arith.constant 0 : index
    %11 = vector.load %arg5[%c0_9, %c0_10, %c0_11] : memref<1x1x8xf32, #tpu.memory_space<vmem>>, vector<1x1x8xf32>
    %12 = vector.shape_cast %11 : vector<1x1x8xf32> to vector<1x8xf32>
    %13 = vector.shape_cast %10 : vector<1x8xf32> to vector<1x1x8xf32>
    tpu.vector_store %arg5[%c0_9, %c0_10, %c0_11], %13 {strides = array<i32>} : memref<1x1x8xf32, #tpu.memory_space<vmem>>, vector<1x1x8xf32>,
    %14 = arith.mulf %7, %7 : vector<256x8xf32>
    %cst_12 = arith.constant dense<0.000000e+00> : vector<8xf32>
    %15 = vector.multi_reduction <add>, %14, %cst_12 [0] : vector<256x8xf32> to vector<8xf32>
    %16 = vector.shape_cast %15 : vector<8xf32> to vector<1x8xf32>
    %c0_13 = arith.constant 0 : index
    %c0_14 = arith.constant 0 : index
    %c0_15 = arith.constant 0 : index
    %17 = vector.load %arg6[%c0_13, %c0_14, %c0_15] : memref<1x1x8xf32, #tpu.memory_space<vmem>>, vector<1x1x8xf32>
    %18 = vector.shape_cast %17 : vector<1x1x8xf32> to vector<1x8xf32>
    %19 = vector.shape_cast %16 : vector<1x8xf32> to vector<1x1x8xf32>
    tpu.vector_store %arg6[%c0_13, %c0_14, %c0_15], %19 {strides = array<i32>} : memref<1x1x8xf32, #tpu.memory_space<vmem>>, vector<1x1x8xf32>,
    return
  }
  func.func @transform_0(%arg0: i32) -> (i32, i32) {
    %c0_i32 = arith.constant 0 : i32
    %c0_i32_0 = arith.constant 0 : i32
    return %arg0, %c0_i32 : i32, i32
  }
  func.func @transform_1(%arg0: i32) -> (i32, i32) {
    %c0_i32 = arith.constant 0 : i32
    %c0_i32_0 = arith.constant 0 : i32
    %c0_i32_1 = arith.constant 0 : i32
    return %c0_i32, %c0_i32_0 : i32, i32
  }
  func.func @transform_2(%arg0: i32) -> (i32, i32) {
    %c0_i32 = arith.constant 0 : i32
    %c0_i32_0 = arith.constant 0 : i32
    %c0_i32_1 = arith.constant 0 : i32
    return %c0_i32, %c0_i32_0 : i32, i32
  }
  func.func @transform_3(%arg0: i32) -> (i32, i32) {
    %c0_i32 = arith.constant 0 : i32
    %c0_i32_0 = arith.constant 0 : i32
    return %arg0, %c0_i32 : i32, i32
  }
  func.func @transform_4(%arg0: i32) -> (i32, i32, i32) {
    %c0_i32 = arith.constant 0 : i32
    %c0_i32_0 = arith.constant 0 : i32
    %c0_i32_1 = arith.constant 0 : i32
    return %arg0, %c0_i32, %c0_i32_0 : i32, i32, i32
  }
  func.func @transform_5(%arg0: i32) -> (i32, i32, i32) {
    %c0_i32 = arith.constant 0 : i32
    %c0_i32_0 = arith.constant 0 : i32
    %c0_i32_1 = arith.constant 0 : i32
    return %arg0, %c0_i32, %c0_i32_0 : i32, i32, i32
  }
}

module attributes {stable_mosaic.version = 11 : i64} {
  func.func @_conv3x3_kernel(%arg0: i32, %arg1: memref<1x16x16x8xf32, #tpu.memory_space<vmem>>, %arg2: memref<1x1x8xf32, #tpu.memory_space<vmem>>, %arg3: memref<1x1x8xf32, #tpu.memory_space<vmem>>, %arg4: memref<3x3x8x8xf32, #tpu.memory_space<vmem>>, %arg5: memref<1x8xf32, #tpu.memory_space<vmem>>, %arg6: memref<1x16x16x8xf32, #tpu.memory_space<vmem>>, %arg7: memref<1x1x8xf32, #tpu.memory_space<vmem>>, %arg8: memref<1x1x8xf32, #tpu.memory_space<vmem>>, %arg9: memref<18x18x8xf32, #tpu.memory_space<vmem>>) attributes {dimension_semantics = [#tpu.dimension_semantics<parallel>], iteration_bounds = array<i64: 2>, scalar_prefetch = 0 : i64, scratch_operands = 1 : i64, tpu.core_type = #tpu.core_type<tc>, window_params = [{transform_indices = @transform_0, window_bounds = array<i64: 1, 16, 16, 8>}, {pipeline_mode = #tpu.pipeline_mode<synchronous>, transform_indices = @transform_1, window_bounds = array<i64: 1, 1, 8>}, {pipeline_mode = #tpu.pipeline_mode<synchronous>, transform_indices = @transform_2, window_bounds = array<i64: 1, 1, 8>}, {pipeline_mode = #tpu.pipeline_mode<synchronous>, transform_indices = @transform_3, window_bounds = array<i64: 3, 3, 8, 8>}, {pipeline_mode = #tpu.pipeline_mode<synchronous>, transform_indices = @transform_4, window_bounds = array<i64: 1, 8>}, {transform_indices = @transform_5, window_bounds = array<i64: 1, 16, 16, 8>}, {transform_indices = @transform_6, window_bounds = array<i64: 1, 1, 8>}, {transform_indices = @transform_7, window_bounds = array<i64: 1, 1, 8>}]} {
    %cst = arith.constant 0.000000e+00 : f32
    %0 = vector.broadcast %cst : f32 to vector<18x18x8xf32>
    %c0 = arith.constant 0 : index
    %c0_0 = arith.constant 0 : index
    %c0_1 = arith.constant 0 : index
    %1 = vector.load %arg9[%c0, %c0_0, %c0_1] : memref<18x18x8xf32, #tpu.memory_space<vmem>>, vector<18x18x8xf32>
    tpu.vector_store %arg9[%c0, %c0_0, %c0_1], %0 {strides = array<i32>} : memref<18x18x8xf32, #tpu.memory_space<vmem>>, vector<18x18x8xf32>,
    %c0_2 = arith.constant 0 : index
    %c0_3 = arith.constant 0 : index
    %c0_4 = arith.constant 0 : index
    %c0_5 = arith.constant 0 : index
    %2 = vector.load %arg1[%c0_2, %c0_3, %c0_4, %c0_5] : memref<1x16x16x8xf32, #tpu.memory_space<vmem>>, vector<1x16x16x8xf32>
    %3 = vector.shape_cast %2 : vector<1x16x16x8xf32> to vector<16x16x8xf32>
    %c0_6 = arith.constant 0 : index
    %c0_7 = arith.constant 0 : index
    %c0_8 = arith.constant 0 : index
    %4 = vector.load %arg2[%c0_6, %c0_7, %c0_8] : memref<1x1x8xf32, #tpu.memory_space<vmem>>, vector<1x1x8xf32>
    %5 = vector.broadcast %4 : vector<1x1x8xf32> to vector<16x16x8xf32>
    %6 = arith.mulf %3, %5 : vector<16x16x8xf32>
    %c0_9 = arith.constant 0 : index
    %c0_10 = arith.constant 0 : index
    %c0_11 = arith.constant 0 : index
    %7 = vector.load %arg3[%c0_9, %c0_10, %c0_11] : memref<1x1x8xf32, #tpu.memory_space<vmem>>, vector<1x1x8xf32>
    %8 = vector.broadcast %7 : vector<1x1x8xf32> to vector<16x16x8xf32>
    %9 = arith.addf %6, %8 : vector<16x16x8xf32>
    %c1 = arith.constant 1 : index
    %c1_12 = arith.constant 1 : index
    %c0_13 = arith.constant 0 : index
    %10 = vector.load %arg9[%c1, %c1_12, %c0_13] : memref<18x18x8xf32, #tpu.memory_space<vmem>>, vector<16x16x8xf32>
    tpu.vector_store %arg9[%c1, %c1_12, %c0_13], %9 {strides = array<i32>} : memref<18x18x8xf32, #tpu.memory_space<vmem>>, vector<16x16x8xf32>,
    %c0_14 = arith.constant 0 : index
    %c0_15 = arith.constant 0 : index
    %c0_16 = arith.constant 0 : index
    %11 = vector.load %arg9[%c0_14, %c0_15, %c0_16] : memref<18x18x8xf32, #tpu.memory_space<vmem>>, vector<18x18x8xf32>
    %c0_17 = arith.constant 0 : index
    %c0_18 = arith.constant 0 : index
    %c0_19 = arith.constant 0 : index
    %c0_20 = arith.constant 0 : index
    %12 = vector.load %arg4[%c0_17, %c0_18, %c0_19, %c0_20] : memref<3x3x8x8xf32, #tpu.memory_space<vmem>>, vector<3x3x8x8xf32>
    %cst_21 = arith.constant 0.000000e+00 : f32
    %13 = vector.broadcast %cst_21 : f32 to vector<256x8xf32>
    %14 = vector.extract_strided_slice %11 {offsets = [0, 0, 0], sizes = [16, 16, 8], strides = [1, 1, 1]} : vector<18x18x8xf32> to vector<16x16x8xf32>
    %15 = vector.shape_cast %14 : vector<16x16x8xf32> to vector<256x8xf32>
    %16 = vector.extract_strided_slice %12 {offsets = [0, 0, 0, 0], sizes = [1, 1, 8, 8], strides = [1, 1, 1, 1]} : vector<3x3x8x8xf32> to vector<1x1x8x8xf32>
    %17 = vector.shape_cast %16 : vector<1x1x8x8xf32> to vector<8x8xf32>
    %cst_22 = arith.constant dense<0.000000e+00> : vector<256x8xf32>
    %18 = tpu.matmul %15, %17, %cst_22 {dimension_numbers = #tpu.dot_dimension_numbers<[1], [0], [0], [1], [0, 0, 1, 1], [], []>} : vector<256x8xf32>, vector<8x8xf32>, vector<256x8xf32> -> vector<256x8xf32>
    %19 = arith.addf %13, %18 : vector<256x8xf32>
    %20 = vector.extract_strided_slice %11 {offsets = [0, 1, 0], sizes = [16, 16, 8], strides = [1, 1, 1]} : vector<18x18x8xf32> to vector<16x16x8xf32>
    %21 = vector.shape_cast %20 : vector<16x16x8xf32> to vector<256x8xf32>
    %22 = vector.extract_strided_slice %12 {offsets = [0, 1, 0, 0], sizes = [1, 1, 8, 8], strides = [1, 1, 1, 1]} : vector<3x3x8x8xf32> to vector<1x1x8x8xf32>
    %23 = vector.shape_cast %22 : vector<1x1x8x8xf32> to vector<8x8xf32>
    %cst_23 = arith.constant dense<0.000000e+00> : vector<256x8xf32>
    %24 = tpu.matmul %21, %23, %cst_23 {dimension_numbers = #tpu.dot_dimension_numbers<[1], [0], [0], [1], [0, 0, 1, 1], [], []>} : vector<256x8xf32>, vector<8x8xf32>, vector<256x8xf32> -> vector<256x8xf32>
    %25 = arith.addf %19, %24 : vector<256x8xf32>
    %26 = vector.extract_strided_slice %11 {offsets = [0, 2, 0], sizes = [16, 16, 8], strides = [1, 1, 1]} : vector<18x18x8xf32> to vector<16x16x8xf32>
    %27 = vector.shape_cast %26 : vector<16x16x8xf32> to vector<256x8xf32>
    %28 = vector.extract_strided_slice %12 {offsets = [0, 2, 0, 0], sizes = [1, 1, 8, 8], strides = [1, 1, 1, 1]} : vector<3x3x8x8xf32> to vector<1x1x8x8xf32>
    %29 = vector.shape_cast %28 : vector<1x1x8x8xf32> to vector<8x8xf32>
    %cst_24 = arith.constant dense<0.000000e+00> : vector<256x8xf32>
    %30 = tpu.matmul %27, %29, %cst_24 {dimension_numbers = #tpu.dot_dimension_numbers<[1], [0], [0], [1], [0, 0, 1, 1], [], []>} : vector<256x8xf32>, vector<8x8xf32>, vector<256x8xf32> -> vector<256x8xf32>
    %31 = arith.addf %25, %30 : vector<256x8xf32>
    %32 = vector.extract_strided_slice %11 {offsets = [1, 0, 0], sizes = [16, 16, 8], strides = [1, 1, 1]} : vector<18x18x8xf32> to vector<16x16x8xf32>
    %33 = vector.shape_cast %32 : vector<16x16x8xf32> to vector<256x8xf32>
    %34 = vector.extract_strided_slice %12 {offsets = [1, 0, 0, 0], sizes = [1, 1, 8, 8], strides = [1, 1, 1, 1]} : vector<3x3x8x8xf32> to vector<1x1x8x8xf32>
    %35 = vector.shape_cast %34 : vector<1x1x8x8xf32> to vector<8x8xf32>
    %cst_25 = arith.constant dense<0.000000e+00> : vector<256x8xf32>
    %36 = tpu.matmul %33, %35, %cst_25 {dimension_numbers = #tpu.dot_dimension_numbers<[1], [0], [0], [1], [0, 0, 1, 1], [], []>} : vector<256x8xf32>, vector<8x8xf32>, vector<256x8xf32> -> vector<256x8xf32>
    %37 = arith.addf %31, %36 : vector<256x8xf32>
    %38 = vector.extract_strided_slice %11 {offsets = [1, 1, 0], sizes = [16, 16, 8], strides = [1, 1, 1]} : vector<18x18x8xf32> to vector<16x16x8xf32>
    %39 = vector.shape_cast %38 : vector<16x16x8xf32> to vector<256x8xf32>
    %40 = vector.extract_strided_slice %12 {offsets = [1, 1, 0, 0], sizes = [1, 1, 8, 8], strides = [1, 1, 1, 1]} : vector<3x3x8x8xf32> to vector<1x1x8x8xf32>
    %41 = vector.shape_cast %40 : vector<1x1x8x8xf32> to vector<8x8xf32>
    %cst_26 = arith.constant dense<0.000000e+00> : vector<256x8xf32>
    %42 = tpu.matmul %39, %41, %cst_26 {dimension_numbers = #tpu.dot_dimension_numbers<[1], [0], [0], [1], [0, 0, 1, 1], [], []>} : vector<256x8xf32>, vector<8x8xf32>, vector<256x8xf32> -> vector<256x8xf32>
    %43 = arith.addf %37, %42 : vector<256x8xf32>
    %44 = vector.extract_strided_slice %11 {offsets = [1, 2, 0], sizes = [16, 16, 8], strides = [1, 1, 1]} : vector<18x18x8xf32> to vector<16x16x8xf32>
    %45 = vector.shape_cast %44 : vector<16x16x8xf32> to vector<256x8xf32>
    %46 = vector.extract_strided_slice %12 {offsets = [1, 2, 0, 0], sizes = [1, 1, 8, 8], strides = [1, 1, 1, 1]} : vector<3x3x8x8xf32> to vector<1x1x8x8xf32>
    %47 = vector.shape_cast %46 : vector<1x1x8x8xf32> to vector<8x8xf32>
    %cst_27 = arith.constant dense<0.000000e+00> : vector<256x8xf32>
    %48 = tpu.matmul %45, %47, %cst_27 {dimension_numbers = #tpu.dot_dimension_numbers<[1], [0], [0], [1], [0, 0, 1, 1], [], []>} : vector<256x8xf32>, vector<8x8xf32>, vector<256x8xf32> -> vector<256x8xf32>
    %49 = arith.addf %43, %48 : vector<256x8xf32>
    %50 = vector.extract_strided_slice %11 {offsets = [2, 0, 0], sizes = [16, 16, 8], strides = [1, 1, 1]} : vector<18x18x8xf32> to vector<16x16x8xf32>
    %51 = vector.shape_cast %50 : vector<16x16x8xf32> to vector<256x8xf32>
    %52 = vector.extract_strided_slice %12 {offsets = [2, 0, 0, 0], sizes = [1, 1, 8, 8], strides = [1, 1, 1, 1]} : vector<3x3x8x8xf32> to vector<1x1x8x8xf32>
    %53 = vector.shape_cast %52 : vector<1x1x8x8xf32> to vector<8x8xf32>
    %cst_28 = arith.constant dense<0.000000e+00> : vector<256x8xf32>
    %54 = tpu.matmul %51, %53, %cst_28 {dimension_numbers = #tpu.dot_dimension_numbers<[1], [0], [0], [1], [0, 0, 1, 1], [], []>} : vector<256x8xf32>, vector<8x8xf32>, vector<256x8xf32> -> vector<256x8xf32>
    %55 = arith.addf %49, %54 : vector<256x8xf32>
    %56 = vector.extract_strided_slice %11 {offsets = [2, 1, 0], sizes = [16, 16, 8], strides = [1, 1, 1]} : vector<18x18x8xf32> to vector<16x16x8xf32>
    %57 = vector.shape_cast %56 : vector<16x16x8xf32> to vector<256x8xf32>
    %58 = vector.extract_strided_slice %12 {offsets = [2, 1, 0, 0], sizes = [1, 1, 8, 8], strides = [1, 1, 1, 1]} : vector<3x3x8x8xf32> to vector<1x1x8x8xf32>
    %59 = vector.shape_cast %58 : vector<1x1x8x8xf32> to vector<8x8xf32>
    %cst_29 = arith.constant dense<0.000000e+00> : vector<256x8xf32>
    %60 = tpu.matmul %57, %59, %cst_29 {dimension_numbers = #tpu.dot_dimension_numbers<[1], [0], [0], [1], [0, 0, 1, 1], [], []>} : vector<256x8xf32>, vector<8x8xf32>, vector<256x8xf32> -> vector<256x8xf32>
    %61 = arith.addf %55, %60 : vector<256x8xf32>
    %62 = vector.extract_strided_slice %11 {offsets = [2, 2, 0], sizes = [16, 16, 8], strides = [1, 1, 1]} : vector<18x18x8xf32> to vector<16x16x8xf32>
    %63 = vector.shape_cast %62 : vector<16x16x8xf32> to vector<256x8xf32>
    %64 = vector.extract_strided_slice %12 {offsets = [2, 2, 0, 0], sizes = [1, 1, 8, 8], strides = [1, 1, 1, 1]} : vector<3x3x8x8xf32> to vector<1x1x8x8xf32>
    %65 = vector.shape_cast %64 : vector<1x1x8x8xf32> to vector<8x8xf32>
    %cst_30 = arith.constant dense<0.000000e+00> : vector<256x8xf32>
    %66 = tpu.matmul %63, %65, %cst_30 {dimension_numbers = #tpu.dot_dimension_numbers<[1], [0], [0], [1], [0, 0, 1, 1], [], []>} : vector<256x8xf32>, vector<8x8xf32>, vector<256x8xf32> -> vector<256x8xf32>
    %67 = arith.addf %61, %66 : vector<256x8xf32>
    %c0_31 = arith.constant 0 : index
    %c0_32 = arith.constant 0 : index
    %68 = vector.load %arg5[%c0_31, %c0_32] : memref<1x8xf32, #tpu.memory_space<vmem>>, vector<1x8xf32>
    %69 = vector.broadcast %68 : vector<1x8xf32> to vector<256x8xf32>
    %70 = arith.addf %67, %69 : vector<256x8xf32>
    %cst_33 = arith.constant 0.000000e+00 : f32
    %71 = vector.broadcast %cst_33 : f32 to vector<256x8xf32>
    %72 = arith.maximumf %70, %71 : vector<256x8xf32>
    %73 = vector.shape_cast %72 : vector<256x8xf32> to vector<16x16x8xf32>
    %c0_34 = arith.constant 0 : index
    %c0_35 = arith.constant 0 : index
    %c0_36 = arith.constant 0 : index
    %c0_37 = arith.constant 0 : index
    %74 = vector.load %arg6[%c0_34, %c0_35, %c0_36, %c0_37] : memref<1x16x16x8xf32, #tpu.memory_space<vmem>>, vector<1x16x16x8xf32>
    %75 = vector.shape_cast %74 : vector<1x16x16x8xf32> to vector<16x16x8xf32>
    %76 = vector.shape_cast %73 : vector<16x16x8xf32> to vector<1x16x16x8xf32>
    tpu.vector_store %arg6[%c0_34, %c0_35, %c0_36, %c0_37], %76 {strides = array<i32>} : memref<1x16x16x8xf32, #tpu.memory_space<vmem>>, vector<1x16x16x8xf32>,
    %cst_38 = arith.constant dense<0.000000e+00> : vector<8xf32>
    %77 = vector.multi_reduction <add>, %72, %cst_38 [0] : vector<256x8xf32> to vector<8xf32>
    %78 = vector.shape_cast %77 : vector<8xf32> to vector<1x8xf32>
    %c0_39 = arith.constant 0 : index
    %c0_40 = arith.constant 0 : index
    %c0_41 = arith.constant 0 : index
    %79 = vector.load %arg7[%c0_39, %c0_40, %c0_41] : memref<1x1x8xf32, #tpu.memory_space<vmem>>, vector<1x1x8xf32>
    %80 = vector.shape_cast %79 : vector<1x1x8xf32> to vector<1x8xf32>
    %81 = vector.shape_cast %78 : vector<1x8xf32> to vector<1x1x8xf32>
    tpu.vector_store %arg7[%c0_39, %c0_40, %c0_41], %81 {strides = array<i32>} : memref<1x1x8xf32, #tpu.memory_space<vmem>>, vector<1x1x8xf32>,
    %82 = arith.mulf %72, %72 : vector<256x8xf32>
    %cst_42 = arith.constant dense<0.000000e+00> : vector<8xf32>
    %83 = vector.multi_reduction <add>, %82, %cst_42 [0] : vector<256x8xf32> to vector<8xf32>
    %84 = vector.shape_cast %83 : vector<8xf32> to vector<1x8xf32>
    %c0_43 = arith.constant 0 : index
    %c0_44 = arith.constant 0 : index
    %c0_45 = arith.constant 0 : index
    %85 = vector.load %arg8[%c0_43, %c0_44, %c0_45] : memref<1x1x8xf32, #tpu.memory_space<vmem>>, vector<1x1x8xf32>
    %86 = vector.shape_cast %85 : vector<1x1x8xf32> to vector<1x8xf32>
    %87 = vector.shape_cast %84 : vector<1x8xf32> to vector<1x1x8xf32>
    tpu.vector_store %arg8[%c0_43, %c0_44, %c0_45], %87 {strides = array<i32>} : memref<1x1x8xf32, #tpu.memory_space<vmem>>, vector<1x1x8xf32>,
    return
  }
  func.func @transform_0(%arg0: i32) -> (i32, i32, i32, i32) {
    %c0_i32 = arith.constant 0 : i32
    %c0_i32_0 = arith.constant 0 : i32
    %c0_i32_1 = arith.constant 0 : i32
    %c0_i32_2 = arith.constant 0 : i32
    return %arg0, %c0_i32, %c0_i32_0, %c0_i32_1 : i32, i32, i32, i32
  }
  func.func @transform_1(%arg0: i32) -> (i32, i32, i32) {
    %c0_i32 = arith.constant 0 : i32
    %c0_i32_0 = arith.constant 0 : i32
    %c0_i32_1 = arith.constant 0 : i32
    %c0_i32_2 = arith.constant 0 : i32
    return %c0_i32, %c0_i32_0, %c0_i32_1 : i32, i32, i32
  }
  func.func @transform_2(%arg0: i32) -> (i32, i32, i32) {
    %c0_i32 = arith.constant 0 : i32
    %c0_i32_0 = arith.constant 0 : i32
    %c0_i32_1 = arith.constant 0 : i32
    %c0_i32_2 = arith.constant 0 : i32
    return %c0_i32, %c0_i32_0, %c0_i32_1 : i32, i32, i32
  }
  func.func @transform_3(%arg0: i32) -> (i32, i32, i32, i32) {
    %c0_i32 = arith.constant 0 : i32
    %c0_i32_0 = arith.constant 0 : i32
    %c0_i32_1 = arith.constant 0 : i32
    %c0_i32_2 = arith.constant 0 : i32
    %c0_i32_3 = arith.constant 0 : i32
    return %c0_i32, %c0_i32_0, %c0_i32_1, %c0_i32_2 : i32, i32, i32, i32
  }
  func.func @transform_4(%arg0: i32) -> (i32, i32) {
    %c0_i32 = arith.constant 0 : i32
    %c0_i32_0 = arith.constant 0 : i32
    %c0_i32_1 = arith.constant 0 : i32
    return %c0_i32, %c0_i32_0 : i32, i32
  }
  func.func @transform_5(%arg0: i32) -> (i32, i32, i32, i32) {
    %c0_i32 = arith.constant 0 : i32
    %c0_i32_0 = arith.constant 0 : i32
    %c0_i32_1 = arith.constant 0 : i32
    %c0_i32_2 = arith.constant 0 : i32
    return %arg0, %c0_i32, %c0_i32_0, %c0_i32_1 : i32, i32, i32, i32
  }
  func.func @transform_6(%arg0: i32) -> (i32, i32, i32) {
    %c0_i32 = arith.constant 0 : i32
    %c0_i32_0 = arith.constant 0 : i32
    %c0_i32_1 = arith.constant 0 : i32
    return %arg0, %c0_i32, %c0_i32_0 : i32, i32, i32
  }
  func.func @transform_7(%arg0: i32) -> (i32, i32, i32) {
    %c0_i32 = arith.constant 0 : i32
    %c0_i32_0 = arith.constant 0 : i32
    %c0_i32_1 = arith.constant 0 : i32
    return %arg0, %c0_i32, %c0_i32_0 : i32, i32, i32
  }
}

module attributes {stable_mosaic.version = 11 : i64} {
  func.func @_pointwise_kernel(%arg0: i32, %arg1: memref<256x8xf32, #tpu.memory_space<vmem>>, %arg2: memref<8x32xf32, #tpu.memory_space<vmem>>, %arg3: memref<1x32xf32, #tpu.memory_space<vmem>>, %arg4: memref<256x32xf32, #tpu.memory_space<vmem>>, %arg5: memref<1x1x32xf32, #tpu.memory_space<vmem>>, %arg6: memref<1x1x32xf32, #tpu.memory_space<vmem>>) attributes {dimension_semantics = [#tpu.dimension_semantics<parallel>], iteration_bounds = array<i64: 2>, scalar_prefetch = 0 : i64, scratch_operands = 0 : i64, tpu.core_type = #tpu.core_type<tc>, window_params = [{transform_indices = @transform_0, window_bounds = array<i64: 256, 8>}, {pipeline_mode = #tpu.pipeline_mode<synchronous>, transform_indices = @transform_1, window_bounds = array<i64: 8, 32>}, {pipeline_mode = #tpu.pipeline_mode<synchronous>, transform_indices = @transform_2, window_bounds = array<i64: 1, 32>}, {transform_indices = @transform_3, window_bounds = array<i64: 256, 32>}, {transform_indices = @transform_4, window_bounds = array<i64: 1, 1, 32>}, {transform_indices = @transform_5, window_bounds = array<i64: 1, 1, 32>}]} {
    %c0 = arith.constant 0 : index
    %c0_0 = arith.constant 0 : index
    %0 = vector.load %arg1[%c0, %c0_0] : memref<256x8xf32, #tpu.memory_space<vmem>>, vector<256x8xf32>
    %c0_1 = arith.constant 0 : index
    %c0_2 = arith.constant 0 : index
    %1 = vector.load %arg2[%c0_1, %c0_2] : memref<8x32xf32, #tpu.memory_space<vmem>>, vector<8x32xf32>
    %cst = arith.constant dense<0.000000e+00> : vector<256x32xf32>
    %2 = tpu.matmul %0, %1, %cst {dimension_numbers = #tpu.dot_dimension_numbers<[1], [0], [0], [1], [0, 0, 1, 1], [], []>} : vector<256x8xf32>, vector<8x32xf32>, vector<256x32xf32> -> vector<256x32xf32>
    %c0_3 = arith.constant 0 : index
    %c0_4 = arith.constant 0 : index
    %3 = vector.load %arg3[%c0_3, %c0_4] : memref<1x32xf32, #tpu.memory_space<vmem>>, vector<1x32xf32>
    %4 = vector.broadcast %3 : vector<1x32xf32> to vector<256x32xf32>
    %5 = arith.addf %2, %4 : vector<256x32xf32>
    %c0_5 = arith.constant 0 : index
    %c0_6 = arith.constant 0 : index
    %6 = vector.load %arg4[%c0_5, %c0_6] : memref<256x32xf32, #tpu.memory_space<vmem>>, vector<256x32xf32>
    tpu.vector_store %arg4[%c0_5, %c0_6], %5 {strides = array<i32>} : memref<256x32xf32, #tpu.memory_space<vmem>>, vector<256x32xf32>,
    %cst_7 = arith.constant dense<0.000000e+00> : vector<32xf32>
    %7 = vector.multi_reduction <add>, %5, %cst_7 [0] : vector<256x32xf32> to vector<32xf32>
    %8 = vector.shape_cast %7 : vector<32xf32> to vector<1x32xf32>
    %c0_8 = arith.constant 0 : index
    %c0_9 = arith.constant 0 : index
    %c0_10 = arith.constant 0 : index
    %9 = vector.load %arg5[%c0_8, %c0_9, %c0_10] : memref<1x1x32xf32, #tpu.memory_space<vmem>>, vector<1x1x32xf32>
    %10 = vector.shape_cast %9 : vector<1x1x32xf32> to vector<1x32xf32>
    %11 = vector.shape_cast %8 : vector<1x32xf32> to vector<1x1x32xf32>
    tpu.vector_store %arg5[%c0_8, %c0_9, %c0_10], %11 {strides = array<i32>} : memref<1x1x32xf32, #tpu.memory_space<vmem>>, vector<1x1x32xf32>,
    %12 = arith.mulf %5, %5 : vector<256x32xf32>
    %cst_11 = arith.constant dense<0.000000e+00> : vector<32xf32>
    %13 = vector.multi_reduction <add>, %12, %cst_11 [0] : vector<256x32xf32> to vector<32xf32>
    %14 = vector.shape_cast %13 : vector<32xf32> to vector<1x32xf32>
    %c0_12 = arith.constant 0 : index
    %c0_13 = arith.constant 0 : index
    %c0_14 = arith.constant 0 : index
    %15 = vector.load %arg6[%c0_12, %c0_13, %c0_14] : memref<1x1x32xf32, #tpu.memory_space<vmem>>, vector<1x1x32xf32>
    %16 = vector.shape_cast %15 : vector<1x1x32xf32> to vector<1x32xf32>
    %17 = vector.shape_cast %14 : vector<1x32xf32> to vector<1x1x32xf32>
    tpu.vector_store %arg6[%c0_12, %c0_13, %c0_14], %17 {strides = array<i32>} : memref<1x1x32xf32, #tpu.memory_space<vmem>>, vector<1x1x32xf32>,
    return
  }
  func.func @transform_0(%arg0: i32) -> (i32, i32) {
    %c0_i32 = arith.constant 0 : i32
    %c0_i32_0 = arith.constant 0 : i32
    return %arg0, %c0_i32 : i32, i32
  }
  func.func @transform_1(%arg0: i32) -> (i32, i32) {
    %c0_i32 = arith.constant 0 : i32
    %c0_i32_0 = arith.constant 0 : i32
    %c0_i32_1 = arith.constant 0 : i32
    return %c0_i32, %c0_i32_0 : i32, i32
  }
  func.func @transform_2(%arg0: i32) -> (i32, i32) {
    %c0_i32 = arith.constant 0 : i32
    %c0_i32_0 = arith.constant 0 : i32
    %c0_i32_1 = arith.constant 0 : i32
    return %c0_i32, %c0_i32_0 : i32, i32
  }
  func.func @transform_3(%arg0: i32) -> (i32, i32) {
    %c0_i32 = arith.constant 0 : i32
    %c0_i32_0 = arith.constant 0 : i32
    return %arg0, %c0_i32 : i32, i32
  }
  func.func @transform_4(%arg0: i32) -> (i32, i32, i32) {
    %c0_i32 = arith.constant 0 : i32
    %c0_i32_0 = arith.constant 0 : i32
    %c0_i32_1 = arith.constant 0 : i32
    return %arg0, %c0_i32, %c0_i32_0 : i32, i32, i32
  }
  func.func @transform_5(%arg0: i32) -> (i32, i32, i32) {
    %c0_i32 = arith.constant 0 : i32
    %c0_i32_0 = arith.constant 0 : i32
    %c0_i32_1 = arith.constant 0 : i32
    return %arg0, %c0_i32, %c0_i32_0 : i32, i32, i32
  }
}

module attributes {stable_mosaic.version = 11 : i64} {
  func.func @_bn_add_relu_kernel(%arg0: i32, %arg1: memref<256x32xf32, #tpu.memory_space<vmem>>, %arg2: memref<256x32xf32, #tpu.memory_space<vmem>>, %arg3: memref<1x32xf32, #tpu.memory_space<vmem>>, %arg4: memref<1x32xf32, #tpu.memory_space<vmem>>, %arg5: memref<256x32xf32, #tpu.memory_space<vmem>>) attributes {dimension_semantics = [#tpu.dimension_semantics<parallel>], iteration_bounds = array<i64: 2>, scalar_prefetch = 0 : i64, scratch_operands = 0 : i64, tpu.core_type = #tpu.core_type<tc>, window_params = [{transform_indices = @transform_0, window_bounds = array<i64: 256, 32>}, {transform_indices = @transform_1, window_bounds = array<i64: 256, 32>}, {pipeline_mode = #tpu.pipeline_mode<synchronous>, transform_indices = @transform_2, window_bounds = array<i64: 1, 32>}, {pipeline_mode = #tpu.pipeline_mode<synchronous>, transform_indices = @transform_3, window_bounds = array<i64: 1, 32>}, {transform_indices = @transform_4, window_bounds = array<i64: 256, 32>}]} {
    %c0 = arith.constant 0 : index
    %c0_0 = arith.constant 0 : index
    %0 = vector.load %arg1[%c0, %c0_0] : memref<256x32xf32, #tpu.memory_space<vmem>>, vector<256x32xf32>
    %c0_1 = arith.constant 0 : index
    %c0_2 = arith.constant 0 : index
    %1 = vector.load %arg3[%c0_1, %c0_2] : memref<1x32xf32, #tpu.memory_space<vmem>>, vector<1x32xf32>
    %2 = vector.broadcast %1 : vector<1x32xf32> to vector<256x32xf32>
    %3 = arith.mulf %0, %2 : vector<256x32xf32>
    %c0_3 = arith.constant 0 : index
    %c0_4 = arith.constant 0 : index
    %4 = vector.load %arg4[%c0_3, %c0_4] : memref<1x32xf32, #tpu.memory_space<vmem>>, vector<1x32xf32>
    %5 = vector.broadcast %4 : vector<1x32xf32> to vector<256x32xf32>
    %6 = arith.addf %3, %5 : vector<256x32xf32>
    %c0_5 = arith.constant 0 : index
    %c0_6 = arith.constant 0 : index
    %7 = vector.load %arg2[%c0_5, %c0_6] : memref<256x32xf32, #tpu.memory_space<vmem>>, vector<256x32xf32>
    %8 = arith.addf %6, %7 : vector<256x32xf32>
    %cst = arith.constant 0.000000e+00 : f32
    %9 = vector.broadcast %cst : f32 to vector<256x32xf32>
    %10 = arith.maximumf %8, %9 : vector<256x32xf32>
    %c0_7 = arith.constant 0 : index
    %c0_8 = arith.constant 0 : index
    %11 = vector.load %arg5[%c0_7, %c0_8] : memref<256x32xf32, #tpu.memory_space<vmem>>, vector<256x32xf32>
    tpu.vector_store %arg5[%c0_7, %c0_8], %10 {strides = array<i32>} : memref<256x32xf32, #tpu.memory_space<vmem>>, vector<256x32xf32>,
    return
  }
  func.func @transform_0(%arg0: i32) -> (i32, i32) {
    %c0_i32 = arith.constant 0 : i32
    %c0_i32_0 = arith.constant 0 : i32
    return %arg0, %c0_i32 : i32, i32
  }
  func.func @transform_1(%arg0: i32) -> (i32, i32) {
    %c0_i32 = arith.constant 0 : i32
    %c0_i32_0 = arith.constant 0 : i32
    return %arg0, %c0_i32 : i32, i32
  }
  func.func @transform_2(%arg0: i32) -> (i32, i32) {
    %c0_i32 = arith.constant 0 : i32
    %c0_i32_0 = arith.constant 0 : i32
    %c0_i32_1 = arith.constant 0 : i32
    return %c0_i32, %c0_i32_0 : i32, i32
  }
  func.func @transform_3(%arg0: i32) -> (i32, i32) {
    %c0_i32 = arith.constant 0 : i32
    %c0_i32_0 = arith.constant 0 : i32
    %c0_i32_1 = arith.constant 0 : i32
    return %c0_i32, %c0_i32_0 : i32, i32
  }
  func.func @transform_4(%arg0: i32) -> (i32, i32) {
    %c0_i32 = arith.constant 0 : i32
    %c0_i32_0 = arith.constant 0 : i32
    return %arg0, %c0_i32 : i32, i32
  }
}

</mosaic_0001>

<llo_original>
// kernel: resnet_bottleneck_block.4
$region0: #{resnet_bottleneck_block.4}
  #allocation0 [shape = 'u32[]', space=smem, size = 0x4, offset = 0x4, fixed_abs, tag = 'smem constant byte address 0x4 - core index']
  #allocation1 [shape = 'u32[72,128]{1,0:T(1,128)}', space=vmem, size = 0x9000, scoped, tag = 'internal scratch']
  %s0 = inlined_call_operand.hbm [shape: f32[512,32], index: 0, kind: input, shape index: {}]
  %s1 = inlined_call_operand.vmem [shape: f32[32,8], index: 1, kind: input, shape index: {}]
  %s2 = inlined_call_operand.vmem [shape: f32[1,8], index: 2, kind: input, shape index: {}]
  %s3 = inlined_call_operand.vmem [shape: f32[512,8], index: 3, kind: output, shape index: {0}]
  %s4 = inlined_call_operand.vmem [shape: f32[2,1,8], index: 4, kind: output, shape index: {1}]
  %s5 = inlined_call_operand.vmem [shape: f32[2,1,8], index: 5, kind: output, shape index: {2}]
  %6 = xla_tuple %s3, %s4, %s5
  %s7 = sld [smem:[#allocation0]]
  $region65: #{resnet_bottleneck_block.4} parent=0
    _
  %s9 = ssub.s32 1, %s7
  %s10 = scalar_select 0, %s9, %s7
  $region1: #{resnet_bottleneck_block.4} parent=0
    #allocation2 [shape = 'u8[262144]{0}', space=vmem, size = 0x40000, scoped, tag = 'input window, operand 0']
    #allocation3 [shape = 's32[2]{0}', space=sflag, size = 0x8, scoped, tag = 'scoped memory for resnet_bottleneck_block.4']
    %11 = vsyncpa [#allocation3], 0
    %s12 = scalar_lea.sflag [#allocation3], 1
    %13 = vsyncpa %s12, 0
    loop: start=0, step=1, limit=4
    $region2: #{resnet_bottleneck_block.4} parent=1 // loop_pre_header
      _
    $region3: #{resnet_bottleneck_block.4} parent=1 // loop_header
      %s15 = sphi 0, %s19
      %p16 = scmp.ge.s32.totalorder %s15, 4
      %s25 = sphi 0, %s27
      %s28 = sphi 0, %s25
      %s29 = sphi 0, %s28
      %s45 = sphi 0, %s29
      %s49 = sphi 0, %s49
      %s51 = sphi 0, %s49
      %s52 = sphi 0, %s51
      %s66 = sphi 0, %s52
      %s70 = sphi 0, %s70
      %s72 = sphi 0, %s70
      %s73 = sphi 0, %s72
      %s87 = sphi 0, %s73
      %s93 = sphi 0, %s95
      %s96 = sphi 0, %s93
      %s97 = sphi 0, %s96
      %s113 = sphi 0, %s97
      %s119 = sphi 0, %s121
      %s122 = sphi 0, %s119
      %s123 = sphi 0, %s122
      %s139 = sphi 0, %s123
      %s145 = sphi 0, %s147
      %s148 = sphi 0, %s145
      %s149 = sphi 0, %s148
      %s165 = sphi 0, %s149
    $region4: #{resnet_bottleneck_block.4} parent=1 // loop_header_branch
      %18 = sbr.rel (%p16) target = $region8
    $region5: #{resnet_bottleneck_block.4} parent=1 // loop_body
      %s20 = ssub.s32 %s15, 1
      %s21 = ssub.s32 %s15, 2
      %s22 = sadd.s32 %s15, 1
      %s23 = ssub.s32 %s15, %s22
      %p24 = scmp.eq.s32.totalorder %s23, 0
      %s26 = sadd.s32 %s25, 1
      %s27 = scalar_select %p24, %s25, %s26
      %p30 = pneg %p24
      %p31 = scmp.eq.s32.totalorder %s15, 1
      %p32 = por %p30, %p31
      %p33 = scmp.ne.s32.totalorder %s25, %s28
      %p34 = scmp.eq.s32.totalorder %s15, 0
      %p35 = por %p33, %p34
      %p36 = scmp.ne.s32.totalorder %s25, %s28
      %p37 = scmp.eq.s32.totalorder %s20, 1
      %p38 = por %p36, %p37
      %p39 = scmp.ne.s32.totalorder %s28, %s29
      %p40 = scmp.eq.s32.totalorder %s20, 0
      %p41 = por %p39, %p40
      %p42 = scmp.ne.s32.totalorder %s28, %s29
      %p43 = scmp.eq.s32.totalorder %s21, 1
      %p44 = por %p42, %p43
      %p46 = scmp.ne.s32.totalorder %s29, %s45
      %p47 = scmp.eq.s32.totalorder %s21, 0
      %p48 = por %p46, %p47
      %s50 = sadd.s32 %s49, 1
      %p53 = scmp.eq.s32.totalorder %s15, 1
      %p54 = scmp.ne.s32.totalorder %s49, %s51
      %p55 = scmp.eq.s32.totalorder %s15, 0
      %p56 = por %p54, %p55
      %p57 = scmp.ne.s32.totalorder %s49, %s51
      %p58 = scmp.eq.s32.totalorder %s20, 1
      %p59 = por %p57, %p58
      %p60 = scmp.ne.s32.totalorder %s51, %s52
      %p61 = scmp.eq.s32.totalorder %s20, 0
      %p62 = por %p60, %p61
      %p63 = scmp.ne.s32.totalorder %s51, %s52
      %p64 = scmp.eq.s32.totalorder %s21, 1
      %p65 = por %p63, %p64
      %p67 = scmp.ne.s32.totalorder %s52, %s66
      %p68 = scmp.eq.s32.totalorder %s21, 0
      %p69 = por %p67, %p68
      %s71 = sadd.s32 %s70, 1
      %p74 = scmp.eq.s32.totalorder %s15, 1
      %p75 = scmp.ne.s32.totalorder %s70, %s72
      %p76 = scmp.eq.s32.totalorder %s15, 0
      %p77 = por %p75, %p76
      %p78 = scmp.ne.s32.totalorder %s70, %s72
      %p79 = scmp.eq.s32.totalorder %s20, 1
      %p80 = por %p78, %p79
      %p81 = scmp.ne.s32.totalorder %s72, %s73
      %p82 = scmp.eq.s32.totalorder %s20, 0
      %p83 = por %p81, %p82
      %p84 = scmp.ne.s32.totalorder %s72, %s73
      %p85 = scmp.eq.s32.totalorder %s21, 1
      %p86 = por %p84, %p85
      %p88 = scmp.ne.s32.totalorder %s73, %s87
      %p89 = scmp.eq.s32.totalorder %s21, 0
      %p90 = por %p88, %p89
      %s91 = ssub.s32 %s15, %s22
      %p92 = scmp.eq.s32.totalorder %s91, 0
      %s94 = sadd.s32 %s93, 1
      %s95 = scalar_select %p92, %s93, %s94
      %p98 = pneg %p92
      %p99 = scmp.eq.s32.totalorder %s15, 1
      %p100 = por %p98, %p99
      %p101 = scmp.ne.s32.totalorder %s93, %s96
      %p102 = scmp.eq.s32.totalorder %s15, 0
      %p103 = por %p101, %p102
      %p104 = scmp.ne.s32.totalorder %s93, %s96
      %p105 = scmp.eq.s32.totalorder %s20, 1
      %p106 = por %p104, %p105
      %p107 = scmp.ne.s32.totalorder %s96, %s97
      %p108 = scmp.eq.s32.totalorder %s20, 0
      %p109 = por %p107, %p108
      %p110 = scmp.ne.s32.totalorder %s96, %s97
      %p111 = scmp.eq.s32.totalorder %s21, 1
      %p112 = por %p110, %p111
      %p114 = scmp.ne.s32.totalorder %s97, %s113
      %p115 = scmp.eq.s32.totalorder %s21, 0
      %p116 = por %p114, %p115
      %s117 = ssub.s32 %s15, %s22
      %p118 = scmp.eq.s32.totalorder %s117, 0
      %s120 = sadd.s32 %s119, 1
      %s121 = scalar_select %p118, %s119, %s120
      %p124 = pneg %p118
      %p125 = scmp.eq.s32.totalorder %s15, 1
      %p126 = por %p124, %p125
      %p127 = scmp.ne.s32.totalorder %s119, %s122
      %p128 = scmp.eq.s32.totalorder %s15, 0
      %p129 = por %p127, %p128
      %p130 = scmp.ne.s32.totalorder %s119, %s122
      %p131 = scmp.eq.s32.totalorder %s20, 1
      %p132 = por %p130, %p131
      %p133 = scmp.ne.s32.totalorder %s122, %s123
      %p134 = scmp.eq.s32.totalorder %s20, 0
      %p135 = por %p133, %p134
      %p136 = scmp.ne.s32.totalorder %s122, %s123
      %p137 = scmp.eq.s32.totalorder %s21, 1
      %p138 = por %p136, %p137
      %p140 = scmp.ne.s32.totalorder %s123, %s139
      %p141 = scmp.eq.s32.totalorder %s21, 0
      %p142 = por %p140, %p141
      %s143 = ssub.s32 %s15, %s22
      %p144 = scmp.eq.s32.totalorder %s143, 0
      %s146 = sadd.s32 %s145, 1
      %s147 = scalar_select %p144, %s145, %s146
      %p150 = pneg %p144
      %p151 = scmp.eq.s32.totalorder %s15, 1
      %p152 = por %p150, %p151
      %p153 = scmp.ne.s32.totalorder %s145, %s148
      %p154 = scmp.eq.s32.totalorder %s15, 0
      %p155 = por %p153, %p154
      %p156 = scmp.ne.s32.totalorder %s145, %s148
      %p157 = scmp.eq.s32.totalorder %s20, 1
      %p158 = por %p156, %p157
      %p159 = scmp.ne.s32.totalorder %s148, %s149
      %p160 = scmp.eq.s32.totalorder %s20, 0
      %p161 = por %p159, %p160
      %p162 = scmp.ne.s32.totalorder %s148, %s149
      %p163 = scmp.eq.s32.totalorder %s21, 1
      %p164 = por %p162, %p163
      %p166 = scmp.ne.s32.totalorder %s149, %s165
      %p167 = scmp.eq.s32.totalorder %s21, 0
      %p168 = por %p166, %p167
      %p169 = scmp.le.s32.totalorder 1, %s15
      %p170 = scmp.lt.s32.totalorder %s15, 3
      %p171 = pnand %p169, %p170
      %p172 = pneg %p171
      // Predicated region
      $region9: #{resnet_bottleneck_block.4} parent=5 // pred_check
        _
      $region10: #{resnet_bottleneck_block.4} parent=5 // pred_check_branch
        %174 = sbr.rel (%p171) target = $region12
      $region11: #{resnet_bottleneck_block.4} parent=5 // pred_region
        %s175 = ssub.s32 %s15, 1
        // Predicated region
        $region13: #{resnet_bottleneck_block.4} parent=11 // pred_check
          %p176 = pneg %p62
        $region14: #{resnet_bottleneck_block.4} parent=11 // pred_check_branch
          %178 = sbr.rel (%p176) target = $region16
        $region15: #{resnet_bottleneck_block.4} parent=11 // pred_region
          _
        $region16: #{resnet_bottleneck_block.4} parent=11 // pred_fallthru
          _
        // Predicated region
        $region17: #{resnet_bottleneck_block.4} parent=11 // pred_check
          %p179 = pneg %p83
        $region18: #{resnet_bottleneck_block.4} parent=11 // pred_check_branch
          %181 = sbr.rel (%p179) target = $region20
        $region19: #{resnet_bottleneck_block.4} parent=11 // pred_region
          _
        $region20: #{resnet_bottleneck_block.4} parent=11 // pred_fallthru
          _
      $region12: #{resnet_bottleneck_block.4} parent=5 // pred_fallthru
        _
      %p182 = scmp.lt.s32.totalorder %s15, 2
      // Predicated region
      $region21: #{resnet_bottleneck_block.4} parent=5 // pred_check
        %p183 = pneg %p182
      $region22: #{resnet_bottleneck_block.4} parent=5 // pred_check_branch
        %185 = sbr.rel (%p183) target = $region24
      $region23: #{resnet_bottleneck_block.4} parent=5 // pred_region
        // Predicated region
        $region25: #{resnet_bottleneck_block.4} parent=23 // pred_check
          %p186 = pneg %p35
        $region26: #{resnet_bottleneck_block.4} parent=23 // pred_check_branch
          %188 = sbr.rel (%p186) target = $region28
        $region27: #{resnet_bottleneck_block.4} parent=23 // pred_region
          %s189 = sand.u32 %s25, 1
          %s190 = scalar_lea.sflag [#allocation3], %s189
          %s191 = sand.u32 %s25, 1
          %s192 = smul.addr %s191, 256
          %s193 = scalar_lea.vmem [#allocation2], %s192
          %s194 = smul.u32 32, %s15
          %196 = vsyncadd %s190, 0
          %s197 = smul.addr %s194, 8
          %s198 = scalar_lea.hbm %s0, %s197
          %s199 = sshll.u32 %s198, 4
          %s200 = int_to_ptr.hbm [resolvable:$true] %s199
          %s201 = sshll.u32 %s193, 4
          %s202 = int_to_ptr.vmem [resolvable:$true] %s201
          %207 = dma.hbm_to_vmem [thread:$0]  %s200, 4096, %s202, %s190, 128, 128, 8
        $region28: #{resnet_bottleneck_block.4} parent=23 // pred_fallthru
          _
      $region24: #{resnet_bottleneck_block.4} parent=5 // pred_fallthru
        _
      %p208 = scmp.le.s32.totalorder 1, %s15
      %p209 = scmp.lt.s32.totalorder %s15, 3
      %p210 = pnand %p208, %p209
      %p211 = pneg %p210
      // Predicated region
      $region29: #{resnet_bottleneck_block.4} parent=5 // pred_check
        _
      $region30: #{resnet_bottleneck_block.4} parent=5 // pred_check_branch
        %213 = sbr.rel (%p210) target = $region32
      $region31: #{resnet_bottleneck_block.4} parent=5 // pred_region
        %s214 = ssub.s32 %s15, 1
        %s215 = sand.u32 %s28, 1
        %s216 = scalar_lea.sflag [#allocation3], %s215
        %s217 = sand.u32 %s28, 1
        %s218 = smul.addr %s217, 256
        %s219 = scalar_lea.vmem [#allocation2], %s218
        // Predicated region
        $region33: #{resnet_bottleneck_block.4} parent=31 // pred_check
          %p220 = pneg %p41
        $region34: #{resnet_bottleneck_block.4} parent=31 // pred_check_branch
          %222 = sbr.rel (%p220) target = $region36
        $region35: #{resnet_bottleneck_block.4} parent=31 // pred_region
          %224 = dma.done %s216, 4096
        $region36: #{resnet_bottleneck_block.4} parent=31 // pred_fallthru
          _
        %s225 = sand.u32 %s28, 1
        %s226 = scalar_lea.sflag [#allocation3], %s225
        %s227 = sand.u32 %s28, 1
        %s228 = smul.addr %s227, 256
        %s229 = scalar_lea.vmem [#allocation2], %s228
        %p230 = pneg %p41
        %p231 = pneg %p38
        %p232 = pneg %p62
        %p233 = pneg %p59
        %p234 = pneg %p83
        %p235 = pneg %p80
        %p236 = pneg %p109
        %p237 = pneg %p106
        %s238 = smul.u32 32, %s20
        %p239 = scmp.lt.s32.totalorder %s238, 63
        %s240 = scalar_select %p239, %s238, 63
        %s241 = smul.addr %s240, 8
        %s242 = scalar_lea.vmem %s3, %s241
        %p243 = pneg %p135
        %p244 = pneg %p132
        %p245 = scmp.lt.s32.totalorder %s20, 1
        %s246 = scalar_select %p245, %s20, 1
        %s247 = scalar_lea.vmem %s4, %s246
        %p248 = pneg %p161
        %p249 = pneg %p158
        %p250 = scmp.lt.s32.totalorder %s20, 1
        %s251 = scalar_select %p250, %s20, 1
        %s252 = scalar_lea.vmem %s5, %s251
        %s253 = smul.u32 32, %s20
        %s254 = smul.u32 32, %s20
        %p255 = scmp.lt.s32.totalorder %s254, 63
        %s256 = scalar_select %p255, %s254, 63
        %s257 = smul.addr %s256, 8
        %s258 = scalar_lea.vmem %s3, %s257
        %s259 = smul.u32 32, %s20
        %p260 = scmp.lt.s32.totalorder %s20, 1
        %s261 = scalar_select %p260, %s20, 1
        %s262 = scalar_lea.vmem %s4, %s261
        %p263 = scmp.lt.s32.totalorder %s20, 1
        %s264 = scalar_select %p263, %s20, 1
        %s265 = scalar_lea.vmem %s5, %s264
        %v266 = vld [vmem:[%s219] sm:$0xff]
        %v267 = vld [vmem:[%s219 + $0x8] sm:$0xff]
        %v268 = vld [vmem:[%s219 + $0x10] sm:$0xff]
        %v269 = vld [vmem:[%s219 + $0x18] sm:$0xff]
        %v270 = vld [vmem:[%s219 + $0x20] sm:$0xff]
        %v271 = vld [vmem:[%s219 + $0x28] sm:$0xff]
        %v272 = vld [vmem:[%s219 + $0x30] sm:$0xff]
        %v273 = vld [vmem:[%s219 + $0x38] sm:$0xff]
        %v274 = vld [vmem:[%s219 + $0x40] sm:$0xff]
        %v275 = vld [vmem:[%s219 + $0x48] sm:$0xff]
        %v276 = vld [vmem:[%s219 + $0x50] sm:$0xff]
        %v277 = vld [vmem:[%s219 + $0x58] sm:$0xff]
        %v278 = vld [vmem:[%s219 + $0x60] sm:$0xff]
        %v279 = vld [vmem:[%s219 + $0x68] sm:$0xff]
        %v280 = vld [vmem:[%s219 + $0x70] sm:$0xff]
        %v281 = vld [vmem:[%s219 + $0x78] sm:$0xff]
        %v282 = vld [vmem:[%s219 + $0x80] sm:$0xff]
        %v283 = vld [vmem:[%s219 + $0x88] sm:$0xff]
        %v284 = vld [vmem:[%s219 + $0x90] sm:$0xff]
        %v285 = vld [vmem:[%s219 + $0x98] sm:$0xff]
        %v286 = vld [vmem:[%s219 + $0xa0] sm:$0xff]
        %v287 = vld [vmem:[%s219 + $0xa8] sm:$0xff]
        %v288 = vld [vmem:[%s219 + $0xb0] sm:$0xff]
        %v289 = vld [vmem:[%s219 + $0xb8] sm:$0xff]
        %v290 = vld [vmem:[%s219 + $0xc0] sm:$0xff]
        %v291 = vld [vmem:[%s219 + $0xc8] sm:$0xff]
        %v292 = vld [vmem:[%s219 + $0xd0] sm:$0xff]
        %v293 = vld [vmem:[%s219 + $0xd8] sm:$0xff]
        %v294 = vld [vmem:[%s219 + $0xe0] sm:$0xff]
        %v295 = vld [vmem:[%s219 + $0xe8] sm:$0xff]
        %v296 = vld [vmem:[%s219 + $0xf0] sm:$0xff]
        %v297 = vld [vmem:[%s219 + $0xf8] sm:$0xff]
        %v298 = vld [vmem:[%s1] sm:$0xff]
        %v299 = vld [vmem:[%s1 + $0x8] sm:$0xff]
        %v300 = vld [vmem:[%s1 + $0x10] sm:$0xff]
        %v301 = vld [vmem:[%s1 + $0x18] sm:$0xff]
        %v302 = vld [vmem:[%s2] sm:$0x1]
        %v304 = vperm.slane %v302, 0
        %vm306 = vcmask 261120
        %v308 = vsel %vm306, %v266, 0
        %v311 = vsel %vm306, %v267, 0
        %v314 = vsel %vm306, %v268, 0
        %v317 = vsel %vm306, %v269, 0
        %v320 = vsel %vm306, %v270, 0
        %v323 = vsel %vm306, %v271, 0
        %v326 = vsel %vm306, %v272, 0
        %v329 = vsel %vm306, %v273, 0
        %v332 = vsel %vm306, %v274, 0
        %v335 = vsel %vm306, %v275, 0
        %v338 = vsel %vm306, %v276, 0
        %v341 = vsel %vm306, %v277, 0
        %v344 = vsel %vm306, %v278, 0
        %v347 = vsel %vm306, %v279, 0
        %v350 = vsel %vm306, %v280, 0
        %v353 = vsel %vm306, %v281, 0
        %v356 = vsel %vm306, %v282, 0
        %v359 = vsel %vm306, %v283, 0
        %v362 = vsel %vm306, %v284, 0
        %v365 = vsel %vm306, %v285, 0
        %v368 = vsel %vm306, %v286, 0
        %v371 = vsel %vm306, %v287, 0
        %v374 = vsel %vm306, %v288, 0
        %v377 = vsel %vm306, %v289, 0
        %v380 = vsel %vm306, %v290, 0
        %v383 = vsel %vm306, %v291, 0
        %v386 = vsel %vm306, %v292, 0
        %v389 = vsel %vm306, %v293, 0
        %v392 = vsel %vm306, %v294, 0
        %v395 = vsel %vm306, %v295, 0
        %v398 = vsel %vm306, %v296, 0
        %v401 = vsel %vm306, %v297, 0
        %403 = vmatpush.msra.mxu0 0.0
        %404 = vmatpush.msra.mxu0 0.0
        %405 = vmatpush.msra.mxu0 0.0
        %406 = vmatpush.msra.mxu0 0.0
        %407 = vmatpush.msra.mxu0 0.0
        %408 = vmatpush.msra.mxu0 0.0
        %409 = vmatpush.msra.mxu0 0.0
        %410 = vmatpush.msra.mxu0 0.0
        %411 = vmatpush.msra.mxu0 0.0
        %412 = vmatpush.msra.mxu0 0.0
        %413 = vmatpush.msra.mxu0 0.0
        %414 = vmatpush.msra.mxu0 0.0
        %415 = vmatpush.msra.mxu0 %v301
        %416 = vmatpush.msra.mxu0 %v300
        %417 = vmatpush.msra.mxu0 %v299
        %418 = vmatpush.msra.mxu0 %v298
        %419 = vmatmul.f32.gmra.mxu0 %v308
        %v420 = vpop.f32.mrf.mxu0
        %v421 = vadd.f32 %v304, %v420
        %422 = vmatmul.f32.gmra.mxu0 %v311
        %v423 = vpop.f32.mrf.mxu0
        %v424 = vadd.f32 %v304, %v423
        %425 = vmatmul.f32.gmra.mxu0 %v314
        %v426 = vpop.f32.mrf.mxu0
        %v427 = vadd.f32 %v304, %v426
        %428 = vmatmul.f32.gmra.mxu0 %v317
        %v429 = vpop.f32.mrf.mxu0
        %v430 = vadd.f32 %v304, %v429
        %431 = vmatmul.f32.gmra.mxu0 %v320
        %v432 = vpop.f32.mrf.mxu0
        %v433 = vadd.f32 %v304, %v432
        %434 = vmatmul.f32.gmra.mxu0 %v323
        %v435 = vpop.f32.mrf.mxu0
        %v436 = vadd.f32 %v304, %v435
        %437 = vmatmul.f32.gmra.mxu0 %v326
        %v438 = vpop.f32.mrf.mxu0
        %v439 = vadd.f32 %v304, %v438
        %440 = vmatmul.f32.gmra.mxu0 %v329
        %v441 = vpop.f32.mrf.mxu0
        %v442 = vadd.f32 %v304, %v441
        %443 = vmatmul.f32.gmra.mxu0 %v332
        %v444 = vpop.f32.mrf.mxu0
        %v445 = vadd.f32 %v304, %v444
        %446 = vmatmul.f32.gmra.mxu0 %v335
        %v447 = vpop.f32.mrf.mxu0
        %v448 = vadd.f32 %v304, %v447
        %449 = vmatmul.f32.gmra.mxu0 %v338
        %v450 = vpop.f32.mrf.mxu0
        %v451 = vadd.f32 %v304, %v450
        %452 = vmatmul.f32.gmra.mxu0 %v341
        %v453 = vpop.f32.mrf.mxu0
        %v454 = vadd.f32 %v304, %v453
        %455 = vmatmul.f32.gmra.mxu0 %v344
        %v456 = vpop.f32.mrf.mxu0
        %v457 = vadd.f32 %v304, %v456
        %458 = vmatmul.f32.gmra.mxu0 %v347
        %v459 = vpop.f32.mrf.mxu0
        %v460 = vadd.f32 %v304, %v459
        %461 = vmatmul.f32.gmra.mxu0 %v350
        %v462 = vpop.f32.mrf.mxu0
        %v463 = vadd.f32 %v304, %v462
        %464 = vmatmul.f32.gmra.mxu0 %v353
        %v465 = vpop.f32.mrf.mxu0
        %v466 = vadd.f32 %v304, %v465
        %467 = vmatmul.f32.gmra.mxu0 %v356
        %v468 = vpop.f32.mrf.mxu0
        %v469 = vadd.f32 %v304, %v468
        %470 = vmatmul.f32.gmra.mxu0 %v359
        %v471 = vpop.f32.mrf.mxu0
        %v472 = vadd.f32 %v304, %v471
        %473 = vmatmul.f32.gmra.mxu0 %v362
        %v474 = vpop.f32.mrf.mxu0
        %v475 = vadd.f32 %v304, %v474
        %476 = vmatmul.f32.gmra.mxu0 %v365
        %v477 = vpop.f32.mrf.mxu0
        %v478 = vadd.f32 %v304, %v477
        %479 = vmatmul.f32.gmra.mxu0 %v368
        %v480 = vpop.f32.mrf.mxu0
        %v481 = vadd.f32 %v304, %v480
        %482 = vmatmul.f32.gmra.mxu0 %v371
        %v483 = vpop.f32.mrf.mxu0
        %v484 = vadd.f32 %v304, %v483
        %485 = vmatmul.f32.gmra.mxu0 %v374
        %v486 = vpop.f32.mrf.mxu0
        %v487 = vadd.f32 %v304, %v486
        %488 = vmatmul.f32.gmra.mxu0 %v377
        %v489 = vpop.f32.mrf.mxu0
        %v490 = vadd.f32 %v304, %v489
        %491 = vmatmul.f32.gmra.mxu0 %v380
        %v492 = vpop.f32.mrf.mxu0
        %v493 = vadd.f32 %v304, %v492
        %494 = vmatmul.f32.gmra.mxu0 %v383
        %v495 = vpop.f32.mrf.mxu0
        %v496 = vadd.f32 %v304, %v495
        %497 = vmatmul.f32.gmra.mxu0 %v386
        %v498 = vpop.f32.mrf.mxu0
        %v499 = vadd.f32 %v304, %v498
        %500 = vmatmul.f32.gmra.mxu0 %v389
        %v501 = vpop.f32.mrf.mxu0
        %v502 = vadd.f32 %v304, %v501
        %503 = vmatmul.f32.gmra.mxu0 %v392
        %v504 = vpop.f32.mrf.mxu0
        %v505 = vadd.f32 %v304, %v504
        %506 = vmatmul.f32.gmra.mxu0 %v395
        %v507 = vpop.f32.mrf.mxu0
        %v508 = vadd.f32 %v304, %v507
        %509 = vmatmul.f32.gmra.mxu0 %v398
        %v510 = vpop.f32.mrf.mxu0
        %v511 = vadd.f32 %v304, %v510
        %512 = vmatmul.f32.gmra.mxu0 %v401
        %v513 = vpop.f32.mrf.mxu0
        %v514 = vadd.f32 %v304, %v513
        %515 = vdwg.mxu0
        %v516 = vmax.f32 %v421, 0.0
        %v517 = vmax.f32 %v424, 0.0
        %v518 = vmax.f32 %v427, 0.0
        %v519 = vmax.f32 %v430, 0.0
        %v520 = vmax.f32 %v433, 0.0
        %v521 = vmax.f32 %v436, 0.0
        %v522 = vmax.f32 %v439, 0.0
        %v523 = vmax.f32 %v442, 0.0
        %v524 = vmax.f32 %v445, 0.0
        %v525 = vmax.f32 %v448, 0.0
        %v526 = vmax.f32 %v451, 0.0
        %v527 = vmax.f32 %v454, 0.0
        %v528 = vmax.f32 %v457, 0.0
        %v529 = vmax.f32 %v460, 0.0
        %v530 = vmax.f32 %v463, 0.0
        %v531 = vmax.f32 %v466, 0.0
        %v532 = vmax.f32 %v469, 0.0
        %v533 = vmax.f32 %v472, 0.0
        %v534 = vmax.f32 %v475, 0.0
        %v535 = vmax.f32 %v478, 0.0
        %v536 = vmax.f32 %v481, 0.0
        %v537 = vmax.f32 %v484, 0.0
        %v538 = vmax.f32 %v487, 0.0
        %v539 = vmax.f32 %v490, 0.0
        %v540 = vmax.f32 %v493, 0.0
        %v541 = vmax.f32 %v496, 0.0
        %v542 = vmax.f32 %v499, 0.0
        %v543 = vmax.f32 %v502, 0.0
        %v544 = vmax.f32 %v505, 0.0
        %v545 = vmax.f32 %v508, 0.0
        %v546 = vmax.f32 %v511, 0.0
        %v547 = vmax.f32 %v514, 0.0
        %vm548 = vcmask 64512
        %549 = vst.msk [vmem:[%s258] sm:$0xff] %vm548, %v516
        %550 = vst.msk [vmem:[%s258 + $0x8] sm:$0xff] %vm548, %v517
        %551 = vst.msk [vmem:[%s258 + $0x10] sm:$0xff] %vm548, %v518
        %552 = vst.msk [vmem:[%s258 + $0x18] sm:$0xff] %vm548, %v519
        %553 = vst.msk [vmem:[%s258 + $0x20] sm:$0xff] %vm548, %v520
        %554 = vst.msk [vmem:[%s258 + $0x28] sm:$0xff] %vm548, %v521
        %555 = vst.msk [vmem:[%s258 + $0x30] sm:$0xff] %vm548, %v522
        %556 = vst.msk [vmem:[%s258 + $0x38] sm:$0xff] %vm548, %v523
        %557 = vst.msk [vmem:[%s258 + $0x40] sm:$0xff] %vm548, %v524
        %558 = vst.msk [vmem:[%s258 + $0x48] sm:$0xff] %vm548, %v525
        %559 = vst.msk [vmem:[%s258 + $0x50] sm:$0xff] %vm548, %v526
        %560 = vst.msk [vmem:[%s258 + $0x58] sm:$0xff] %vm548, %v527
        %561 = vst.msk [vmem:[%s258 + $0x60] sm:$0xff] %vm548, %v528
        %562 = vst.msk [vmem:[%s258 + $0x68] sm:$0xff] %vm548, %v529
        %563 = vst.msk [vmem:[%s258 + $0x70] sm:$0xff] %vm548, %v530
        %564 = vst.msk [vmem:[%s258 + $0x78] sm:$0xff] %vm548, %v531
        %565 = vst.msk [vmem:[%s258 + $0x80] sm:$0xff] %vm548, %v532
        %566 = vst.msk [vmem:[%s258 + $0x88] sm:$0xff] %vm548, %v533
        %567 = vst.msk [vmem:[%s258 + $0x90] sm:$0xff] %vm548, %v534
        %568 = vst.msk [vmem:[%s258 + $0x98] sm:$0xff] %vm548, %v535
        %569 = vst.msk [vmem:[%s258 + $0xa0] sm:$0xff] %vm548, %v536
        %570 = vst.msk [vmem:[%s258 + $0xa8] sm:$0xff] %vm548, %v537
        %571 = vst.msk [vmem:[%s258 + $0xb0] sm:$0xff] %vm548, %v538
        %572 = vst.msk [vmem:[%s258 + $0xb8] sm:$0xff] %vm548, %v539
        %573 = vst.msk [vmem:[%s258 + $0xc0] sm:$0xff] %vm548, %v540
        %574 = vst.msk [vmem:[%s258 + $0xc8] sm:$0xff] %vm548, %v541
        %575 = vst.msk [vmem:[%s258 + $0xd0] sm:$0xff] %vm548, %v542
        %576 = vst.msk [vmem:[%s258 + $0xd8] sm:$0xff] %vm548, %v543
        %577 = vst.msk [vmem:[%s258 + $0xe0] sm:$0xff] %vm548, %v544
        %578 = vst.msk [vmem:[%s258 + $0xe8] sm:$0xff] %vm548, %v545
        %579 = vst.msk [vmem:[%s258 + $0xf0] sm:$0xff] %vm548, %v546
        %580 = vst.msk [vmem:[%s258 + $0xf8] sm:$0xff] %vm548, %v547
        %v581 = vsel %vm548, %v516, 0.0
        %v582 = vsel %vm548, %v517, 0.0
        %v583 = vadd.f32 %v581, %v582
        %v584 = vsel %vm548, %v518, 0.0
        %v585 = vadd.f32 %v583, %v584
        %v586 = vsel %vm548, %v519, 0.0
        %v587 = vadd.f32 %v585, %v586
        %v588 = vsel %vm548, %v520, 0.0
        %v589 = vadd.f32 %v587, %v588
        %v590 = vsel %vm548, %v521, 0.0
        %v591 = vadd.f32 %v589, %v590
        %v592 = vsel %vm548, %v522, 0.0
        %v593 = vadd.f32 %v591, %v592
        %v594 = vsel %vm548, %v523, 0.0
        %v595 = vadd.f32 %v593, %v594
        %v596 = vsel %vm548, %v524, 0.0
        %v597 = vadd.f32 %v595, %v596
        %v598 = vsel %vm548, %v525, 0.0
        %v599 = vadd.f32 %v597, %v598
        %v600 = vsel %vm548, %v526, 0.0
        %v601 = vadd.f32 %v599, %v600
        %v602 = vsel %vm548, %v527, 0.0
        %v603 = vadd.f32 %v601, %v602
        %v604 = vsel %vm548, %v528, 0.0
        %v605 = vadd.f32 %v603, %v604
        %v606 = vsel %vm548, %v529, 0.0
        %v607 = vadd.f32 %v605, %v606
        %v608 = vsel %vm548, %v530, 0.0
        %v609 = vadd.f32 %v607, %v608
        %v610 = vsel %vm548, %v531, 0.0
        %v611 = vadd.f32 %v609, %v610
        %v612 = vsel %vm548, %v532, 0.0
        %v613 = vadd.f32 %v611, %v612
        %v614 = vsel %vm548, %v533, 0.0
        %v615 = vadd.f32 %v613, %v614
        %v616 = vsel %vm548, %v534, 0.0
        %v617 = vadd.f32 %v615, %v616
        %v618 = vsel %vm548, %v535, 0.0
        %v619 = vadd.f32 %v617, %v618
        %v620 = vsel %vm548, %v536, 0.0
        %v621 = vadd.f32 %v619, %v620
        %v622 = vsel %vm548, %v537, 0.0
        %v623 = vadd.f32 %v621, %v622
        %v624 = vsel %vm548, %v538, 0.0
        %v625 = vadd.f32 %v623, %v624
        %v626 = vsel %vm548, %v539, 0.0
        %v627 = vadd.f32 %v625, %v626
        %v628 = vsel %vm548, %v540, 0.0
        %v629 = vadd.f32 %v627, %v628
        %v630 = vsel %vm548, %v541, 0.0
        %v631 = vadd.f32 %v629, %v630
        %v632 = vsel %vm548, %v542, 0.0
        %v633 = vadd.f32 %v631, %v632
        %v634 = vsel %vm548, %v543, 0.0
        %v635 = vadd.f32 %v633, %v634
        %v636 = vsel %vm548, %v544, 0.0
        %v637 = vadd.f32 %v635, %v636
        %v638 = vsel %vm548, %v545, 0.0
        %v639 = vadd.f32 %v637, %v638
        %v640 = vsel %vm548, %v546, 0.0
        %v641 = vadd.f32 %v639, %v640
        %v642 = vsel %vm548, %v547, 0.0
        %v643 = vadd.f32 %v641, %v642
        %v644 = vrot.slane %v643, 4
        %v645 = vadd.f32 %v643, %v644
        %v646 = vrot.slane %v645, 2
        %v647 = vadd.f32 %v645, %v646
        %v648 = vrot.slane %v647, 1
        %v649 = vadd.f32 %v647, %v648
        %vm650 = vcmask 57344
        %651 = vst.msk [vmem:[%s262] sm:$0x1] %vm650, %v649
        %v652 = vmul.f32 %v516, %v516
        %v653 = vmul.f32 %v517, %v517
        %v654 = vmul.f32 %v518, %v518
        %v655 = vmul.f32 %v519, %v519
        %v656 = vmul.f32 %v520, %v520
        %v657 = vmul.f32 %v521, %v521
        %v658 = vmul.f32 %v522, %v522
        %v659 = vmul.f32 %v523, %v523
        %v660 = vmul.f32 %v524, %v524
        %v661 = vmul.f32 %v525, %v525
        %v662 = vmul.f32 %v526, %v526
        %v663 = vmul.f32 %v527, %v527
        %v664 = vmul.f32 %v528, %v528
        %v665 = vmul.f32 %v529, %v529
        %v666 = vmul.f32 %v530, %v530
        %v667 = vmul.f32 %v531, %v531
        %v668 = vmul.f32 %v532, %v532
        %v669 = vmul.f32 %v533, %v533
        %v670 = vmul.f32 %v534, %v534
        %v671 = vmul.f32 %v535, %v535
        %v672 = vmul.f32 %v536, %v536
        %v673 = vmul.f32 %v537, %v537
        %v674 = vmul.f32 %v538, %v538
        %v675 = vmul.f32 %v539, %v539
        %v676 = vmul.f32 %v540, %v540
        %v677 = vmul.f32 %v541, %v541
        %v678 = vmul.f32 %v542, %v542
        %v679 = vmul.f32 %v543, %v543
        %v680 = vmul.f32 %v544, %v544
        %v681 = vmul.f32 %v545, %v545
        %v682 = vmul.f32 %v546, %v546
        %v683 = vmul.f32 %v547, %v547
        %v684 = vsel %vm548, %v652, 0.0
        %v685 = vsel %vm548, %v653, 0.0
        %v686 = vadd.f32 %v684, %v685
        %v687 = vsel %vm548, %v654, 0.0
        %v688 = vadd.f32 %v686, %v687
        %v689 = vsel %vm548, %v655, 0.0
        %v690 = vadd.f32 %v688, %v689
        %v691 = vsel %vm548, %v656, 0.0
        %v692 = vadd.f32 %v690, %v691
        %v693 = vsel %vm548, %v657, 0.0
        %v694 = vadd.f32 %v692, %v693
        %v695 = vsel %vm548, %v658, 0.0
        %v696 = vadd.f32 %v694, %v695
        %v697 = vsel %vm548, %v659, 0.0
        %v698 = vadd.f32 %v696, %v697
        %v699 = vsel %vm548, %v660, 0.0
        %v700 = vadd.f32 %v698, %v699
        %v701 = vsel %vm548, %v661, 0.0
        %v702 = vadd.f32 %v700, %v701
        %v703 = vsel %vm548, %v662, 0.0
        %v704 = vadd.f32 %v702, %v703
        %v705 = vsel %vm548, %v663, 0.0
        %v706 = vadd.f32 %v704, %v705
        %v707 = vsel %vm548, %v664, 0.0
        %v708 = vadd.f32 %v706, %v707
        %v709 = vsel %vm548, %v665, 0.0
        %v710 = vadd.f32 %v708, %v709
        %v711 = vsel %vm548, %v666, 0.0
        %v712 = vadd.f32 %v710, %v711
        %v713 = vsel %vm548, %v667, 0.0
        %v714 = vadd.f32 %v712, %v713
        %v715 = vsel %vm548, %v668, 0.0
        %v716 = vadd.f32 %v714, %v715
        %v717 = vsel %vm548, %v669, 0.0
        %v718 = vadd.f32 %v716, %v717
        %v719 = vsel %vm548, %v670, 0.0
        %v720 = vadd.f32 %v718, %v719
        %v721 = vsel %vm548, %v671, 0.0
        %v722 = vadd.f32 %v720, %v721
        %v723 = vsel %vm548, %v672, 0.0
        %v724 = vadd.f32 %v722, %v723
        %v725 = vsel %vm548, %v673, 0.0
        %v726 = vadd.f32 %v724, %v725
        %v727 = vsel %vm548, %v674, 0.0
        %v728 = vadd.f32 %v726, %v727
        %v729 = vsel %vm548, %v675, 0.0
        %v730 = vadd.f32 %v728, %v729
        %v731 = vsel %vm548, %v676, 0.0
        %v732 = vadd.f32 %v730, %v731
        %v733 = vsel %vm548, %v677, 0.0
        %v734 = vadd.f32 %v732, %v733
        %v735 = vsel %vm548, %v678, 0.0
        %v736 = vadd.f32 %v734, %v735
        %v737 = vsel %vm548, %v679, 0.0
        %v738 = vadd.f32 %v736, %v737
        %v739 = vsel %vm548, %v680, 0.0
        %v740 = vadd.f32 %v738, %v739
        %v741 = vsel %vm548, %v681, 0.0
        %v742 = vadd.f32 %v740, %v741
        %v743 = vsel %vm548, %v682, 0.0
        %v744 = vadd.f32 %v742, %v743
        %v745 = vsel %vm548, %v683, 0.0
        %v746 = vadd.f32 %v744, %v745
        %v747 = vrot.slane %v746, 4
        %v748 = vadd.f32 %v746, %v747
        %v749 = vrot.slane %v748, 2
        %v750 = vadd.f32 %v748, %v749
        %v751 = vrot.slane %v750, 1
        %v752 = vadd.f32 %v750, %v751
        %753 = vst.msk [vmem:[%s265] sm:$0x1] %vm650, %v752
        %s754 = smul.u32 32, %s20
        %p755 = scmp.lt.s32.totalorder %s754, 63
        %s756 = scalar_select %p755, %s754, 63
        %s757 = smul.addr %s756, 8
        %s758 = scalar_lea.vmem %s3, %s757
        %p759 = scmp.lt.s32.totalorder %s20, 1
        %s760 = scalar_select %p759, %s20, 1
        %s761 = scalar_lea.vmem %s4, %s760
        %p762 = scmp.lt.s32.totalorder %s20, 1
        %s763 = scalar_select %p762, %s20, 1
        %s764 = scalar_lea.vmem %s5, %s763
        // Predicated region
        $region37: #{resnet_bottleneck_block.4} parent=31 // pred_check
          %p765 = pneg %p106
        $region38: #{resnet_bottleneck_block.4} parent=31 // pred_check_branch
          %767 = sbr.rel (%p765) target = $region40
        $region39: #{resnet_bottleneck_block.4} parent=31 // pred_region
          %s768 = smul.u32 32, %s20
        $region40: #{resnet_bottleneck_block.4} parent=31 // pred_fallthru
          _
        // Predicated region
        $region41: #{resnet_bottleneck_block.4} parent=31 // pred_check
          %p769 = pneg %p132
        $region42: #{resnet_bottleneck_block.4} parent=31 // pred_check_branch
          %771 = sbr.rel (%p769) target = $region44
        $region43: #{resnet_bottleneck_block.4} parent=31 // pred_region
          _
        $region44: #{resnet_bottleneck_block.4} parent=31 // pred_fallthru
          _
        // Predicated region
        $region45: #{resnet_bottleneck_block.4} parent=31 // pred_check
          %p772 = pneg %p158
        $region46: #{resnet_bottleneck_block.4} parent=31 // pred_check_branch
          %774 = sbr.rel (%p772) target = $region48
        $region47: #{resnet_bottleneck_block.4} parent=31 // pred_region
          _
        $region48: #{resnet_bottleneck_block.4} parent=31 // pred_fallthru
          _
      $region32: #{resnet_bottleneck_block.4} parent=5 // pred_fallthru
        _
      %p775 = scmp.le.s32.totalorder 2, %s15
      // Predicated region
      $region49: #{resnet_bottleneck_block.4} parent=5 // pred_check
        %p776 = pneg %p775
      $region50: #{resnet_bottleneck_block.4} parent=5 // pred_check_branch
        %778 = sbr.rel (%p776) target = $region52
      $region51: #{resnet_bottleneck_block.4} parent=5 // pred_region
        %s779 = ssub.s32 %s15, 2
        // Predicated region
        $region53: #{resnet_bottleneck_block.4} parent=51 // pred_check
          %p780 = pneg %p112
        $region54: #{resnet_bottleneck_block.4} parent=51 // pred_check_branch
          %782 = sbr.rel (%p780) target = $region56
        $region55: #{resnet_bottleneck_block.4} parent=51 // pred_region
          %s783 = smul.u32 32, %s21
          %p784 = scmp.lt.s32.totalorder %s783, 63
          %s785 = scalar_select %p784, %s783, 63
          %s786 = smul.addr %s785, 8
          %s787 = scalar_lea.vmem %s3, %s786
        $region56: #{resnet_bottleneck_block.4} parent=51 // pred_fallthru
          _
        // Predicated region
        $region57: #{resnet_bottleneck_block.4} parent=51 // pred_check
          %p788 = pneg %p138
        $region58: #{resnet_bottleneck_block.4} parent=51 // pred_check_branch
          %790 = sbr.rel (%p788) target = $region60
        $region59: #{resnet_bottleneck_block.4} parent=51 // pred_region
          %p791 = scmp.lt.s32.totalorder %s21, 1
          %s792 = scalar_select %p791, %s21, 1
          %s793 = scalar_lea.vmem %s4, %s792
        $region60: #{resnet_bottleneck_block.4} parent=51 // pred_fallthru
          _
        // Predicated region
        $region61: #{resnet_bottleneck_block.4} parent=51 // pred_check
          %p794 = pneg %p164
        $region62: #{resnet_bottleneck_block.4} parent=51 // pred_check_branch
          %796 = sbr.rel (%p794) target = $region64
        $region63: #{resnet_bottleneck_block.4} parent=51 // pred_region
          %p797 = scmp.lt.s32.totalorder %s21, 1
          %s798 = scalar_select %p797, %s21, 1
          %s799 = scalar_lea.vmem %s5, %s798
        $region64: #{resnet_bottleneck_block.4} parent=51 // pred_fallthru
          _
      $region52: #{resnet_bottleneck_block.4} parent=5 // pred_fallthru
        _
    $region6: #{resnet_bottleneck_block.4} parent=1 // loop_footer
      %s19 = sadd.s32 1, %s15
    $region7: #{resnet_bottleneck_block.4} parent=1 // loop_footer_branch
      %14 = sbr.rel target = $region3
    $region8: #{resnet_bottleneck_block.4} parent=1 // loop_exit
      _
    %800 = vsyncpa [#allocation3], 1
    %s801 = scalar_lea.sflag [#allocation3], 1
    %802 = vsyncpa %s801, 1

// kernel: resnet_bottleneck_block.7
$region0: #{resnet_bottleneck_block.7}
  #allocation0 [shape = 'u32[]', space=smem, size = 0x4, offset = 0x4, fixed_abs, tag = 'smem constant byte address 0x4 - core index']
  #allocation1 [shape = 'u32[72,128]{1,0:T(1,128)}', space=vmem, size = 0x9000, scoped, tag = 'internal scratch']
  %s0 = inlined_call_operand.vmem [shape: f32[512,32], index: 0, kind: input, shape index: {}]
  %s1 = inlined_call_operand.hbm [shape: f32[512,32], index: 1, kind: input, shape index: {}]
  %s2 = inlined_call_operand.vmem [shape: f32[1,32], index: 2, kind: input, shape index: {}]
  %s3 = inlined_call_operand.vmem [shape: f32[1,32], index: 3, kind: input, shape index: {}]
  %s4 = inlined_call_operand.hbm [shape: f32[512,32], index: 4, kind: output, shape index: {}]
  %s5 = sld [smem:[#allocation0]]
  $region53: #{resnet_bottleneck_block.7} parent=0
    _
  %s7 = ssub.s32 1, %s5
  %s8 = scalar_select 0, %s7, %s5
  $region1: #{resnet_bottleneck_block.7} parent=0
    #allocation2 [shape = 'u8[262144]{0}', space=vmem, size = 0x40000, scoped, tag = 'input window, operand 1']
    #allocation3 [shape = 's32[2]{0}', space=sflag, size = 0x8, scoped, tag = 'scoped memory for resnet_bottleneck_block.7']
    #allocation4 [shape = 's32[2]{0}', space=sflag, size = 0x8, scoped, tag = 'scoped memory for resnet_bottleneck_block.7']
    #allocation5 [shape = 'u8[262144]{0}', space=vmem, size = 0x40000, scoped, tag = 'output window, operand 0']
    %9 = vsyncpa [#allocation3], 0
    %s10 = scalar_lea.sflag [#allocation3], 1
    %11 = vsyncpa %s10, 0
    %12 = vsyncpa [#allocation4], 0
    %s13 = scalar_lea.sflag [#allocation4], 1
    %14 = vsyncpa %s13, 0
    loop: start=0, step=1, limit=4
    $region2: #{resnet_bottleneck_block.7} parent=1 // loop_pre_header
      _
    $region3: #{resnet_bottleneck_block.7} parent=1 // loop_header
      %s16 = sphi 0, %s20
      %p17 = scmp.ge.s32.totalorder %s16, 4
      %s26 = sphi 0, %s28
      %s29 = sphi 0, %s26
      %s30 = sphi 0, %s29
      %s46 = sphi 0, %s30
      %s52 = sphi 0, %s54
      %s55 = sphi 0, %s52
      %s56 = sphi 0, %s55
      %s72 = sphi 0, %s56
      %s76 = sphi 0, %s76
      %s78 = sphi 0, %s76
      %s79 = sphi 0, %s78
      %s93 = sphi 0, %s79
      %s97 = sphi 0, %s97
      %s99 = sphi 0, %s97
      %s100 = sphi 0, %s99
      %s114 = sphi 0, %s100
      %s120 = sphi 0, %s122
      %s123 = sphi 0, %s120
      %s124 = sphi 0, %s123
      %s140 = sphi 0, %s124
    $region4: #{resnet_bottleneck_block.7} parent=1 // loop_header_branch
      %19 = sbr.rel (%p17) target = $region8
    $region5: #{resnet_bottleneck_block.7} parent=1 // loop_body
      %s21 = ssub.s32 %s16, 1
      %s22 = ssub.s32 %s16, 2
      %s23 = sadd.s32 %s16, 1
      %s24 = ssub.s32 %s16, %s23
      %p25 = scmp.eq.s32.totalorder %s24, 0
      %s27 = sadd.s32 %s26, 1
      %s28 = scalar_select %p25, %s26, %s27
      %p31 = pneg %p25
      %p32 = scmp.eq.s32.totalorder %s16, 1
      %p33 = por %p31, %p32
      %p34 = scmp.ne.s32.totalorder %s26, %s29
      %p35 = scmp.eq.s32.totalorder %s16, 0
      %p36 = por %p34, %p35
      %p37 = scmp.ne.s32.totalorder %s26, %s29
      %p38 = scmp.eq.s32.totalorder %s21, 1
      %p39 = por %p37, %p38
      %p40 = scmp.ne.s32.totalorder %s29, %s30
      %p41 = scmp.eq.s32.totalorder %s21, 0
      %p42 = por %p40, %p41
      %p43 = scmp.ne.s32.totalorder %s29, %s30
      %p44 = scmp.eq.s32.totalorder %s22, 1
      %p45 = por %p43, %p44
      %p47 = scmp.ne.s32.totalorder %s30, %s46
      %p48 = scmp.eq.s32.totalorder %s22, 0
      %p49 = por %p47, %p48
      %s50 = ssub.s32 %s16, %s23
      %p51 = scmp.eq.s32.totalorder %s50, 0
      %s53 = sadd.s32 %s52, 1
      %s54 = scalar_select %p51, %s52, %s53
      %p57 = pneg %p51
      %p58 = scmp.eq.s32.totalorder %s16, 1
      %p59 = por %p57, %p58
      %p60 = scmp.ne.s32.totalorder %s52, %s55
      %p61 = scmp.eq.s32.totalorder %s16, 0
      %p62 = por %p60, %p61
      %p63 = scmp.ne.s32.totalorder %s52, %s55
      %p64 = scmp.eq.s32.totalorder %s21, 1
      %p65 = por %p63, %p64
      %p66 = scmp.ne.s32.totalorder %s55, %s56
      %p67 = scmp.eq.s32.totalorder %s21, 0
      %p68 = por %p66, %p67
      %p69 = scmp.ne.s32.totalorder %s55, %s56
      %p70 = scmp.eq.s32.totalorder %s22, 1
      %p71 = por %p69, %p70
      %p73 = scmp.ne.s32.totalorder %s56, %s72
      %p74 = scmp.eq.s32.totalorder %s22, 0
      %p75 = por %p73, %p74
      %s77 = sadd.s32 %s76, 1
      %p80 = scmp.eq.s32.totalorder %s16, 1
      %p81 = scmp.ne.s32.totalorder %s76, %s78
      %p82 = scmp.eq.s32.totalorder %s16, 0
      %p83 = por %p81, %p82
      %p84 = scmp.ne.s32.totalorder %s76, %s78
      %p85 = scmp.eq.s32.totalorder %s21, 1
      %p86 = por %p84, %p85
      %p87 = scmp.ne.s32.totalorder %s78, %s79
      %p88 = scmp.eq.s32.totalorder %s21, 0
      %p89 = por %p87, %p88
      %p90 = scmp.ne.s32.totalorder %s78, %s79
      %p91 = scmp.eq.s32.totalorder %s22, 1
      %p92 = por %p90, %p91
      %p94 = scmp.ne.s32.totalorder %s79, %s93
      %p95 = scmp.eq.s32.totalorder %s22, 0
      %p96 = por %p94, %p95
      %s98 = sadd.s32 %s97, 1
      %p101 = scmp.eq.s32.totalorder %s16, 1
      %p102 = scmp.ne.s32.totalorder %s97, %s99
      %p103 = scmp.eq.s32.totalorder %s16, 0
      %p104 = por %p102, %p103
      %p105 = scmp.ne.s32.totalorder %s97, %s99
      %p106 = scmp.eq.s32.totalorder %s21, 1
      %p107 = por %p105, %p106
      %p108 = scmp.ne.s32.totalorder %s99, %s100
      %p109 = scmp.eq.s32.totalorder %s21, 0
      %p110 = por %p108, %p109
      %p111 = scmp.ne.s32.totalorder %s99, %s100
      %p112 = scmp.eq.s32.totalorder %s22, 1
      %p113 = por %p111, %p112
      %p115 = scmp.ne.s32.totalorder %s100, %s114
      %p116 = scmp.eq.s32.totalorder %s22, 0
      %p117 = por %p115, %p116
      %s118 = ssub.s32 %s16, %s23
      %p119 = scmp.eq.s32.totalorder %s118, 0
      %s121 = sadd.s32 %s120, 1
      %s122 = scalar_select %p119, %s120, %s121
      %p125 = pneg %p119
      %p126 = scmp.eq.s32.totalorder %s16, 1
      %p127 = por %p125, %p126
      %p128 = scmp.ne.s32.totalorder %s120, %s123
      %p129 = scmp.eq.s32.totalorder %s16, 0
      %p130 = por %p128, %p129
      %p131 = scmp.ne.s32.totalorder %s120, %s123
      %p132 = scmp.eq.s32.totalorder %s21, 1
      %p133 = por %p131, %p132
      %p134 = scmp.ne.s32.totalorder %s123, %s124
      %p135 = scmp.eq.s32.totalorder %s21, 0
      %p136 = por %p134, %p135
      %p137 = scmp.ne.s32.totalorder %s123, %s124
      %p138 = scmp.eq.s32.totalorder %s22, 1
      %p139 = por %p137, %p138
      %p141 = scmp.ne.s32.totalorder %s124, %s140
      %p142 = scmp.eq.s32.totalorder %s22, 0
      %p143 = por %p141, %p142
      %p144 = scmp.le.s32.totalorder 1, %s16
      %p145 = scmp.lt.s32.totalorder %s16, 3
      %p146 = pnand %p144, %p145
      %p147 = pneg %p146
      // Predicated region
      $region9: #{resnet_bottleneck_block.7} parent=5 // pred_check
        _
      $region10: #{resnet_bottleneck_block.7} parent=5 // pred_check_branch
        %149 = sbr.rel (%p146) target = $region12
      $region11: #{resnet_bottleneck_block.7} parent=5 // pred_region
        %s150 = ssub.s32 %s16, 1
        // Predicated region
        $region13: #{resnet_bottleneck_block.7} parent=11 // pred_check
          %p151 = pneg %p89
        $region14: #{resnet_bottleneck_block.7} parent=11 // pred_check_branch
          %153 = sbr.rel (%p151) target = $region16
        $region15: #{resnet_bottleneck_block.7} parent=11 // pred_region
          _
        $region16: #{resnet_bottleneck_block.7} parent=11 // pred_fallthru
          _
        // Predicated region
        $region17: #{resnet_bottleneck_block.7} parent=11 // pred_check
          %p154 = pneg %p110
        $region18: #{resnet_bottleneck_block.7} parent=11 // pred_check_branch
          %156 = sbr.rel (%p154) target = $region20
        $region19: #{resnet_bottleneck_block.7} parent=11 // pred_region
          _
        $region20: #{resnet_bottleneck_block.7} parent=11 // pred_fallthru
          _
      $region12: #{resnet_bottleneck_block.7} parent=5 // pred_fallthru
        _
      %p157 = scmp.lt.s32.totalorder %s16, 2
      // Predicated region
      $region21: #{resnet_bottleneck_block.7} parent=5 // pred_check
        %p158 = pneg %p157
      $region22: #{resnet_bottleneck_block.7} parent=5 // pred_check_branch
        %160 = sbr.rel (%p158) target = $region24
      $region23: #{resnet_bottleneck_block.7} parent=5 // pred_region
        // Predicated region
        $region25: #{resnet_bottleneck_block.7} parent=23 // pred_check
          %p161 = pneg %p36
        $region26: #{resnet_bottleneck_block.7} parent=23 // pred_check_branch
          %163 = sbr.rel (%p161) target = $region28
        $region27: #{resnet_bottleneck_block.7} parent=23 // pred_region
          %s164 = smul.u32 32, %s16
          %p165 = scmp.lt.s32.totalorder %s164, 63
          %s166 = scalar_select %p165, %s164, 63
          %s167 = smul.addr %s166, 8
          %s168 = scalar_lea.vmem %s0, %s167
          %s169 = smul.u32 32, %s16
        $region28: #{resnet_bottleneck_block.7} parent=23 // pred_fallthru
          _
        // Predicated region
        $region29: #{resnet_bottleneck_block.7} parent=23 // pred_check
          %p170 = pneg %p62
        $region30: #{resnet_bottleneck_block.7} parent=23 // pred_check_branch
          %172 = sbr.rel (%p170) target = $region32
        $region31: #{resnet_bottleneck_block.7} parent=23 // pred_region
          %s173 = sand.u32 %s52, 1
          %s174 = scalar_lea.sflag [#allocation3], %s173
          %s175 = sand.u32 %s52, 1
          %s176 = smul.addr %s175, 256
          %s177 = scalar_lea.vmem [#allocation2], %s176
          %s178 = smul.u32 32, %s16
          %180 = vsyncadd %s174, 0
          %s181 = smul.addr %s178, 8
          %s182 = scalar_lea.hbm %s1, %s181
          %s183 = sshll.u32 %s182, 4
          %s184 = int_to_ptr.hbm [resolvable:$true] %s183
          %s185 = sshll.u32 %s177, 4
          %s186 = int_to_ptr.vmem [resolvable:$true] %s185
          %191 = dma.hbm_to_vmem [thread:$0]  %s184, 4096, %s186, %s174, 128, 128, 8
        $region32: #{resnet_bottleneck_block.7} parent=23 // pred_fallthru
          _
      $region24: #{resnet_bottleneck_block.7} parent=5 // pred_fallthru
        _
      %p192 = scmp.le.s32.totalorder 1, %s16
      %p193 = scmp.lt.s32.totalorder %s16, 3
      %p194 = pnand %p192, %p193
      %p195 = pneg %p194
      // Predicated region
      $region33: #{resnet_bottleneck_block.7} parent=5 // pred_check
        _
      $region34: #{resnet_bottleneck_block.7} parent=5 // pred_check_branch
        %197 = sbr.rel (%p194) target = $region36
      $region35: #{resnet_bottleneck_block.7} parent=5 // pred_region
        %s198 = ssub.s32 %s16, 1
        %s199 = sand.u32 %s55, 1
        %s200 = scalar_lea.sflag [#allocation3], %s199
        %s201 = sand.u32 %s55, 1
        %s202 = smul.addr %s201, 256
        %s203 = scalar_lea.vmem [#allocation2], %s202
        // Predicated region
        $region37: #{resnet_bottleneck_block.7} parent=35 // pred_check
          %p204 = pneg %p68
        $region38: #{resnet_bottleneck_block.7} parent=35 // pred_check_branch
          %206 = sbr.rel (%p204) target = $region40
        $region39: #{resnet_bottleneck_block.7} parent=35 // pred_region
          %208 = dma.done %s200, 4096
        $region40: #{resnet_bottleneck_block.7} parent=35 // pred_fallthru
          _
        %s209 = smul.u32 32, %s21
        %p210 = scmp.lt.s32.totalorder %s209, 63
        %s211 = scalar_select %p210, %s209, 63
        %s212 = smul.addr %s211, 8
        %s213 = scalar_lea.vmem %s0, %s212
        %p214 = pneg %p42
        %p215 = pneg %p39
        %s216 = sand.u32 %s55, 1
        %s217 = scalar_lea.sflag [#allocation3], %s216
        %s218 = sand.u32 %s55, 1
        %s219 = smul.addr %s218, 256
        %s220 = scalar_lea.vmem [#allocation2], %s219
        %p221 = pneg %p68
        %p222 = pneg %p65
        %p223 = pneg %p89
        %p224 = pneg %p86
        %p225 = pneg %p110
        %p226 = pneg %p107
        %p227 = pneg %p136
        %p228 = pneg %p133
        %s229 = sand.u32 %s123, 1
        %s230 = scalar_lea.sflag [#allocation4], %s229
        %s231 = sand.u32 %s123, 1
        %s232 = smul.addr %s231, 256
        %s233 = scalar_lea.vmem [#allocation5], %s232
        %s234 = smul.u32 32, %s21
        %p235 = scmp.lt.s32.totalorder %s234, 63
        %s236 = scalar_select %p235, %s234, 63
        %s237 = smul.addr %s236, 8
        %s238 = scalar_lea.vmem %s0, %s237
        %s239 = smul.u32 32, %s21
        %s240 = smul.u32 32, %s21
        %s241 = smul.u32 32, %s21
        %v242 = vld [vmem:[%s238] sm:$0xff]
        %v243 = vld [vmem:[%s238 + $0x8] sm:$0xff]
        %v244 = vld [vmem:[%s238 + $0x10] sm:$0xff]
        %v245 = vld [vmem:[%s238 + $0x18] sm:$0xff]
        %v246 = vld [vmem:[%s238 + $0x20] sm:$0xff]
        %v247 = vld [vmem:[%s238 + $0x28] sm:$0xff]
        %v248 = vld [vmem:[%s238 + $0x30] sm:$0xff]
        %v249 = vld [vmem:[%s238 + $0x38] sm:$0xff]
        %v250 = vld [vmem:[%s238 + $0x40] sm:$0xff]
        %v251 = vld [vmem:[%s238 + $0x48] sm:$0xff]
        %v252 = vld [vmem:[%s238 + $0x50] sm:$0xff]
        %v253 = vld [vmem:[%s238 + $0x58] sm:$0xff]
        %v254 = vld [vmem:[%s238 + $0x60] sm:$0xff]
        %v255 = vld [vmem:[%s238 + $0x68] sm:$0xff]
        %v256 = vld [vmem:[%s238 + $0x70] sm:$0xff]
        %v257 = vld [vmem:[%s238 + $0x78] sm:$0xff]
        %v258 = vld [vmem:[%s238 + $0x80] sm:$0xff]
        %v259 = vld [vmem:[%s238 + $0x88] sm:$0xff]
        %v260 = vld [vmem:[%s238 + $0x90] sm:$0xff]
        %v261 = vld [vmem:[%s238 + $0x98] sm:$0xff]
        %v262 = vld [vmem:[%s238 + $0xa0] sm:$0xff]
        %v263 = vld [vmem:[%s238 + $0xa8] sm:$0xff]
        %v264 = vld [vmem:[%s238 + $0xb0] sm:$0xff]
        %v265 = vld [vmem:[%s238 + $0xb8] sm:$0xff]
        %v266 = vld [vmem:[%s238 + $0xc0] sm:$0xff]
        %v267 = vld [vmem:[%s238 + $0xc8] sm:$0xff]
        %v268 = vld [vmem:[%s238 + $0xd0] sm:$0xff]
        %v269 = vld [vmem:[%s238 + $0xd8] sm:$0xff]
        %v270 = vld [vmem:[%s238 + $0xe0] sm:$0xff]
        %v271 = vld [vmem:[%s238 + $0xe8] sm:$0xff]
        %v272 = vld [vmem:[%s238 + $0xf0] sm:$0xff]
        %v273 = vld [vmem:[%s238 + $0xf8] sm:$0xff]
        %v274 = vld [vmem:[%s2] sm:$0x1]
        %v276 = vperm.slane %v274, 0
        %v278 = vmul.f32 %v242, %v276
        %v279 = vmul.f32 %v243, %v276
        %v280 = vmul.f32 %v244, %v276
        %v281 = vmul.f32 %v245, %v276
        %v282 = vmul.f32 %v246, %v276
        %v283 = vmul.f32 %v247, %v276
        %v284 = vmul.f32 %v248, %v276
        %v285 = vmul.f32 %v249, %v276
        %v286 = vmul.f32 %v250, %v276
        %v287 = vmul.f32 %v251, %v276
        %v288 = vmul.f32 %v252, %v276
        %v289 = vmul.f32 %v253, %v276
        %v290 = vmul.f32 %v254, %v276
        %v291 = vmul.f32 %v255, %v276
        %v292 = vmul.f32 %v256, %v276
        %v293 = vmul.f32 %v257, %v276
        %v294 = vmul.f32 %v258, %v276
        %v295 = vmul.f32 %v259, %v276
        %v296 = vmul.f32 %v260, %v276
        %v297 = vmul.f32 %v261, %v276
        %v298 = vmul.f32 %v262, %v276
        %v299 = vmul.f32 %v263, %v276
        %v300 = vmul.f32 %v264, %v276
        %v301 = vmul.f32 %v265, %v276
        %v302 = vmul.f32 %v266, %v276
        %v303 = vmul.f32 %v267, %v276
        %v304 = vmul.f32 %v268, %v276
        %v305 = vmul.f32 %v269, %v276
        %v306 = vmul.f32 %v270, %v276
        %v307 = vmul.f32 %v271, %v276
        %v308 = vmul.f32 %v272, %v276
        %v309 = vmul.f32 %v273, %v276
        %v310 = vld [vmem:[%s3] sm:$0x1]
        %v312 = vperm.slane %v310, 0
        %v314 = vadd.f32 %v278, %v312
        %v315 = vadd.f32 %v279, %v312
        %v316 = vadd.f32 %v280, %v312
        %v317 = vadd.f32 %v281, %v312
        %v318 = vadd.f32 %v282, %v312
        %v319 = vadd.f32 %v283, %v312
        %v320 = vadd.f32 %v284, %v312
        %v321 = vadd.f32 %v285, %v312
        %v322 = vadd.f32 %v286, %v312
        %v323 = vadd.f32 %v287, %v312
        %v324 = vadd.f32 %v288, %v312
        %v325 = vadd.f32 %v289, %v312
        %v326 = vadd.f32 %v290, %v312
        %v327 = vadd.f32 %v291, %v312
        %v328 = vadd.f32 %v292, %v312
        %v329 = vadd.f32 %v293, %v312
        %v330 = vadd.f32 %v294, %v312
        %v331 = vadd.f32 %v295, %v312
        %v332 = vadd.f32 %v296, %v312
        %v333 = vadd.f32 %v297, %v312
        %v334 = vadd.f32 %v298, %v312
        %v335 = vadd.f32 %v299, %v312
        %v336 = vadd.f32 %v300, %v312
        %v337 = vadd.f32 %v301, %v312
        %v338 = vadd.f32 %v302, %v312
        %v339 = vadd.f32 %v303, %v312
        %v340 = vadd.f32 %v304, %v312
        %v341 = vadd.f32 %v305, %v312
        %v342 = vadd.f32 %v306, %v312
        %v343 = vadd.f32 %v307, %v312
        %v344 = vadd.f32 %v308, %v312
        %v345 = vadd.f32 %v309, %v312
        %v346 = vld [vmem:[%s203] sm:$0xff]
        %v347 = vld [vmem:[%s203 + $0x8] sm:$0xff]
        %v348 = vld [vmem:[%s203 + $0x10] sm:$0xff]
        %v349 = vld [vmem:[%s203 + $0x18] sm:$0xff]
        %v350 = vld [vmem:[%s203 + $0x20] sm:$0xff]
        %v351 = vld [vmem:[%s203 + $0x28] sm:$0xff]
        %v352 = vld [vmem:[%s203 + $0x30] sm:$0xff]
        %v353 = vld [vmem:[%s203 + $0x38] sm:$0xff]
        %v354 = vld [vmem:[%s203 + $0x40] sm:$0xff]
        %v355 = vld [vmem:[%s203 + $0x48] sm:$0xff]
        %v356 = vld [vmem:[%s203 + $0x50] sm:$0xff]
        %v357 = vld [vmem:[%s203 + $0x58] sm:$0xff]
        %v358 = vld [vmem:[%s203 + $0x60] sm:$0xff]
        %v359 = vld [vmem:[%s203 + $0x68] sm:$0xff]
        %v360 = vld [vmem:[%s203 + $0x70] sm:$0xff]
        %v361 = vld [vmem:[%s203 + $0x78] sm:$0xff]
        %v362 = vld [vmem:[%s203 + $0x80] sm:$0xff]
        %v363 = vld [vmem:[%s203 + $0x88] sm:$0xff]
        %v364 = vld [vmem:[%s203 + $0x90] sm:$0xff]
        %v365 = vld [vmem:[%s203 + $0x98] sm:$0xff]
        %v366 = vld [vmem:[%s203 + $0xa0] sm:$0xff]
        %v367 = vld [vmem:[%s203 + $0xa8] sm:$0xff]
        %v368 = vld [vmem:[%s203 + $0xb0] sm:$0xff]
        %v369 = vld [vmem:[%s203 + $0xb8] sm:$0xff]
        %v370 = vld [vmem:[%s203 + $0xc0] sm:$0xff]
        %v371 = vld [vmem:[%s203 + $0xc8] sm:$0xff]
        %v372 = vld [vmem:[%s203 + $0xd0] sm:$0xff]
        %v373 = vld [vmem:[%s203 + $0xd8] sm:$0xff]
        %v374 = vld [vmem:[%s203 + $0xe0] sm:$0xff]
        %v375 = vld [vmem:[%s203 + $0xe8] sm:$0xff]
        %v376 = vld [vmem:[%s203 + $0xf0] sm:$0xff]
        %v377 = vld [vmem:[%s203 + $0xf8] sm:$0xff]
        %v378 = vadd.f32 %v314, %v346
        %v379 = vadd.f32 %v315, %v347
        %v380 = vadd.f32 %v316, %v348
        %v381 = vadd.f32 %v317, %v349
        %v382 = vadd.f32 %v318, %v350
        %v383 = vadd.f32 %v319, %v351
        %v384 = vadd.f32 %v320, %v352
        %v385 = vadd.f32 %v321, %v353
        %v386 = vadd.f32 %v322, %v354
        %v387 = vadd.f32 %v323, %v355
        %v388 = vadd.f32 %v324, %v356
        %v389 = vadd.f32 %v325, %v357
        %v390 = vadd.f32 %v326, %v358
        %v391 = vadd.f32 %v327, %v359
        %v392 = vadd.f32 %v328, %v360
        %v393 = vadd.f32 %v329, %v361
        %v394 = vadd.f32 %v330, %v362
        %v395 = vadd.f32 %v331, %v363
        %v396 = vadd.f32 %v332, %v364
        %v397 = vadd.f32 %v333, %v365
        %v398 = vadd.f32 %v334, %v366
        %v399 = vadd.f32 %v335, %v367
        %v400 = vadd.f32 %v336, %v368
        %v401 = vadd.f32 %v337, %v369
        %v402 = vadd.f32 %v338, %v370
        %v403 = vadd.f32 %v339, %v371
        %v404 = vadd.f32 %v340, %v372
        %v405 = vadd.f32 %v341, %v373
        %v406 = vadd.f32 %v342, %v374
        %v407 = vadd.f32 %v343, %v375
        %v408 = vadd.f32 %v344, %v376
        %v409 = vadd.f32 %v345, %v377
        %v410 = vmax.f32 %v378, 0.0
        %v411 = vmax.f32 %v379, 0.0
        %v412 = vmax.f32 %v380, 0.0
        %v413 = vmax.f32 %v381, 0.0
        %v414 = vmax.f32 %v382, 0.0
        %v415 = vmax.f32 %v383, 0.0
        %v416 = vmax.f32 %v384, 0.0
        %v417 = vmax.f32 %v385, 0.0
        %v418 = vmax.f32 %v386, 0.0
        %v419 = vmax.f32 %v387, 0.0
        %v420 = vmax.f32 %v388, 0.0
        %v421 = vmax.f32 %v389, 0.0
        %v422 = vmax.f32 %v390, 0.0
        %v423 = vmax.f32 %v391, 0.0
        %v424 = vmax.f32 %v392, 0.0
        %v425 = vmax.f32 %v393, 0.0
        %v426 = vmax.f32 %v394, 0.0
        %v427 = vmax.f32 %v395, 0.0
        %v428 = vmax.f32 %v396, 0.0
        %v429 = vmax.f32 %v397, 0.0
        %v430 = vmax.f32 %v398, 0.0
        %v431 = vmax.f32 %v399, 0.0
        %v432 = vmax.f32 %v400, 0.0
        %v433 = vmax.f32 %v401, 0.0
        %v434 = vmax.f32 %v402, 0.0
        %v435 = vmax.f32 %v403, 0.0
        %v436 = vmax.f32 %v404, 0.0
        %v437 = vmax.f32 %v405, 0.0
        %v438 = vmax.f32 %v406, 0.0
        %v439 = vmax.f32 %v407, 0.0
        %v440 = vmax.f32 %v408, 0.0
        %v441 = vmax.f32 %v409, 0.0
        %vm442 = vcmask 261120
        %443 = vst.msk [vmem:[%s233] sm:$0xff] %vm442, %v410
        %444 = vst.msk [vmem:[%s233 + $0x8] sm:$0xff] %vm442, %v411
        %445 = vst.msk [vmem:[%s233 + $0x10] sm:$0xff] %vm442, %v412
        %446 = vst.msk [vmem:[%s233 + $0x18] sm:$0xff] %vm442, %v413
        %447 = vst.msk [vmem:[%s233 + $0x20] sm:$0xff] %vm442, %v414
        %448 = vst.msk [vmem:[%s233 + $0x28] sm:$0xff] %vm442, %v415
        %449 = vst.msk [vmem:[%s233 + $0x30] sm:$0xff] %vm442, %v416
        %450 = vst.msk [vmem:[%s233 + $0x38] sm:$0xff] %vm442, %v417
        %451 = vst.msk [vmem:[%s233 + $0x40] sm:$0xff] %vm442, %v418
        %452 = vst.msk [vmem:[%s233 + $0x48] sm:$0xff] %vm442, %v419
        %453 = vst.msk [vmem:[%s233 + $0x50] sm:$0xff] %vm442, %v420
        %454 = vst.msk [vmem:[%s233 + $0x58] sm:$0xff] %vm442, %v421
        %455 = vst.msk [vmem:[%s233 + $0x60] sm:$0xff] %vm442, %v422
        %456 = vst.msk [vmem:[%s233 + $0x68] sm:$0xff] %vm442, %v423
        %457 = vst.msk [vmem:[%s233 + $0x70] sm:$0xff] %vm442, %v424
        %458 = vst.msk [vmem:[%s233 + $0x78] sm:$0xff] %vm442, %v425
        %459 = vst.msk [vmem:[%s233 + $0x80] sm:$0xff] %vm442, %v426
        %460 = vst.msk [vmem:[%s233 + $0x88] sm:$0xff] %vm442, %v427
        %461 = vst.msk [vmem:[%s233 + $0x90] sm:$0xff] %vm442, %v428
        %462 = vst.msk [vmem:[%s233 + $0x98] sm:$0xff] %vm442, %v429
        %463 = vst.msk [vmem:[%s233 + $0xa0] sm:$0xff] %vm442, %v430
        %464 = vst.msk [vmem:[%s233 + $0xa8] sm:$0xff] %vm442, %v431
        %465 = vst.msk [vmem:[%s233 + $0xb0] sm:$0xff] %vm442, %v432
        %466 = vst.msk [vmem:[%s233 + $0xb8] sm:$0xff] %vm442, %v433
        %467 = vst.msk [vmem:[%s233 + $0xc0] sm:$0xff] %vm442, %v434
        %468 = vst.msk [vmem:[%s233 + $0xc8] sm:$0xff] %vm442, %v435
        %469 = vst.msk [vmem:[%s233 + $0xd0] sm:$0xff] %vm442, %v436
        %470 = vst.msk [vmem:[%s233 + $0xd8] sm:$0xff] %vm442, %v437
        %471 = vst.msk [vmem:[%s233 + $0xe0] sm:$0xff] %vm442, %v438
        %472 = vst.msk [vmem:[%s233 + $0xe8] sm:$0xff] %vm442, %v439
        %473 = vst.msk [vmem:[%s233 + $0xf0] sm:$0xff] %vm442, %v440
        %474 = vst.msk [vmem:[%s233 + $0xf8] sm:$0xff] %vm442, %v441
        %s475 = sand.u32 %s123, 1
        %s476 = scalar_lea.sflag [#allocation4], %s475
        %s477 = sand.u32 %s123, 1
        %s478 = smul.addr %s477, 256
        %s479 = scalar_lea.vmem [#allocation5], %s478
        // Predicated region
        $region41: #{resnet_bottleneck_block.7} parent=35 // pred_check
          %p480 = pneg %p133
        $region42: #{resnet_bottleneck_block.7} parent=35 // pred_check_branch
          %482 = sbr.rel (%p480) target = $region44
        $region43: #{resnet_bottleneck_block.7} parent=35 // pred_region
          %s483 = smul.u32 32, %s21
          %485 = vsyncadd %s476, 0
          %s486 = smul.addr %s483, 8
          %s487 = scalar_lea.hbm %s4, %s486
          %s488 = sshll.u32 %s479, 4
          %s489 = int_to_ptr.vmem [resolvable:$true] %s488
          %s490 = sshll.u32 %s487, 4
          %s491 = int_to_ptr.hbm [resolvable:$true] %s490
          %496 = dma.vmem_to_hbm [thread:$0]  %s489, 4096, %s491, %s476, 128, 128, 8
        $region44: #{resnet_bottleneck_block.7} parent=35 // pred_fallthru
          _
      $region36: #{resnet_bottleneck_block.7} parent=5 // pred_fallthru
        _
      %p497 = scmp.le.s32.totalorder 2, %s16
      // Predicated region
      $region45: #{resnet_bottleneck_block.7} parent=5 // pred_check
        %p498 = pneg %p497
      $region46: #{resnet_bottleneck_block.7} parent=5 // pred_check_branch
        %500 = sbr.rel (%p498) target = $region48
      $region47: #{resnet_bottleneck_block.7} parent=5 // pred_region
        %s501 = ssub.s32 %s16, 2
        // Predicated region
        $region49: #{resnet_bottleneck_block.7} parent=47 // pred_check
          %p502 = pneg %p139
        $region50: #{resnet_bottleneck_block.7} parent=47 // pred_check_branch
          %504 = sbr.rel (%p502) target = $region52
        $region51: #{resnet_bottleneck_block.7} parent=47 // pred_region
          %s505 = sand.u32 %s124, 1
          %s506 = scalar_lea.sflag [#allocation4], %s505
          %s507 = sand.u32 %s124, 1
          %s508 = smul.addr %s507, 256
          %s509 = scalar_lea.vmem [#allocation5], %s508
          %511 = dma.done %s506, 4096
        $region52: #{resnet_bottleneck_block.7} parent=47 // pred_fallthru
          _
      $region48: #{resnet_bottleneck_block.7} parent=5 // pred_fallthru
        _
    $region6: #{resnet_bottleneck_block.7} parent=1 // loop_footer
      %s20 = sadd.s32 1, %s16
    $region7: #{resnet_bottleneck_block.7} parent=1 // loop_footer_branch
      %15 = sbr.rel target = $region3
    $region8: #{resnet_bottleneck_block.7} parent=1 // loop_exit
      _
    %512 = vsyncpa [#allocation3], 1
    %s513 = scalar_lea.sflag [#allocation3], 1
    %514 = vsyncpa %s513, 1
    %515 = vsyncpa [#allocation4], 1
    %s516 = scalar_lea.sflag [#allocation4], 1
    %517 = vsyncpa %s516, 1

// kernel: resnet_bottleneck_block.6
$region0: #{resnet_bottleneck_block.6}
  #allocation0 [shape = 'u32[]', space=smem, size = 0x4, offset = 0x4, fixed_abs, tag = 'smem constant byte address 0x4 - core index']
  #allocation1 [shape = 'u32[72,128]{1,0:T(1,128)}', space=vmem, size = 0x9000, scoped, tag = 'internal scratch']
  %s0 = inlined_call_operand.vmem [shape: f32[512,8], index: 0, kind: input, shape index: {}]
  %s1 = inlined_call_operand.vmem [shape: f32[8,32], index: 1, kind: input, shape index: {}]
  %s2 = inlined_call_operand.vmem [shape: f32[1,32], index: 2, kind: input, shape index: {}]
  %s3 = inlined_call_operand.vmem [shape: f32[512,32], index: 3, kind: output, shape index: {0}]
  %s4 = inlined_call_operand.vmem [shape: f32[2,1,32], index: 4, kind: output, shape index: {1}]
  %s5 = inlined_call_operand.vmem [shape: f32[2,1,32], index: 5, kind: output, shape index: {2}]
  %6 = xla_tuple %s3, %s4, %s5
  %s7 = sld [smem:[#allocation0]]
  $region61: #{resnet_bottleneck_block.6} parent=0
    _
  %s9 = ssub.s32 1, %s7
  %s10 = scalar_select 0, %s9, %s7
  loop: start=0, step=1, limit=4
  $region2: #{resnet_bottleneck_block.6} parent=0 // loop_pre_header
    _
  $region3: #{resnet_bottleneck_block.6} parent=0 // loop_header
    %s12 = sphi 0, %s16
    %p13 = scmp.ge.s32.totalorder %s12, 4
    %s22 = sphi 0, %s24
    %s25 = sphi 0, %s22
    %s26 = sphi 0, %s25
    %s42 = sphi 0, %s26
    %s46 = sphi 0, %s46
    %s48 = sphi 0, %s46
    %s49 = sphi 0, %s48
    %s63 = sphi 0, %s49
    %s67 = sphi 0, %s67
    %s69 = sphi 0, %s67
    %s70 = sphi 0, %s69
    %s84 = sphi 0, %s70
    %s90 = sphi 0, %s92
    %s93 = sphi 0, %s90
    %s94 = sphi 0, %s93
    %s110 = sphi 0, %s94
    %s116 = sphi 0, %s118
    %s119 = sphi 0, %s116
    %s120 = sphi 0, %s119
    %s136 = sphi 0, %s120
    %s142 = sphi 0, %s144
    %s145 = sphi 0, %s142
    %s146 = sphi 0, %s145
    %s162 = sphi 0, %s146
  $region4: #{resnet_bottleneck_block.6} parent=0 // loop_header_branch
    %15 = sbr.rel (%p13) target = $region8
  $region5: #{resnet_bottleneck_block.6} parent=0 // loop_body
    %s17 = ssub.s32 %s12, 1
    %s18 = ssub.s32 %s12, 2
    %s19 = sadd.s32 %s12, 1
    %s20 = ssub.s32 %s12, %s19
    %p21 = scmp.eq.s32.totalorder %s20, 0
    %s23 = sadd.s32 %s22, 1
    %s24 = scalar_select %p21, %s22, %s23
    %p27 = pneg %p21
    %p28 = scmp.eq.s32.totalorder %s12, 1
    %p29 = por %p27, %p28
    %p30 = scmp.ne.s32.totalorder %s22, %s25
    %p31 = scmp.eq.s32.totalorder %s12, 0
    %p32 = por %p30, %p31
    %p33 = scmp.ne.s32.totalorder %s22, %s25
    %p34 = scmp.eq.s32.totalorder %s17, 1
    %p35 = por %p33, %p34
    %p36 = scmp.ne.s32.totalorder %s25, %s26
    %p37 = scmp.eq.s32.totalorder %s17, 0
    %p38 = por %p36, %p37
    %p39 = scmp.ne.s32.totalorder %s25, %s26
    %p40 = scmp.eq.s32.totalorder %s18, 1
    %p41 = por %p39, %p40
    %p43 = scmp.ne.s32.totalorder %s26, %s42
    %p44 = scmp.eq.s32.totalorder %s18, 0
    %p45 = por %p43, %p44
    %s47 = sadd.s32 %s46, 1
    %p50 = scmp.eq.s32.totalorder %s12, 1
    %p51 = scmp.ne.s32.totalorder %s46, %s48
    %p52 = scmp.eq.s32.totalorder %s12, 0
    %p53 = por %p51, %p52
    %p54 = scmp.ne.s32.totalorder %s46, %s48
    %p55 = scmp.eq.s32.totalorder %s17, 1
    %p56 = por %p54, %p55
    %p57 = scmp.ne.s32.totalorder %s48, %s49
    %p58 = scmp.eq.s32.totalorder %s17, 0
    %p59 = por %p57, %p58
    %p60 = scmp.ne.s32.totalorder %s48, %s49
    %p61 = scmp.eq.s32.totalorder %s18, 1
    %p62 = por %p60, %p61
    %p64 = scmp.ne.s32.totalorder %s49, %s63
    %p65 = scmp.eq.s32.totalorder %s18, 0
    %p66 = por %p64, %p65
    %s68 = sadd.s32 %s67, 1
    %p71 = scmp.eq.s32.totalorder %s12, 1
    %p72 = scmp.ne.s32.totalorder %s67, %s69
    %p73 = scmp.eq.s32.totalorder %s12, 0
    %p74 = por %p72, %p73
    %p75 = scmp.ne.s32.totalorder %s67, %s69
    %p76 = scmp.eq.s32.totalorder %s17, 1
    %p77 = por %p75, %p76
    %p78 = scmp.ne.s32.totalorder %s69, %s70
    %p79 = scmp.eq.s32.totalorder %s17, 0
    %p80 = por %p78, %p79
    %p81 = scmp.ne.s32.totalorder %s69, %s70
    %p82 = scmp.eq.s32.totalorder %s18, 1
    %p83 = por %p81, %p82
    %p85 = scmp.ne.s32.totalorder %s70, %s84
    %p86 = scmp.eq.s32.totalorder %s18, 0
    %p87 = por %p85, %p86
    %s88 = ssub.s32 %s12, %s19
    %p89 = scmp.eq.s32.totalorder %s88, 0
    %s91 = sadd.s32 %s90, 1
    %s92 = scalar_select %p89, %s90, %s91
    %p95 = pneg %p89
    %p96 = scmp.eq.s32.totalorder %s12, 1
    %p97 = por %p95, %p96
    %p98 = scmp.ne.s32.totalorder %s90, %s93
    %p99 = scmp.eq.s32.totalorder %s12, 0
    %p100 = por %p98, %p99
    %p101 = scmp.ne.s32.totalorder %s90, %s93
    %p102 = scmp.eq.s32.totalorder %s17, 1
    %p103 = por %p101, %p102
    %p104 = scmp.ne.s32.totalorder %s93, %s94
    %p105 = scmp.eq.s32.totalorder %s17, 0
    %p106 = por %p104, %p105
    %p107 = scmp.ne.s32.totalorder %s93, %s94
    %p108 = scmp.eq.s32.totalorder %s18, 1
    %p109 = por %p107, %p108
    %p111 = scmp.ne.s32.totalorder %s94, %s110
    %p112 = scmp.eq.s32.totalorder %s18, 0
    %p113 = por %p111, %p112
    %s114 = ssub.s32 %s12, %s19
    %p115 = scmp.eq.s32.totalorder %s114, 0
    %s117 = sadd.s32 %s116, 1
    %s118 = scalar_select %p115, %s116, %s117
    %p121 = pneg %p115
    %p122 = scmp.eq.s32.totalorder %s12, 1
    %p123 = por %p121, %p122
    %p124 = scmp.ne.s32.totalorder %s116, %s119
    %p125 = scmp.eq.s32.totalorder %s12, 0
    %p126 = por %p124, %p125
    %p127 = scmp.ne.s32.totalorder %s116, %s119
    %p128 = scmp.eq.s32.totalorder %s17, 1
    %p129 = por %p127, %p128
    %p130 = scmp.ne.s32.totalorder %s119, %s120
    %p131 = scmp.eq.s32.totalorder %s17, 0
    %p132 = por %p130, %p131
    %p133 = scmp.ne.s32.totalorder %s119, %s120
    %p134 = scmp.eq.s32.totalorder %s18, 1
    %p135 = por %p133, %p134
    %p137 = scmp.ne.s32.totalorder %s120, %s136
    %p138 = scmp.eq.s32.totalorder %s18, 0
    %p139 = por %p137, %p138
    %s140 = ssub.s32 %s12, %s19
    %p141 = scmp.eq.s32.totalorder %s140, 0
    %s143 = sadd.s32 %s142, 1
    %s144 = scalar_select %p141, %s142, %s143
    %p147 = pneg %p141
    %p148 = scmp.eq.s32.totalorder %s12, 1
    %p149 = por %p147, %p148
    %p150 = scmp.ne.s32.totalorder %s142, %s145
    %p151 = scmp.eq.s32.totalorder %s12, 0
    %p152 = por %p150, %p151
    %p153 = scmp.ne.s32.totalorder %s142, %s145
    %p154 = scmp.eq.s32.totalorder %s17, 1
    %p155 = por %p153, %p154
    %p156 = scmp.ne.s32.totalorder %s145, %s146
    %p157 = scmp.eq.s32.totalorder %s17, 0
    %p158 = por %p156, %p157
    %p159 = scmp.ne.s32.totalorder %s145, %s146
    %p160 = scmp.eq.s32.totalorder %s18, 1
    %p161 = por %p159, %p160
    %p163 = scmp.ne.s32.totalorder %s146, %s162
    %p164 = scmp.eq.s32.totalorder %s18, 0
    %p165 = por %p163, %p164
    %p166 = scmp.le.s32.totalorder 1, %s12
    %p167 = scmp.lt.s32.totalorder %s12, 3
    %p168 = pnand %p166, %p167
    %p169 = pneg %p168
    // Predicated region
    $region9: #{resnet_bottleneck_block.6} parent=5 // pred_check
      _
    $region10: #{resnet_bottleneck_block.6} parent=5 // pred_check_branch
      %171 = sbr.rel (%p168) target = $region12
    $region11: #{resnet_bottleneck_block.6} parent=5 // pred_region
      %s172 = ssub.s32 %s12, 1
      // Predicated region
      $region13: #{resnet_bottleneck_block.6} parent=11 // pred_check
        %p173 = pneg %p59
      $region14: #{resnet_bottleneck_block.6} parent=11 // pred_check_branch
        %175 = sbr.rel (%p173) target = $region16
      $region15: #{resnet_bottleneck_block.6} parent=11 // pred_region
        _
      $region16: #{resnet_bottleneck_block.6} parent=11 // pred_fallthru
        _
      // Predicated region
      $region17: #{resnet_bottleneck_block.6} parent=11 // pred_check
        %p176 = pneg %p80
      $region18: #{resnet_bottleneck_block.6} parent=11 // pred_check_branch
        %178 = sbr.rel (%p176) target = $region20
      $region19: #{resnet_bottleneck_block.6} parent=11 // pred_region
        _
      $region20: #{resnet_bottleneck_block.6} parent=11 // pred_fallthru
        _
    $region12: #{resnet_bottleneck_block.6} parent=5 // pred_fallthru
      _
    %p179 = scmp.lt.s32.totalorder %s12, 2
    // Predicated region
    $region21: #{resnet_bottleneck_block.6} parent=5 // pred_check
      %p180 = pneg %p179
    $region22: #{resnet_bottleneck_block.6} parent=5 // pred_check_branch
      %182 = sbr.rel (%p180) target = $region24
    $region23: #{resnet_bottleneck_block.6} parent=5 // pred_region
      // Predicated region
      $region25: #{resnet_bottleneck_block.6} parent=23 // pred_check
        %p183 = pneg %p32
      $region26: #{resnet_bottleneck_block.6} parent=23 // pred_check_branch
        %185 = sbr.rel (%p183) target = $region28
      $region27: #{resnet_bottleneck_block.6} parent=23 // pred_region
        %s186 = smul.u32 32, %s12
        %p187 = scmp.lt.s32.totalorder %s186, 63
        %s188 = scalar_select %p187, %s186, 63
        %s189 = smul.addr %s188, 8
        %s190 = scalar_lea.vmem %s0, %s189
        %s191 = smul.u32 32, %s12
      $region28: #{resnet_bottleneck_block.6} parent=23 // pred_fallthru
        _
    $region24: #{resnet_bottleneck_block.6} parent=5 // pred_fallthru
      _
    %p192 = scmp.le.s32.totalorder 1, %s12
    %p193 = scmp.lt.s32.totalorder %s12, 3
    %p194 = pnand %p192, %p193
    %p195 = pneg %p194
    // Predicated region
    $region29: #{resnet_bottleneck_block.6} parent=5 // pred_check
      _
    $region30: #{resnet_bottleneck_block.6} parent=5 // pred_check_branch
      %197 = sbr.rel (%p194) target = $region32
    $region31: #{resnet_bottleneck_block.6} parent=5 // pred_region
      %s198 = ssub.s32 %s12, 1
      %s199 = smul.u32 32, %s17
      %p200 = scmp.lt.s32.totalorder %s199, 63
      %s201 = scalar_select %p200, %s199, 63
      %s202 = smul.addr %s201, 8
      %s203 = scalar_lea.vmem %s0, %s202
      %p204 = pneg %p38
      %p205 = pneg %p35
      %p206 = pneg %p59
      %p207 = pneg %p56
      %p208 = pneg %p80
      %p209 = pneg %p77
      %p210 = pneg %p106
      %p211 = pneg %p103
      %s212 = smul.u32 32, %s17
      %p213 = scmp.lt.s32.totalorder %s212, 63
      %s214 = scalar_select %p213, %s212, 63
      %s215 = smul.addr %s214, 8
      %s216 = scalar_lea.vmem %s3, %s215
      %p217 = pneg %p132
      %p218 = pneg %p129
      %p219 = scmp.lt.s32.totalorder %s17, 1
      %s220 = scalar_select %p219, %s17, 1
      %s221 = scalar_lea.vmem %s4, %s220
      %p222 = pneg %p158
      %p223 = pneg %p155
      %p224 = scmp.lt.s32.totalorder %s17, 1
      %s225 = scalar_select %p224, %s17, 1
      %s226 = scalar_lea.vmem %s5, %s225
      %s227 = smul.u32 32, %s17
      %p228 = scmp.lt.s32.totalorder %s227, 63
      %s229 = scalar_select %p228, %s227, 63
      %s230 = smul.addr %s229, 8
      %s231 = scalar_lea.vmem %s0, %s230
      %s232 = smul.u32 32, %s17
      %s233 = smul.u32 32, %s17
      %p234 = scmp.lt.s32.totalorder %s233, 63
      %s235 = scalar_select %p234, %s233, 63
      %s236 = smul.addr %s235, 8
      %s237 = scalar_lea.vmem %s3, %s236
      %s238 = smul.u32 32, %s17
      %p239 = scmp.lt.s32.totalorder %s17, 1
      %s240 = scalar_select %p239, %s17, 1
      %s241 = scalar_lea.vmem %s4, %s240
      %p242 = scmp.lt.s32.totalorder %s17, 1
      %s243 = scalar_select %p242, %s17, 1
      %s244 = scalar_lea.vmem %s5, %s243
      %v245 = vld [vmem:[%s231] sm:$0xff]
      %v246 = vld [vmem:[%s231 + $0x8] sm:$0xff]
      %v247 = vld [vmem:[%s231 + $0x10] sm:$0xff]
      %v248 = vld [vmem:[%s231 + $0x18] sm:$0xff]
      %v249 = vld [vmem:[%s231 + $0x20] sm:$0xff]
      %v250 = vld [vmem:[%s231 + $0x28] sm:$0xff]
      %v251 = vld [vmem:[%s231 + $0x30] sm:$0xff]
      %v252 = vld [vmem:[%s231 + $0x38] sm:$0xff]
      %v253 = vld [vmem:[%s231 + $0x40] sm:$0xff]
      %v254 = vld [vmem:[%s231 + $0x48] sm:$0xff]
      %v255 = vld [vmem:[%s231 + $0x50] sm:$0xff]
      %v256 = vld [vmem:[%s231 + $0x58] sm:$0xff]
      %v257 = vld [vmem:[%s231 + $0x60] sm:$0xff]
      %v258 = vld [vmem:[%s231 + $0x68] sm:$0xff]
      %v259 = vld [vmem:[%s231 + $0x70] sm:$0xff]
      %v260 = vld [vmem:[%s231 + $0x78] sm:$0xff]
      %v261 = vld [vmem:[%s231 + $0x80] sm:$0xff]
      %v262 = vld [vmem:[%s231 + $0x88] sm:$0xff]
      %v263 = vld [vmem:[%s231 + $0x90] sm:$0xff]
      %v264 = vld [vmem:[%s231 + $0x98] sm:$0xff]
      %v265 = vld [vmem:[%s231 + $0xa0] sm:$0xff]
      %v266 = vld [vmem:[%s231 + $0xa8] sm:$0xff]
      %v267 = vld [vmem:[%s231 + $0xb0] sm:$0xff]
      %v268 = vld [vmem:[%s231 + $0xb8] sm:$0xff]
      %v269 = vld [vmem:[%s231 + $0xc0] sm:$0xff]
      %v270 = vld [vmem:[%s231 + $0xc8] sm:$0xff]
      %v271 = vld [vmem:[%s231 + $0xd0] sm:$0xff]
      %v272 = vld [vmem:[%s231 + $0xd8] sm:$0xff]
      %v273 = vld [vmem:[%s231 + $0xe0] sm:$0xff]
      %v274 = vld [vmem:[%s231 + $0xe8] sm:$0xff]
      %v275 = vld [vmem:[%s231 + $0xf0] sm:$0xff]
      %v276 = vld [vmem:[%s231 + $0xf8] sm:$0xff]
      %v277 = vld [vmem:[%s1] sm:$0xff]
      %v278 = vld [vmem:[%s2] sm:$0x1]
      %v280 = vperm.slane %v278, 0
      %vm282 = vcmask 64512
      %v284 = vsel %vm282, %v245, 0
      %v287 = vsel %vm282, %v246, 0
      %v290 = vsel %vm282, %v247, 0
      %v293 = vsel %vm282, %v248, 0
      %v296 = vsel %vm282, %v249, 0
      %v299 = vsel %vm282, %v250, 0
      %v302 = vsel %vm282, %v251, 0
      %v305 = vsel %vm282, %v252, 0
      %v308 = vsel %vm282, %v253, 0
      %v311 = vsel %vm282, %v254, 0
      %v314 = vsel %vm282, %v255, 0
      %v317 = vsel %vm282, %v256, 0
      %v320 = vsel %vm282, %v257, 0
      %v323 = vsel %vm282, %v258, 0
      %v326 = vsel %vm282, %v259, 0
      %v329 = vsel %vm282, %v260, 0
      %v332 = vsel %vm282, %v261, 0
      %v335 = vsel %vm282, %v262, 0
      %v338 = vsel %vm282, %v263, 0
      %v341 = vsel %vm282, %v264, 0
      %v344 = vsel %vm282, %v265, 0
      %v347 = vsel %vm282, %v266, 0
      %v350 = vsel %vm282, %v267, 0
      %v353 = vsel %vm282, %v268, 0
      %v356 = vsel %vm282, %v269, 0
      %v359 = vsel %vm282, %v270, 0
      %v362 = vsel %vm282, %v271, 0
      %v365 = vsel %vm282, %v272, 0
      %v368 = vsel %vm282, %v273, 0
      %v371 = vsel %vm282, %v274, 0
      %v374 = vsel %vm282, %v275, 0
      %v377 = vsel %vm282, %v276, 0
      %379 = vmatpush.msra.mxu0 0.0
      %380 = vmatpush.msra.mxu0 0.0
      %381 = vmatpush.msra.mxu0 0.0
      %382 = vmatpush.msra.mxu0 0.0
      %383 = vmatpush.msra.mxu0 0.0
      %384 = vmatpush.msra.mxu0 0.0
      %385 = vmatpush.msra.mxu0 0.0
      %386 = vmatpush.msra.mxu0 0.0
      %387 = vmatpush.msra.mxu0 0.0
      %388 = vmatpush.msra.mxu0 0.0
      %389 = vmatpush.msra.mxu0 0.0
      %390 = vmatpush.msra.mxu0 0.0
      %391 = vmatpush.msra.mxu0 0.0
      %392 = vmatpush.msra.mxu0 0.0
      %393 = vmatpush.msra.mxu0 0.0
      %394 = vmatpush.msra.mxu0 %v277
      %395 = vmatmul.f32.gmra.mxu0 %v284
      %v396 = vpop.f32.mrf.mxu0
      %v397 = vadd.f32 %v280, %v396
      %398 = vmatmul.f32.gmra.mxu0 %v287
      %v399 = vpop.f32.mrf.mxu0
      %v400 = vadd.f32 %v280, %v399
      %401 = vmatmul.f32.gmra.mxu0 %v290
      %v402 = vpop.f32.mrf.mxu0
      %v403 = vadd.f32 %v280, %v402
      %404 = vmatmul.f32.gmra.mxu0 %v293
      %v405 = vpop.f32.mrf.mxu0
      %v406 = vadd.f32 %v280, %v405
      %407 = vmatmul.f32.gmra.mxu0 %v296
      %v408 = vpop.f32.mrf.mxu0
      %v409 = vadd.f32 %v280, %v408
      %410 = vmatmul.f32.gmra.mxu0 %v299
      %v411 = vpop.f32.mrf.mxu0
      %v412 = vadd.f32 %v280, %v411
      %413 = vmatmul.f32.gmra.mxu0 %v302
      %v414 = vpop.f32.mrf.mxu0
      %v415 = vadd.f32 %v280, %v414
      %416 = vmatmul.f32.gmra.mxu0 %v305
      %v417 = vpop.f32.mrf.mxu0
      %v418 = vadd.f32 %v280, %v417
      %419 = vmatmul.f32.gmra.mxu0 %v308
      %v420 = vpop.f32.mrf.mxu0
      %v421 = vadd.f32 %v280, %v420
      %422 = vmatmul.f32.gmra.mxu0 %v311
      %v423 = vpop.f32.mrf.mxu0
      %v424 = vadd.f32 %v280, %v423
      %425 = vmatmul.f32.gmra.mxu0 %v314
      %v426 = vpop.f32.mrf.mxu0
      %v427 = vadd.f32 %v280, %v426
      %428 = vmatmul.f32.gmra.mxu0 %v317
      %v429 = vpop.f32.mrf.mxu0
      %v430 = vadd.f32 %v280, %v429
      %431 = vmatmul.f32.gmra.mxu0 %v320
      %v432 = vpop.f32.mrf.mxu0
      %v433 = vadd.f32 %v280, %v432
      %434 = vmatmul.f32.gmra.mxu0 %v323
      %v435 = vpop.f32.mrf.mxu0
      %v436 = vadd.f32 %v280, %v435
      %437 = vmatmul.f32.gmra.mxu0 %v326
      %v438 = vpop.f32.mrf.mxu0
      %v439 = vadd.f32 %v280, %v438
      %440 = vmatmul.f32.gmra.mxu0 %v329
      %v441 = vpop.f32.mrf.mxu0
      %v442 = vadd.f32 %v280, %v441
      %443 = vmatmul.f32.gmra.mxu0 %v332
      %v444 = vpop.f32.mrf.mxu0
      %v445 = vadd.f32 %v280, %v444
      %446 = vmatmul.f32.gmra.mxu0 %v335
      %v447 = vpop.f32.mrf.mxu0
      %v448 = vadd.f32 %v280, %v447
      %449 = vmatmul.f32.gmra.mxu0 %v338
      %v450 = vpop.f32.mrf.mxu0
      %v451 = vadd.f32 %v280, %v450
      %452 = vmatmul.f32.gmra.mxu0 %v341
      %v453 = vpop.f32.mrf.mxu0
      %v454 = vadd.f32 %v280, %v453
      %455 = vmatmul.f32.gmra.mxu0 %v344
      %v456 = vpop.f32.mrf.mxu0
      %v457 = vadd.f32 %v280, %v456
      %458 = vmatmul.f32.gmra.mxu0 %v347
      %v459 = vpop.f32.mrf.mxu0
      %v460 = vadd.f32 %v280, %v459
      %461 = vmatmul.f32.gmra.mxu0 %v350
      %v462 = vpop.f32.mrf.mxu0
      %v463 = vadd.f32 %v280, %v462
      %464 = vmatmul.f32.gmra.mxu0 %v353
      %v465 = vpop.f32.mrf.mxu0
      %v466 = vadd.f32 %v280, %v465
      %467 = vmatmul.f32.gmra.mxu0 %v356
      %v468 = vpop.f32.mrf.mxu0
      %v469 = vadd.f32 %v280, %v468
      %470 = vmatmul.f32.gmra.mxu0 %v359
      %v471 = vpop.f32.mrf.mxu0
      %v472 = vadd.f32 %v280, %v471
      %473 = vmatmul.f32.gmra.mxu0 %v362
      %v474 = vpop.f32.mrf.mxu0
      %v475 = vadd.f32 %v280, %v474
      %476 = vmatmul.f32.gmra.mxu0 %v365
      %v477 = vpop.f32.mrf.mxu0
      %v478 = vadd.f32 %v280, %v477
      %479 = vmatmul.f32.gmra.mxu0 %v368
      %v480 = vpop.f32.mrf.mxu0
      %v481 = vadd.f32 %v280, %v480
      %482 = vmatmul.f32.gmra.mxu0 %v371
      %v483 = vpop.f32.mrf.mxu0
      %v484 = vadd.f32 %v280, %v483
      %485 = vmatmul.f32.gmra.mxu0 %v374
      %v486 = vpop.f32.mrf.mxu0
      %v487 = vadd.f32 %v280, %v486
      %488 = vmatmul.f32.gmra.mxu0 %v377
      %v489 = vpop.f32.mrf.mxu0
      %v490 = vadd.f32 %v280, %v489
      %491 = vdwg.mxu0
      %vm492 = vcmask 261120
      %493 = vst.msk [vmem:[%s237] sm:$0xff] %vm492, %v397
      %494 = vst.msk [vmem:[%s237 + $0x8] sm:$0xff] %vm492, %v400
      %495 = vst.msk [vmem:[%s237 + $0x10] sm:$0xff] %vm492, %v403
      %496 = vst.msk [vmem:[%s237 + $0x18] sm:$0xff] %vm492, %v406
      %497 = vst.msk [vmem:[%s237 + $0x20] sm:$0xff] %vm492, %v409
      %498 = vst.msk [vmem:[%s237 + $0x28] sm:$0xff] %vm492, %v412
      %499 = vst.msk [vmem:[%s237 + $0x30] sm:$0xff] %vm492, %v415
      %500 = vst.msk [vmem:[%s237 + $0x38] sm:$0xff] %vm492, %v418
      %501 = vst.msk [vmem:[%s237 + $0x40] sm:$0xff] %vm492, %v421
      %502 = vst.msk [vmem:[%s237 + $0x48] sm:$0xff] %vm492, %v424
      %503 = vst.msk [vmem:[%s237 + $0x50] sm:$0xff] %vm492, %v427
      %504 = vst.msk [vmem:[%s237 + $0x58] sm:$0xff] %vm492, %v430
      %505 = vst.msk [vmem:[%s237 + $0x60] sm:$0xff] %vm492, %v433
      %506 = vst.msk [vmem:[%s237 + $0x68] sm:$0xff] %vm492, %v436
      %507 = vst.msk [vmem:[%s237 + $0x70] sm:$0xff] %vm492, %v439
      %508 = vst.msk [vmem:[%s237 + $0x78] sm:$0xff] %vm492, %v442
      %509 = vst.msk [vmem:[%s237 + $0x80] sm:$0xff] %vm492, %v445
      %510 = vst.msk [vmem:[%s237 + $0x88] sm:$0xff] %vm492, %v448
      %511 = vst.msk [vmem:[%s237 + $0x90] sm:$0xff] %vm492, %v451
      %512 = vst.msk [vmem:[%s237 + $0x98] sm:$0xff] %vm492, %v454
      %513 = vst.msk [vmem:[%s237 + $0xa0] sm:$0xff] %vm492, %v457
      %514 = vst.msk [vmem:[%s237 + $0xa8] sm:$0xff] %vm492, %v460
      %515 = vst.msk [vmem:[%s237 + $0xb0] sm:$0xff] %vm492, %v463
      %516 = vst.msk [vmem:[%s237 + $0xb8] sm:$0xff] %vm492, %v466
      %517 = vst.msk [vmem:[%s237 + $0xc0] sm:$0xff] %vm492, %v469
      %518 = vst.msk [vmem:[%s237 + $0xc8] sm:$0xff] %vm492, %v472
      %519 = vst.msk [vmem:[%s237 + $0xd0] sm:$0xff] %vm492, %v475
      %520 = vst.msk [vmem:[%s237 + $0xd8] sm:$0xff] %vm492, %v478
      %521 = vst.msk [vmem:[%s237 + $0xe0] sm:$0xff] %vm492, %v481
      %522 = vst.msk [vmem:[%s237 + $0xe8] sm:$0xff] %vm492, %v484
      %523 = vst.msk [vmem:[%s237 + $0xf0] sm:$0xff] %vm492, %v487
      %524 = vst.msk [vmem:[%s237 + $0xf8] sm:$0xff] %vm492, %v490
      %v525 = vsel %vm492, %v397, 0.0
      %v526 = vsel %vm492, %v400, 0.0
      %v527 = vadd.f32 %v525, %v526
      %v528 = vsel %vm492, %v403, 0.0
      %v529 = vadd.f32 %v527, %v528
      %v530 = vsel %vm492, %v406, 0.0
      %v531 = vadd.f32 %v529, %v530
      %v532 = vsel %vm492, %v409, 0.0
      %v533 = vadd.f32 %v531, %v532
      %v534 = vsel %vm492, %v412, 0.0
      %v535 = vadd.f32 %v533, %v534
      %v536 = vsel %vm492, %v415, 0.0
      %v537 = vadd.f32 %v535, %v536
      %v538 = vsel %vm492, %v418, 0.0
      %v539 = vadd.f32 %v537, %v538
      %v540 = vsel %vm492, %v421, 0.0
      %v541 = vadd.f32 %v539, %v540
      %v542 = vsel %vm492, %v424, 0.0
      %v543 = vadd.f32 %v541, %v542
      %v544 = vsel %vm492, %v427, 0.0
      %v545 = vadd.f32 %v543, %v544
      %v546 = vsel %vm492, %v430, 0.0
      %v547 = vadd.f32 %v545, %v546
      %v548 = vsel %vm492, %v433, 0.0
      %v549 = vadd.f32 %v547, %v548
      %v550 = vsel %vm492, %v436, 0.0
      %v551 = vadd.f32 %v549, %v550
      %v552 = vsel %vm492, %v439, 0.0
      %v553 = vadd.f32 %v551, %v552
      %v554 = vsel %vm492, %v442, 0.0
      %v555 = vadd.f32 %v553, %v554
      %v556 = vsel %vm492, %v445, 0.0
      %v557 = vadd.f32 %v555, %v556
      %v558 = vsel %vm492, %v448, 0.0
      %v559 = vadd.f32 %v557, %v558
      %v560 = vsel %vm492, %v451, 0.0
      %v561 = vadd.f32 %v559, %v560
      %v562 = vsel %vm492, %v454, 0.0
      %v563 = vadd.f32 %v561, %v562
      %v564 = vsel %vm492, %v457, 0.0
      %v565 = vadd.f32 %v563, %v564
      %v566 = vsel %vm492, %v460, 0.0
      %v567 = vadd.f32 %v565, %v566
      %v568 = vsel %vm492, %v463, 0.0
      %v569 = vadd.f32 %v567, %v568
      %v570 = vsel %vm492, %v466, 0.0
      %v571 = vadd.f32 %v569, %v570
      %v572 = vsel %vm492, %v469, 0.0
      %v573 = vadd.f32 %v571, %v572
      %v574 = vsel %vm492, %v472, 0.0
      %v575 = vadd.f32 %v573, %v574
      %v576 = vsel %vm492, %v475, 0.0
      %v577 = vadd.f32 %v575, %v576
      %v578 = vsel %vm492, %v478, 0.0
      %v579 = vadd.f32 %v577, %v578
      %v580 = vsel %vm492, %v481, 0.0
      %v581 = vadd.f32 %v579, %v580
      %v582 = vsel %vm492, %v484, 0.0
      %v583 = vadd.f32 %v581, %v582
      %v584 = vsel %vm492, %v487, 0.0
      %v585 = vadd.f32 %v583, %v584
      %v586 = vsel %vm492, %v490, 0.0
      %v587 = vadd.f32 %v585, %v586
      %v588 = vrot.slane %v587, 4
      %v589 = vadd.f32 %v587, %v588
      %v590 = vrot.slane %v589, 2
      %v591 = vadd.f32 %v589, %v590
      %v592 = vrot.slane %v591, 1
      %v593 = vadd.f32 %v591, %v592
      %vm594 = vcmask 253952
      %595 = vst.msk [vmem:[%s241] sm:$0x1] %vm594, %v593
      %v596 = vmul.f32 %v397, %v397
      %v597 = vmul.f32 %v400, %v400
      %v598 = vmul.f32 %v403, %v403
      %v599 = vmul.f32 %v406, %v406
      %v600 = vmul.f32 %v409, %v409
      %v601 = vmul.f32 %v412, %v412
      %v602 = vmul.f32 %v415, %v415
      %v603 = vmul.f32 %v418, %v418
      %v604 = vmul.f32 %v421, %v421
      %v605 = vmul.f32 %v424, %v424
      %v606 = vmul.f32 %v427, %v427
      %v607 = vmul.f32 %v430, %v430
      %v608 = vmul.f32 %v433, %v433
      %v609 = vmul.f32 %v436, %v436
      %v610 = vmul.f32 %v439, %v439
      %v611 = vmul.f32 %v442, %v442
      %v612 = vmul.f32 %v445, %v445
      %v613 = vmul.f32 %v448, %v448
      %v614 = vmul.f32 %v451, %v451
      %v615 = vmul.f32 %v454, %v454
      %v616 = vmul.f32 %v457, %v457
      %v617 = vmul.f32 %v460, %v460
      %v618 = vmul.f32 %v463, %v463
      %v619 = vmul.f32 %v466, %v466
      %v620 = vmul.f32 %v469, %v469
      %v621 = vmul.f32 %v472, %v472
      %v622 = vmul.f32 %v475, %v475
      %v623 = vmul.f32 %v478, %v478
      %v624 = vmul.f32 %v481, %v481
      %v625 = vmul.f32 %v484, %v484
      %v626 = vmul.f32 %v487, %v487
      %v627 = vmul.f32 %v490, %v490
      %v628 = vsel %vm492, %v596, 0.0
      %v629 = vsel %vm492, %v597, 0.0
      %v630 = vadd.f32 %v628, %v629
      %v631 = vsel %vm492, %v598, 0.0
      %v632 = vadd.f32 %v630, %v631
      %v633 = vsel %vm492, %v599, 0.0
      %v634 = vadd.f32 %v632, %v633
      %v635 = vsel %vm492, %v600, 0.0
      %v636 = vadd.f32 %v634, %v635
      %v637 = vsel %vm492, %v601, 0.0
      %v638 = vadd.f32 %v636, %v637
      %v639 = vsel %vm492, %v602, 0.0
      %v640 = vadd.f32 %v638, %v639
      %v641 = vsel %vm492, %v603, 0.0
      %v642 = vadd.f32 %v640, %v641
      %v643 = vsel %vm492, %v604, 0.0
      %v644 = vadd.f32 %v642, %v643
      %v645 = vsel %vm492, %v605, 0.0
      %v646 = vadd.f32 %v644, %v645
      %v647 = vsel %vm492, %v606, 0.0
      %v648 = vadd.f32 %v646, %v647
      %v649 = vsel %vm492, %v607, 0.0
      %v650 = vadd.f32 %v648, %v649
      %v651 = vsel %vm492, %v608, 0.0
      %v652 = vadd.f32 %v650, %v651
      %v653 = vsel %vm492, %v609, 0.0
      %v654 = vadd.f32 %v652, %v653
      %v655 = vsel %vm492, %v610, 0.0
      %v656 = vadd.f32 %v654, %v655
      %v657 = vsel %vm492, %v611, 0.0
      %v658 = vadd.f32 %v656, %v657
      %v659 = vsel %vm492, %v612, 0.0
      %v660 = vadd.f32 %v658, %v659
      %v661 = vsel %vm492, %v613, 0.0
      %v662 = vadd.f32 %v660, %v661
      %v663 = vsel %vm492, %v614, 0.0
      %v664 = vadd.f32 %v662, %v663
      %v665 = vsel %vm492, %v615, 0.0
      %v666 = vadd.f32 %v664, %v665
      %v667 = vsel %vm492, %v616, 0.0
      %v668 = vadd.f32 %v666, %v667
      %v669 = vsel %vm492, %v617, 0.0
      %v670 = vadd.f32 %v668, %v669
      %v671 = vsel %vm492, %v618, 0.0
      %v672 = vadd.f32 %v670, %v671
      %v673 = vsel %vm492, %v619, 0.0
      %v674 = vadd.f32 %v672, %v673
      %v675 = vsel %vm492, %v620, 0.0
      %v676 = vadd.f32 %v674, %v675
      %v677 = vsel %vm492, %v621, 0.0
      %v678 = vadd.f32 %v676, %v677
      %v679 = vsel %vm492, %v622, 0.0
      %v680 = vadd.f32 %v678, %v679
      %v681 = vsel %vm492, %v623, 0.0
      %v682 = vadd.f32 %v680, %v681
      %v683 = vsel %vm492, %v624, 0.0
      %v684 = vadd.f32 %v682, %v683
      %v685 = vsel %vm492, %v625, 0.0
      %v686 = vadd.f32 %v684, %v685
      %v687 = vsel %vm492, %v626, 0.0
      %v688 = vadd.f32 %v686, %v687
      %v689 = vsel %vm492, %v627, 0.0
      %v690 = vadd.f32 %v688, %v689
      %v691 = vrot.slane %v690, 4
      %v692 = vadd.f32 %v690, %v691
      %v693 = vrot.slane %v692, 2
      %v694 = vadd.f32 %v692, %v693
      %v695 = vrot.slane %v694, 1
      %v696 = vadd.f32 %v694, %v695
      %697 = vst.msk [vmem:[%s244] sm:$0x1] %vm594, %v696
      %s698 = smul.u32 32, %s17
      %p699 = scmp.lt.s32.totalorder %s698, 63
      %s700 = scalar_select %p699, %s698, 63
      %s701 = smul.addr %s700, 8
      %s702 = scalar_lea.vmem %s3, %s701
      %p703 = scmp.lt.s32.totalorder %s17, 1
      %s704 = scalar_select %p703, %s17, 1
      %s705 = scalar_lea.vmem %s4, %s704
      %p706 = scmp.lt.s32.totalorder %s17, 1
      %s707 = scalar_select %p706, %s17, 1
      %s708 = scalar_lea.vmem %s5, %s707
      // Predicated region
      $region33: #{resnet_bottleneck_block.6} parent=31 // pred_check
        %p709 = pneg %p103
      $region34: #{resnet_bottleneck_block.6} parent=31 // pred_check_branch
        %711 = sbr.rel (%p709) target = $region36
      $region35: #{resnet_bottleneck_block.6} parent=31 // pred_region
        %s712 = smul.u32 32, %s17
      $region36: #{resnet_bottleneck_block.6} parent=31 // pred_fallthru
        _
      // Predicated region
      $region37: #{resnet_bottleneck_block.6} parent=31 // pred_check
        %p713 = pneg %p129
      $region38: #{resnet_bottleneck_block.6} parent=31 // pred_check_branch
        %715 = sbr.rel (%p713) target = $region40
      $region39: #{resnet_bottleneck_block.6} parent=31 // pred_region
        _
      $region40: #{resnet_bottleneck_block.6} parent=31 // pred_fallthru
        _
      // Predicated region
      $region41: #{resnet_bottleneck_block.6} parent=31 // pred_check
        %p716 = pneg %p155
      $region42: #{resnet_bottleneck_block.6} parent=31 // pred_check_branch
        %718 = sbr.rel (%p716) target = $region44
      $region43: #{resnet_bottleneck_block.6} parent=31 // pred_region
        _
      $region44: #{resnet_bottleneck_block.6} parent=31 // pred_fallthru
        _
    $region32: #{resnet_bottleneck_block.6} parent=5 // pred_fallthru
      _
    %p719 = scmp.le.s32.totalorder 2, %s12
    // Predicated region
    $region45: #{resnet_bottleneck_block.6} parent=5 // pred_check
      %p720 = pneg %p719
    $region46: #{resnet_bottleneck_block.6} parent=5 // pred_check_branch
      %722 = sbr.rel (%p720) target = $region48
    $region47: #{resnet_bottleneck_block.6} parent=5 // pred_region
      %s723 = ssub.s32 %s12, 2
      // Predicated region
      $region49: #{resnet_bottleneck_block.6} parent=47 // pred_check
        %p724 = pneg %p109
      $region50: #{resnet_bottleneck_block.6} parent=47 // pred_check_branch
        %726 = sbr.rel (%p724) target = $region52
      $region51: #{resnet_bottleneck_block.6} parent=47 // pred_region
        %s727 = smul.u32 32, %s18
        %p728 = scmp.lt.s32.totalorder %s727, 63
        %s729 = scalar_select %p728, %s727, 63
        %s730 = smul.addr %s729, 8
        %s731 = scalar_lea.vmem %s3, %s730
      $region52: #{resnet_bottleneck_block.6} parent=47 // pred_fallthru
        _
      // Predicated region
      $region53: #{resnet_bottleneck_block.6} parent=47 // pred_check
        %p732 = pneg %p135
      $region54: #{resnet_bottleneck_block.6} parent=47 // pred_check_branch
        %734 = sbr.rel (%p732) target = $region56
      $region55: #{resnet_bottleneck_block.6} parent=47 // pred_region
        %p735 = scmp.lt.s32.totalorder %s18, 1
        %s736 = scalar_select %p735, %s18, 1
        %s737 = scalar_lea.vmem %s4, %s736
      $region56: #{resnet_bottleneck_block.6} parent=47 // pred_fallthru
        _
      // Predicated region
      $region57: #{resnet_bottleneck_block.6} parent=47 // pred_check
        %p738 = pneg %p161
      $region58: #{resnet_bottleneck_block.6} parent=47 // pred_check_branch
        %740 = sbr.rel (%p738) target = $region60
      $region59: #{resnet_bottleneck_block.6} parent=47 // pred_region
        %p741 = scmp.lt.s32.totalorder %s18, 1
        %s742 = scalar_select %p741, %s18, 1
        %s743 = scalar_lea.vmem %s5, %s742
      $region60: #{resnet_bottleneck_block.6} parent=47 // pred_fallthru
        _
    $region48: #{resnet_bottleneck_block.6} parent=5 // pred_fallthru
      _
  $region6: #{resnet_bottleneck_block.6} parent=0 // loop_footer
    %s16 = sadd.s32 1, %s12
  $region7: #{resnet_bottleneck_block.6} parent=0 // loop_footer_branch
    %11 = sbr.rel target = $region3
  $region8: #{resnet_bottleneck_block.6} parent=0 // loop_exit
    _

// kernel: resnet_bottleneck_block.5
$region0: #{resnet_bottleneck_block.5}
  #allocation0 [shape = 'u32[]', space=smem, size = 0x4, offset = 0x4, fixed_abs, tag = 'smem constant byte address 0x4 - core index']
  #allocation1 [shape = 'u32[72,128]{1,0:T(1,128)}', space=vmem, size = 0x9000, scoped, tag = 'internal scratch']
  #allocation2 [shape = 'f32[18,18,8]{2,1,0:T(8,128)}', space=vmem, size = 0x36000, scoped, tag = 'scratch operand']
  %s0 = inlined_call_operand.vmem [shape: f32[2,16,16,8], index: 0, kind: input, shape index: {}]
  %s1 = inlined_call_operand.vmem [shape: f32[1,1,8], index: 1, kind: input, shape index: {}]
  %s2 = inlined_call_operand.vmem [shape: f32[1,1,8], index: 2, kind: input, shape index: {}]
  %s3 = inlined_call_operand.vmem [shape: f32[3,3,8,8], index: 3, kind: input, shape index: {}]
  %s4 = inlined_call_operand.vmem [shape: f32[1,8], index: 4, kind: input, shape index: {}]
  %s5 = inlined_call_operand.vmem [shape: f32[2,16,16,8], index: 5, kind: output, shape index: {0}]
  %s6 = inlined_call_operand.vmem [shape: f32[2,1,8], index: 6, kind: output, shape index: {1}]
  %s7 = inlined_call_operand.vmem [shape: f32[2,1,8], index: 7, kind: output, shape index: {2}]
  %8 = xla_tuple %s5, %s6, %s7
  %s9 = sld [smem:[#allocation0]]
  $region69: #{resnet_bottleneck_block.5} parent=0
    _
  %s11 = ssub.s32 1, %s9
  %s12 = scalar_select 0, %s11, %s9
  loop: start=0, step=1, limit=4
  $region2: #{resnet_bottleneck_block.5} parent=0 // loop_pre_header
    _
  $region3: #{resnet_bottleneck_block.5} parent=0 // loop_header
    %s14 = sphi 0, %s18
    %p15 = scmp.ge.s32.totalorder %s14, 4
    %s24 = sphi 0, %s26
    %s27 = sphi 0, %s24
    %s28 = sphi 0, %s27
    %s44 = sphi 0, %s28
    %s48 = sphi 0, %s48
    %s50 = sphi 0, %s48
    %s51 = sphi 0, %s50
    %s65 = sphi 0, %s51
    %s69 = sphi 0, %s69
    %s71 = sphi 0, %s69
    %s72 = sphi 0, %s71
    %s86 = sphi 0, %s72
    %s90 = sphi 0, %s90
    %s92 = sphi 0, %s90
    %s93 = sphi 0, %s92
    %s107 = sphi 0, %s93
    %s111 = sphi 0, %s111
    %s113 = sphi 0, %s111
    %s114 = sphi 0, %s113
    %s128 = sphi 0, %s114
    %s134 = sphi 0, %s136
    %s137 = sphi 0, %s134
    %s138 = sphi 0, %s137
    %s154 = sphi 0, %s138
    %s160 = sphi 0, %s162
    %s163 = sphi 0, %s160
    %s164 = sphi 0, %s163
    %s180 = sphi 0, %s164
    %s186 = sphi 0, %s188
    %s189 = sphi 0, %s186
    %s190 = sphi 0, %s189
    %s206 = sphi 0, %s190
  $region4: #{resnet_bottleneck_block.5} parent=0 // loop_header_branch
    %17 = sbr.rel (%p15) target = $region8
  $region5: #{resnet_bottleneck_block.5} parent=0 // loop_body
    %s19 = ssub.s32 %s14, 1
    %s20 = ssub.s32 %s14, 2
    %s21 = sadd.s32 %s14, 1
    %s22 = ssub.s32 %s14, %s21
    %p23 = scmp.eq.s32.totalorder %s22, 0
    %s25 = sadd.s32 %s24, 1
    %s26 = scalar_select %p23, %s24, %s25
    %p29 = pneg %p23
    %p30 = scmp.eq.s32.totalorder %s14, 1
    %p31 = por %p29, %p30
    %p32 = scmp.ne.s32.totalorder %s24, %s27
    %p33 = scmp.eq.s32.totalorder %s14, 0
    %p34 = por %p32, %p33
    %p35 = scmp.ne.s32.totalorder %s24, %s27
    %p36 = scmp.eq.s32.totalorder %s19, 1
    %p37 = por %p35, %p36
    %p38 = scmp.ne.s32.totalorder %s27, %s28
    %p39 = scmp.eq.s32.totalorder %s19, 0
    %p40 = por %p38, %p39
    %p41 = scmp.ne.s32.totalorder %s27, %s28
    %p42 = scmp.eq.s32.totalorder %s20, 1
    %p43 = por %p41, %p42
    %p45 = scmp.ne.s32.totalorder %s28, %s44
    %p46 = scmp.eq.s32.totalorder %s20, 0
    %p47 = por %p45, %p46
    %s49 = sadd.s32 %s48, 1
    %p52 = scmp.eq.s32.totalorder %s14, 1
    %p53 = scmp.ne.s32.totalorder %s48, %s50
    %p54 = scmp.eq.s32.totalorder %s14, 0
    %p55 = por %p53, %p54
    %p56 = scmp.ne.s32.totalorder %s48, %s50
    %p57 = scmp.eq.s32.totalorder %s19, 1
    %p58 = por %p56, %p57
    %p59 = scmp.ne.s32.totalorder %s50, %s51
    %p60 = scmp.eq.s32.totalorder %s19, 0
    %p61 = por %p59, %p60
    %p62 = scmp.ne.s32.totalorder %s50, %s51
    %p63 = scmp.eq.s32.totalorder %s20, 1
    %p64 = por %p62, %p63
    %p66 = scmp.ne.s32.totalorder %s51, %s65
    %p67 = scmp.eq.s32.totalorder %s20, 0
    %p68 = por %p66, %p67
    %s70 = sadd.s32 %s69, 1
    %p73 = scmp.eq.s32.totalorder %s14, 1
    %p74 = scmp.ne.s32.totalorder %s69, %s71
    %p75 = scmp.eq.s32.totalorder %s14, 0
    %p76 = por %p74, %p75
    %p77 = scmp.ne.s32.totalorder %s69, %s71
    %p78 = scmp.eq.s32.totalorder %s19, 1
    %p79 = por %p77, %p78
    %p80 = scmp.ne.s32.totalorder %s71, %s72
    %p81 = scmp.eq.s32.totalorder %s19, 0
    %p82 = por %p80, %p81
    %p83 = scmp.ne.s32.totalorder %s71, %s72
    %p84 = scmp.eq.s32.totalorder %s20, 1
    %p85 = por %p83, %p84
    %p87 = scmp.ne.s32.totalorder %s72, %s86
    %p88 = scmp.eq.s32.totalorder %s20, 0
    %p89 = por %p87, %p88
    %s91 = sadd.s32 %s90, 1
    %p94 = scmp.eq.s32.totalorder %s14, 1
    %p95 = scmp.ne.s32.totalorder %s90, %s92
    %p96 = scmp.eq.s32.totalorder %s14, 0
    %p97 = por %p95, %p96
    %p98 = scmp.ne.s32.totalorder %s90, %s92
    %p99 = scmp.eq.s32.totalorder %s19, 1
    %p100 = por %p98, %p99
    %p101 = scmp.ne.s32.totalorder %s92, %s93
    %p102 = scmp.eq.s32.totalorder %s19, 0
    %p103 = por %p101, %p102
    %p104 = scmp.ne.s32.totalorder %s92, %s93
    %p105 = scmp.eq.s32.totalorder %s20, 1
    %p106 = por %p104, %p105
    %p108 = scmp.ne.s32.totalorder %s93, %s107
    %p109 = scmp.eq.s32.totalorder %s20, 0
    %p110 = por %p108, %p109
    %s112 = sadd.s32 %s111, 1
    %p115 = scmp.eq.s32.totalorder %s14, 1
    %p116 = scmp.ne.s32.totalorder %s111, %s113
    %p117 = scmp.eq.s32.totalorder %s14, 0
    %p118 = por %p116, %p117
    %p119 = scmp.ne.s32.totalorder %s111, %s113
    %p120 = scmp.eq.s32.totalorder %s19, 1
    %p121 = por %p119, %p120
    %p122 = scmp.ne.s32.totalorder %s113, %s114
    %p123 = scmp.eq.s32.totalorder %s19, 0
    %p124 = por %p122, %p123
    %p125 = scmp.ne.s32.totalorder %s113, %s114
    %p126 = scmp.eq.s32.totalorder %s20, 1
    %p127 = por %p125, %p126
    %p129 = scmp.ne.s32.totalorder %s114, %s128
    %p130 = scmp.eq.s32.totalorder %s20, 0
    %p131 = por %p129, %p130
    %s132 = ssub.s32 %s14, %s21
    %p133 = scmp.eq.s32.totalorder %s132, 0
    %s135 = sadd.s32 %s134, 1
    %s136 = scalar_select %p133, %s134, %s135
    %p139 = pneg %p133
    %p140 = scmp.eq.s32.totalorder %s14, 1
    %p141 = por %p139, %p140
    %p142 = scmp.ne.s32.totalorder %s134, %s137
    %p143 = scmp.eq.s32.totalorder %s14, 0
    %p144 = por %p142, %p143
    %p145 = scmp.ne.s32.totalorder %s134, %s137
    %p146 = scmp.eq.s32.totalorder %s19, 1
    %p147 = por %p145, %p146
    %p148 = scmp.ne.s32.totalorder %s137, %s138
    %p149 = scmp.eq.s32.totalorder %s19, 0
    %p150 = por %p148, %p149
    %p151 = scmp.ne.s32.totalorder %s137, %s138
    %p152 = scmp.eq.s32.totalorder %s20, 1
    %p153 = por %p151, %p152
    %p155 = scmp.ne.s32.totalorder %s138, %s154
    %p156 = scmp.eq.s32.totalorder %s20, 0
    %p157 = por %p155, %p156
    %s158 = ssub.s32 %s14, %s21
    %p159 = scmp.eq.s32.totalorder %s158, 0
    %s161 = sadd.s32 %s160, 1
    %s162 = scalar_select %p159, %s160, %s161
    %p165 = pneg %p159
    %p166 = scmp.eq.s32.totalorder %s14, 1
    %p167 = por %p165, %p166
    %p168 = scmp.ne.s32.totalorder %s160, %s163
    %p169 = scmp.eq.s32.totalorder %s14, 0
    %p170 = por %p168, %p169
    %p171 = scmp.ne.s32.totalorder %s160, %s163
    %p172 = scmp.eq.s32.totalorder %s19, 1
    %p173 = por %p171, %p172
    %p174 = scmp.ne.s32.totalorder %s163, %s164
    %p175 = scmp.eq.s32.totalorder %s19, 0
    %p176 = por %p174, %p175
    %p177 = scmp.ne.s32.totalorder %s163, %s164
    %p178 = scmp.eq.s32.totalorder %s20, 1
    %p179 = por %p177, %p178
    %p181 = scmp.ne.s32.totalorder %s164, %s180
    %p182 = scmp.eq.s32.totalorder %s20, 0
    %p183 = por %p181, %p182
    %s184 = ssub.s32 %s14, %s21
    %p185 = scmp.eq.s32.totalorder %s184, 0
    %s187 = sadd.s32 %s186, 1
    %s188 = scalar_select %p185, %s186, %s187
    %p191 = pneg %p185
    %p192 = scmp.eq.s32.totalorder %s14, 1
    %p193 = por %p191, %p192
    %p194 = scmp.ne.s32.totalorder %s186, %s189
    %p195 = scmp.eq.s32.totalorder %s14, 0
    %p196 = por %p194, %p195
    %p197 = scmp.ne.s32.totalorder %s186, %s189
    %p198 = scmp.eq.s32.totalorder %s19, 1
    %p199 = por %p197, %p198
    %p200 = scmp.ne.s32.totalorder %s189, %s190
    %p201 = scmp.eq.s32.totalorder %s19, 0
    %p202 = por %p200, %p201
    %p203 = scmp.ne.s32.totalorder %s189, %s190
    %p204 = scmp.eq.s32.totalorder %s20, 1
    %p205 = por %p203, %p204
    %p207 = scmp.ne.s32.totalorder %s190, %s206
    %p208 = scmp.eq.s32.totalorder %s20, 0
    %p209 = por %p207, %p208
    %p210 = scmp.le.s32.totalorder 1, %s14
    %p211 = scmp.lt.s32.totalorder %s14, 3
    %p212 = pnand %p210, %p211
    %p213 = pneg %p212
    // Predicated region
    $region9: #{resnet_bottleneck_block.5} parent=5 // pred_check
      _
    $region10: #{resnet_bottleneck_block.5} parent=5 // pred_check_branch
      %215 = sbr.rel (%p212) target = $region12
    $region11: #{resnet_bottleneck_block.5} parent=5 // pred_region
      %s216 = ssub.s32 %s14, 1
      // Predicated region
      $region13: #{resnet_bottleneck_block.5} parent=11 // pred_check
        %p217 = pneg %p61
      $region14: #{resnet_bottleneck_block.5} parent=11 // pred_check_branch
        %219 = sbr.rel (%p217) target = $region16
      $region15: #{resnet_bottleneck_block.5} parent=11 // pred_region
        _
      $region16: #{resnet_bottleneck_block.5} parent=11 // pred_fallthru
        _
      // Predicated region
      $region17: #{resnet_bottleneck_block.5} parent=11 // pred_check
        %p220 = pneg %p82
      $region18: #{resnet_bottleneck_block.5} parent=11 // pred_check_branch
        %222 = sbr.rel (%p220) target = $region20
      $region19: #{resnet_bottleneck_block.5} parent=11 // pred_region
        _
      $region20: #{resnet_bottleneck_block.5} parent=11 // pred_fallthru
        _
      // Predicated region
      $region21: #{resnet_bottleneck_block.5} parent=11 // pred_check
        %p223 = pneg %p103
      $region22: #{resnet_bottleneck_block.5} parent=11 // pred_check_branch
        %225 = sbr.rel (%p223) target = $region24
      $region23: #{resnet_bottleneck_block.5} parent=11 // pred_region
        _
      $region24: #{resnet_bottleneck_block.5} parent=11 // pred_fallthru
        _
      // Predicated region
      $region25: #{resnet_bottleneck_block.5} parent=11 // pred_check
        %p226 = pneg %p124
      $region26: #{resnet_bottleneck_block.5} parent=11 // pred_check_branch
        %228 = sbr.rel (%p226) target = $region28
      $region27: #{resnet_bottleneck_block.5} parent=11 // pred_region
        _
      $region28: #{resnet_bottleneck_block.5} parent=11 // pred_fallthru
        _
    $region12: #{resnet_bottleneck_block.5} parent=5 // pred_fallthru
      _
    %p229 = scmp.lt.s32.totalorder %s14, 2
    // Predicated region
    $region29: #{resnet_bottleneck_block.5} parent=5 // pred_check
      %p230 = pneg %p229
    $region30: #{resnet_bottleneck_block.5} parent=5 // pred_check_branch
      %232 = sbr.rel (%p230) target = $region32
    $region31: #{resnet_bottleneck_block.5} parent=5 // pred_region
      // Predicated region
      $region33: #{resnet_bottleneck_block.5} parent=31 // pred_check
        %p233 = pneg %p34
      $region34: #{resnet_bottleneck_block.5} parent=31 // pred_check_branch
        %235 = sbr.rel (%p233) target = $region36
      $region35: #{resnet_bottleneck_block.5} parent=31 // pred_region
        %p236 = scmp.lt.s32.totalorder %s14, 1
        %s237 = scalar_select %p236, %s14, 1
        %s238 = smul.addr %s237, 32
        %s239 = smul.addr %s238, 8
        %s240 = scalar_lea.vmem %s0, %s239
      $region36: #{resnet_bottleneck_block.5} parent=31 // pred_fallthru
        _
    $region32: #{resnet_bottleneck_block.5} parent=5 // pred_fallthru
      _
    %p241 = scmp.le.s32.totalorder 1, %s14
    %p242 = scmp.lt.s32.totalorder %s14, 3
    %p243 = pnand %p241, %p242
    %p244 = pneg %p243
    // Predicated region
    $region37: #{resnet_bottleneck_block.5} parent=5 // pred_check
      _
    $region38: #{resnet_bottleneck_block.5} parent=5 // pred_check_branch
      %246 = sbr.rel (%p243) target = $region40
    $region39: #{resnet_bottleneck_block.5} parent=5 // pred_region
      %s247 = ssub.s32 %s14, 1
      %p248 = scmp.lt.s32.totalorder %s19, 1
      %s249 = scalar_select %p248, %s19, 1
      %s250 = smul.addr %s249, 32
      %s251 = smul.addr %s250, 8
      %s252 = scalar_lea.vmem %s0, %s251
      %p253 = pneg %p40
      %p254 = pneg %p37
      %p255 = pneg %p61
      %p256 = pneg %p58
      %p257 = pneg %p82
      %p258 = pneg %p79
      %p259 = pneg %p103
      %p260 = pneg %p100
      %p261 = pneg %p124
      %p262 = pneg %p121
      %p263 = pneg %p150
      %p264 = pneg %p147
      %p265 = scmp.lt.s32.totalorder %s19, 1
      %s266 = scalar_select %p265, %s19, 1
      %s267 = smul.addr %s266, 32
      %s268 = smul.addr %s267, 8
      %s269 = scalar_lea.vmem %s5, %s268
      %p270 = pneg %p176
      %p271 = pneg %p173
      %p272 = scmp.lt.s32.totalorder %s19, 1
      %s273 = scalar_select %p272, %s19, 1
      %s274 = scalar_lea.vmem %s6, %s273
      %p275 = pneg %p202
      %p276 = pneg %p199
      %p277 = scmp.lt.s32.totalorder %s19, 1
      %s278 = scalar_select %p277, %s19, 1
      %s279 = scalar_lea.vmem %s7, %s278
      %p280 = scmp.lt.s32.totalorder %s19, 1
      %s281 = scalar_select %p280, %s19, 1
      %s282 = smul.addr %s281, 32
      %s283 = smul.addr %s282, 8
      %s284 = scalar_lea.vmem %s0, %s283
      %p285 = scmp.lt.s32.totalorder %s19, 1
      %s286 = scalar_select %p285, %s19, 1
      %s287 = smul.addr %s286, 32
      %s288 = smul.addr %s287, 8
      %s289 = scalar_lea.vmem %s5, %s288
      %p290 = scmp.lt.s32.totalorder %s19, 1
      %s291 = scalar_select %p290, %s19, 1
      %s292 = scalar_lea.vmem %s6, %s291
      %p293 = scmp.lt.s32.totalorder %s19, 1
      %s294 = scalar_select %p293, %s19, 1
      %s295 = scalar_lea.vmem %s7, %s294
      %vm296 = vcmask 64512
      %297 = vst.msk [vmem:[#allocation2] sm:$0xff] %vm296, 0.0
      %298 = vst.msk [vmem:[#allocation2 + $0x8] sm:$0xff] %vm296, 0.0
      %vm299 = vcmask 58368
      %300 = vst.msk [vmem:[#allocation2 + $0x10] sm:$0x3] %vm299, 0.0
      %301 = vst.msk [vmem:[#allocation2 + $0x18] sm:$0xff] %vm296, 0.0
      %302 = vst.msk [vmem:[#allocation2 + $0x20] sm:$0xff] %vm296, 0.0
      %303 = vst.msk [vmem:[#allocation2 + $0x28] sm:$0x3] %vm299, 0.0
      %304 = vst.msk [vmem:[#allocation2 + $0x30] sm:$0xff] %vm296, 0.0
      %305 = vst.msk [vmem:[#allocation2 + $0x38] sm:$0xff] %vm296, 0.0
      %306 = vst.msk [vmem:[#allocation2 + $0x40] sm:$0x3] %vm299, 0.0
      %307 = vst.msk [vmem:[#allocation2 + $0x48] sm:$0xff] %vm296, 0.0
      %308 = vst.msk [vmem:[#allocation2 + $0x50] sm:$0xff] %vm296, 0.0
      %309 = vst.msk [vmem:[#allocation2 + $0x58] sm:$0x3] %vm299, 0.0
      %310 = vst.msk [vmem:[#allocation2 + $0x60] sm:$0xff] %vm296, 0.0
      %311 = vst.msk [vmem:[#allocation2 + $0x68] sm:$0xff] %vm296, 0.0
      %312 = vst.msk [vmem:[#allocation2 + $0x70] sm:$0x3] %vm299, 0.0
      %313 = vst.msk [vmem:[#allocation2 + $0x78] sm:$0xff] %vm296, 0.0
      %314 = vst.msk [vmem:[#allocation2 + $0x80] sm:$0xff] %vm296, 0.0
      %315 = vst.msk [vmem:[#allocation2 + $0x88] sm:$0x3] %vm299, 0.0
      %316 = vst.msk [vmem:[#allocation2 + $0x90] sm:$0xff] %vm296, 0.0
      %317 = vst.msk [vmem:[#allocation2 + $0x98] sm:$0xff] %vm296, 0.0
      %318 = vst.msk [vmem:[#allocation2 + $0xa0] sm:$0x3] %vm299, 0.0
      %319 = vst.msk [vmem:[#allocation2 + $0xa8] sm:$0xff] %vm296, 0.0
      %320 = vst.msk [vmem:[#allocation2 + $0xb0] sm:$0xff] %vm296, 0.0
      %321 = vst.msk [vmem:[#allocation2 + $0xb8] sm:$0x3] %vm299, 0.0
      %322 = vst.msk [vmem:[#allocation2 + $0xc0] sm:$0xff] %vm296, 0.0
      %323 = vst.msk [vmem:[#allocation2 + $0xc8] sm:$0xff] %vm296, 0.0
      %324 = vst.msk [vmem:[#allocation2 + $0xd0] sm:$0x3] %vm299, 0.0
      %325 = vst.msk [vmem:[#allocation2 + $0xd8] sm:$0xff] %vm296, 0.0
      %326 = vst.msk [vmem:[#allocation2 + $0xe0] sm:$0xff] %vm296, 0.0
      %327 = vst.msk [vmem:[#allocation2 + $0xe8] sm:$0x3] %vm299, 0.0
      %328 = vst.msk [vmem:[#allocation2 + $0xf0] sm:$0xff] %vm296, 0.0
      %329 = vst.msk [vmem:[#allocation2 + $0xf8] sm:$0xff] %vm296, 0.0
      %330 = vst.msk [vmem:[#allocation2 + $0x100] sm:$0x3] %vm299, 0.0
      %331 = vst.msk [vmem:[#allocation2 + $0x108] sm:$0xff] %vm296, 0.0
      %332 = vst.msk [vmem:[#allocation2 + $0x110] sm:$0xff] %vm296, 0.0
      %333 = vst.msk [vmem:[#allocation2 + $0x118] sm:$0x3] %vm299, 0.0
      %334 = vst.msk [vmem:[#allocation2 + $0x120] sm:$0xff] %vm296, 0.0
      %335 = vst.msk [vmem:[#allocation2 + $0x128] sm:$0xff] %vm296, 0.0
      %336 = vst.msk [vmem:[#allocation2 + $0x130] sm:$0x3] %vm299, 0.0
      %337 = vst.msk [vmem:[#allocation2 + $0x138] sm:$0xff] %vm296, 0.0
      %338 = vst.msk [vmem:[#allocation2 + $0x140] sm:$0xff] %vm296, 0.0
      %339 = vst.msk [vmem:[#allocation2 + $0x148] sm:$0x3] %vm299, 0.0
      %340 = vst.msk [vmem:[#allocation2 + $0x150] sm:$0xff] %vm296, 0.0
      %341 = vst.msk [vmem:[#allocation2 + $0x158] sm:$0xff] %vm296, 0.0
      %342 = vst.msk [vmem:[#allocation2 + $0x160] sm:$0x3] %vm299, 0.0
      %343 = vst.msk [vmem:[#allocation2 + $0x168] sm:$0xff] %vm296, 0.0
      %344 = vst.msk [vmem:[#allocation2 + $0x170] sm:$0xff] %vm296, 0.0
      %345 = vst.msk [vmem:[#allocation2 + $0x178] sm:$0x3] %vm299, 0.0
      %346 = vst.msk [vmem:[#allocation2 + $0x180] sm:$0xff] %vm296, 0.0
      %347 = vst.msk [vmem:[#allocation2 + $0x188] sm:$0xff] %vm296, 0.0
      %348 = vst.msk [vmem:[#allocation2 + $0x190] sm:$0x3] %vm299, 0.0
      %349 = vst.msk [vmem:[#allocation2 + $0x198] sm:$0xff] %vm296, 0.0
      %350 = vst.msk [vmem:[#allocation2 + $0x1a0] sm:$0xff] %vm296, 0.0
      %351 = vst.msk [vmem:[#allocation2 + $0x1a8] sm:$0x3] %vm299, 0.0
      %v352 = vld [vmem:[%s284] sm:$0xff]
      %v353 = vld [vmem:[%s284 + $0x8] sm:$0xff]
      %v354 = vld [vmem:[%s284 + $0x10] sm:$0xff]
      %v355 = vld [vmem:[%s284 + $0x18] sm:$0xff]
      %v356 = vld [vmem:[%s284 + $0x20] sm:$0xff]
      %v357 = vld [vmem:[%s284 + $0x28] sm:$0xff]
      %v358 = vld [vmem:[%s284 + $0x30] sm:$0xff]
      %v359 = vld [vmem:[%s284 + $0x38] sm:$0xff]
      %v360 = vld [vmem:[%s284 + $0x40] sm:$0xff]
      %v361 = vld [vmem:[%s284 + $0x48] sm:$0xff]
      %v362 = vld [vmem:[%s284 + $0x50] sm:$0xff]
      %v363 = vld [vmem:[%s284 + $0x58] sm:$0xff]
      %v364 = vld [vmem:[%s284 + $0x60] sm:$0xff]
      %v365 = vld [vmem:[%s284 + $0x68] sm:$0xff]
      %v366 = vld [vmem:[%s284 + $0x70] sm:$0xff]
      %v367 = vld [vmem:[%s284 + $0x78] sm:$0xff]
      %v368 = vld [vmem:[%s284 + $0x80] sm:$0xff]
      %v369 = vld [vmem:[%s284 + $0x88] sm:$0xff]
      %v370 = vld [vmem:[%s284 + $0x90] sm:$0xff]
      %v371 = vld [vmem:[%s284 + $0x98] sm:$0xff]
      %v372 = vld [vmem:[%s284 + $0xa0] sm:$0xff]
      %v373 = vld [vmem:[%s284 + $0xa8] sm:$0xff]
      %v374 = vld [vmem:[%s284 + $0xb0] sm:$0xff]
      %v375 = vld [vmem:[%s284 + $0xb8] sm:$0xff]
      %v376 = vld [vmem:[%s284 + $0xc0] sm:$0xff]
      %v377 = vld [vmem:[%s284 + $0xc8] sm:$0xff]
      %v378 = vld [vmem:[%s284 + $0xd0] sm:$0xff]
      %v379 = vld [vmem:[%s284 + $0xd8] sm:$0xff]
      %v380 = vld [vmem:[%s284 + $0xe0] sm:$0xff]
      %v381 = vld [vmem:[%s284 + $0xe8] sm:$0xff]
      %v382 = vld [vmem:[%s284 + $0xf0] sm:$0xff]
      %v383 = vld [vmem:[%s284 + $0xf8] sm:$0xff]
      %v384 = vld [vmem:[%s1] sm:$0x1]
      %v386 = vperm.slane %v384, 0
      %v388 = vmul.f32 %v352, %v386
      %v389 = vmul.f32 %v353, %v386
      %v390 = vmul.f32 %v354, %v386
      %v391 = vmul.f32 %v355, %v386
      %v392 = vmul.f32 %v356, %v386
      %v393 = vmul.f32 %v357, %v386
      %v394 = vmul.f32 %v358, %v386
      %v395 = vmul.f32 %v359, %v386
      %v396 = vmul.f32 %v360, %v386
      %v397 = vmul.f32 %v361, %v386
      %v398 = vmul.f32 %v362, %v386
      %v399 = vmul.f32 %v363, %v386
      %v400 = vmul.f32 %v364, %v386
      %v401 = vmul.f32 %v365, %v386
      %v402 = vmul.f32 %v366, %v386
      %v403 = vmul.f32 %v367, %v386
      %v404 = vmul.f32 %v368, %v386
      %v405 = vmul.f32 %v369, %v386
      %v406 = vmul.f32 %v370, %v386
      %v407 = vmul.f32 %v371, %v386
      %v408 = vmul.f32 %v372, %v386
      %v409 = vmul.f32 %v373, %v386
      %v410 = vmul.f32 %v374, %v386
      %v411 = vmul.f32 %v375, %v386
      %v412 = vmul.f32 %v376, %v386
      %v413 = vmul.f32 %v377, %v386
      %v414 = vmul.f32 %v378, %v386
      %v415 = vmul.f32 %v379, %v386
      %v416 = vmul.f32 %v380, %v386
      %v417 = vmul.f32 %v381, %v386
      %v418 = vmul.f32 %v382, %v386
      %v419 = vmul.f32 %v383, %v386
      %v420 = vld [vmem:[%s2] sm:$0x1]
      %v422 = vperm.slane %v420, 0
      %v424 = vadd.f32 %v388, %v422
      %v425 = vadd.f32 %v389, %v422
      %v426 = vadd.f32 %v390, %v422
      %v427 = vadd.f32 %v391, %v422
      %v428 = vadd.f32 %v392, %v422
      %v429 = vadd.f32 %v393, %v422
      %v430 = vadd.f32 %v394, %v422
      %v431 = vadd.f32 %v395, %v422
      %v432 = vadd.f32 %v396, %v422
      %v433 = vadd.f32 %v397, %v422
      %v434 = vadd.f32 %v398, %v422
      %v435 = vadd.f32 %v399, %v422
      %v436 = vadd.f32 %v400, %v422
      %v437 = vadd.f32 %v401, %v422
      %v438 = vadd.f32 %v402, %v422
      %v439 = vadd.f32 %v403, %v422
      %v440 = vadd.f32 %v404, %v422
      %v441 = vadd.f32 %v405, %v422
      %v442 = vadd.f32 %v406, %v422
      %v443 = vadd.f32 %v407, %v422
      %v444 = vadd.f32 %v408, %v422
      %v445 = vadd.f32 %v409, %v422
      %v446 = vadd.f32 %v410, %v422
      %v447 = vadd.f32 %v411, %v422
      %v448 = vadd.f32 %v412, %v422
      %v449 = vadd.f32 %v413, %v422
      %v450 = vadd.f32 %v414, %v422
      %v451 = vadd.f32 %v415, %v422
      %v452 = vadd.f32 %v416, %v422
      %v453 = vadd.f32 %v417, %v422
      %v454 = vadd.f32 %v418, %v422
      %v455 = vadd.f32 %v419, %v422
      %s456 = scalar_lea.vmem [#allocation2], 24
      %457 = vst.msk [vmem:[%s456 + $0x1] sm:$0xff] %vm296, %v424
      %458 = vst.msk [vmem:[%s456 + $0x9] sm:$0xff] %vm296, %v425
      %459 = vst.msk [vmem:[%s456 + $0x19] sm:$0xff] %vm296, %v426
      %460 = vst.msk [vmem:[%s456 + $0x21] sm:$0xff] %vm296, %v427
      %461 = vst.msk [vmem:[%s456 + $0x31] sm:$0xff] %vm296, %v428
      %462 = vst.msk [vmem:[%s456 + $0x39] sm:$0xff] %vm296, %v429
      %463 = vst.msk [vmem:[%s456 + $0x49] sm:$0xff] %vm296, %v430
      %464 = vst.msk [vmem:[%s456 + $0x51] sm:$0xff] %vm296, %v431
      %465 = vst.msk [vmem:[%s456 + $0x61] sm:$0xff] %vm296, %v432
      %466 = vst.msk [vmem:[%s456 + $0x69] sm:$0xff] %vm296, %v433
      %467 = vst.msk [vmem:[%s456 + $0x79] sm:$0xff] %vm296, %v434
      %468 = vst.msk [vmem:[%s456 + $0x81] sm:$0xff] %vm296, %v435
      %469 = vst.msk [vmem:[%s456 + $0x91] sm:$0xff] %vm296, %v436
      %470 = vst.msk [vmem:[%s456 + $0x99] sm:$0xff] %vm296, %v437
      %471 = vst.msk [vmem:[%s456 + $0xa9] sm:$0xff] %vm296, %v438
      %472 = vst.msk [vmem:[%s456 + $0xb1] sm:$0xff] %vm296, %v439
      %473 = vst.msk [vmem:[%s456 + $0xc1] sm:$0xff] %vm296, %v440
      %474 = vst.msk [vmem:[%s456 + $0xc9] sm:$0xff] %vm296, %v441
      %475 = vst.msk [vmem:[%s456 + $0xd9] sm:$0xff] %vm296, %v442
      %476 = vst.msk [vmem:[%s456 + $0xe1] sm:$0xff] %vm296, %v443
      %477 = vst.msk [vmem:[%s456 + $0xf1] sm:$0xff] %vm296, %v444
      %478 = vst.msk [vmem:[%s456 + $0xf9] sm:$0xff] %vm296, %v445
      %479 = vst.msk [vmem:[%s456 + $0x109] sm:$0xff] %vm296, %v446
      %480 = vst.msk [vmem:[%s456 + $0x111] sm:$0xff] %vm296, %v447
      %481 = vst.msk [vmem:[%s456 + $0x121] sm:$0xff] %vm296, %v448
      %482 = vst.msk [vmem:[%s456 + $0x129] sm:$0xff] %vm296, %v449
      %483 = vst.msk [vmem:[%s456 + $0x139] sm:$0xff] %vm296, %v450
      %484 = vst.msk [vmem:[%s456 + $0x141] sm:$0xff] %vm296, %v451
      %485 = vst.msk [vmem:[%s456 + $0x151] sm:$0xff] %vm296, %v452
      %486 = vst.msk [vmem:[%s456 + $0x159] sm:$0xff] %vm296, %v453
      %487 = vst.msk [vmem:[%s456 + $0x169] sm:$0xff] %vm296, %v454
      %488 = vst.msk [vmem:[%s456 + $0x171] sm:$0xff] %vm296, %v455
      %v489 = vld [vmem:[#allocation2] sm:$0xff]
      %v490 = vld [vmem:[#allocation2 + $0x8] sm:$0xff]
      %v491 = vld [vmem:[#allocation2 + $0x10] sm:$0x3]
      %v492 = vld [vmem:[#allocation2 + $0x18] sm:$0xff]
      %v493 = vld [vmem:[#allocation2 + $0x20] sm:$0xff]
      %v494 = vld [vmem:[#allocation2 + $0x28] sm:$0x3]
      %v495 = vld [vmem:[#allocation2 + $0x30] sm:$0xff]
      %v496 = vld [vmem:[#allocation2 + $0x38] sm:$0xff]
      %v497 = vld [vmem:[#allocation2 + $0x40] sm:$0x3]
      %v498 = vld [vmem:[#allocation2 + $0x48] sm:$0xff]
      %v499 = vld [vmem:[#allocation2 + $0x50] sm:$0xff]
      %v500 = vld [vmem:[#allocation2 + $0x58] sm:$0x3]
      %v501 = vld [vmem:[#allocation2 + $0x60] sm:$0xff]
      %v502 = vld [vmem:[#allocation2 + $0x68] sm:$0xff]
      %v503 = vld [vmem:[#allocation2 + $0x70] sm:$0x3]
      %v504 = vld [vmem:[#allocation2 + $0x78] sm:$0xff]
      %v505 = vld [vmem:[#allocation2 + $0x80] sm:$0xff]
      %v506 = vld [vmem:[#allocation2 + $0x88] sm:$0x3]
      %v507 = vld [vmem:[#allocation2 + $0x90] sm:$0xff]
      %v508 = vld [vmem:[#allocation2 + $0x98] sm:$0xff]
      %v509 = vld [vmem:[#allocation2 + $0xa0] sm:$0x3]
      %v510 = vld [vmem:[#allocation2 + $0xa8] sm:$0xff]
      %v511 = vld [vmem:[#allocation2 + $0xb0] sm:$0xff]
      %v512 = vld [vmem:[#allocation2 + $0xb8] sm:$0x3]
      %v513 = vld [vmem:[#allocation2 + $0xc0] sm:$0xff]
      %v514 = vld [vmem:[#allocation2 + $0xc8] sm:$0xff]
      %v515 = vld [vmem:[#allocation2 + $0xd0] sm:$0x3]
      %v516 = vld [vmem:[#allocation2 + $0xd8] sm:$0xff]
      %v517 = vld [vmem:[#allocation2 + $0xe0] sm:$0xff]
      %v518 = vld [vmem:[#allocation2 + $0xe8] sm:$0x3]
      %v519 = vld [vmem:[#allocation2 + $0xf0] sm:$0xff]
      %v520 = vld [vmem:[#allocation2 + $0xf8] sm:$0xff]
      %v521 = vld [vmem:[#allocation2 + $0x100] sm:$0x3]
      %v522 = vld [vmem:[#allocation2 + $0x108] sm:$0xff]
      %v523 = vld [vmem:[#allocation2 + $0x110] sm:$0xff]
      %v524 = vld [vmem:[#allocation2 + $0x118] sm:$0x3]
      %v525 = vld [vmem:[#allocation2 + $0x120] sm:$0xff]
      %v526 = vld [vmem:[#allocation2 + $0x128] sm:$0xff]
      %v527 = vld [vmem:[#allocation2 + $0x130] sm:$0x3]
      %v528 = vld [vmem:[#allocation2 + $0x138] sm:$0xff]
      %v529 = vld [vmem:[#allocation2 + $0x140] sm:$0xff]
      %v530 = vld [vmem:[#allocation2 + $0x148] sm:$0x3]
      %v531 = vld [vmem:[#allocation2 + $0x150] sm:$0xff]
      %v532 = vld [vmem:[#allocation2 + $0x158] sm:$0xff]
      %v533 = vld [vmem:[#allocation2 + $0x160] sm:$0x3]
      %v534 = vld [vmem:[#allocation2 + $0x168] sm:$0xff]
      %v535 = vld [vmem:[#allocation2 + $0x170] sm:$0xff]
      %v536 = vld [vmem:[#allocation2 + $0x178] sm:$0x3]
      %v537 = vld [vmem:[#allocation2 + $0x180] sm:$0xff]
      %v538 = vld [vmem:[#allocation2 + $0x188] sm:$0xff]
      %v539 = vld [vmem:[#allocation2 + $0x190] sm:$0x3]
      %v540 = vld [vmem:[#allocation2 + $0x198] sm:$0xff]
      %v541 = vld [vmem:[#allocation2 + $0x1a0] sm:$0xff]
      %v542 = vld [vmem:[#allocation2 + $0x1a8] sm:$0x3]
      %v543 = vld [vmem:[%s3] sm:$0xff]
      %v544 = vld [vmem:[%s3 + $0x8] sm:$0xff]
      %v545 = vld [vmem:[%s3 + $0x10] sm:$0xff]
      %v546 = vld [vmem:[%s3 + $0x18] sm:$0xff]
      %v547 = vld [vmem:[%s3 + $0x20] sm:$0xff]
      %v548 = vld [vmem:[%s3 + $0x28] sm:$0xff]
      %v549 = vld [vmem:[%s3 + $0x30] sm:$0xff]
      %v550 = vld [vmem:[%s3 + $0x38] sm:$0xff]
      %v551 = vld [vmem:[%s3 + $0x40] sm:$0xff]
      %vm600 = vcmask 1046528
      %v601 = vrot.slane %v489, 1
      %v602 = vrot.slane %v490, 1
      %v603 = vsel %vm600, %v601, %v602
      %v604 = vrot.slane %v491, 1
      %v605 = vsel %vm600, %v602, %v604
      %v606 = vrot.slane %v492, 1
      %v607 = vrot.slane %v493, 1
      %v608 = vsel %vm600, %v606, %v607
      %v609 = vrot.slane %v494, 1
      %v610 = vsel %vm600, %v607, %v609
      %v611 = vrot.slane %v495, 1
      %v612 = vrot.slane %v496, 1
      %v613 = vsel %vm600, %v611, %v612
      %v614 = vrot.slane %v497, 1
      %v615 = vsel %vm600, %v612, %v614
      %v616 = vrot.slane %v498, 1
      %v617 = vrot.slane %v499, 1
      %v618 = vsel %vm600, %v616, %v617
      %v619 = vrot.slane %v500, 1
      %v620 = vsel %vm600, %v617, %v619
      %v621 = vrot.slane %v501, 1
      %v622 = vrot.slane %v502, 1
      %v623 = vsel %vm600, %v621, %v622
      %v624 = vrot.slane %v503, 1
      %v625 = vsel %vm600, %v622, %v624
      %v626 = vrot.slane %v504, 1
      %v627 = vrot.slane %v505, 1
      %v628 = vsel %vm600, %v626, %v627
      %v629 = vrot.slane %v506, 1
      %v630 = vsel %vm600, %v627, %v629
      %v631 = vrot.slane %v507, 1
      %v632 = vrot.slane %v508, 1
      %v633 = vsel %vm600, %v631, %v632
      %v634 = vrot.slane %v509, 1
      %v635 = vsel %vm600, %v632, %v634
      %v636 = vrot.slane %v510, 1
      %v637 = vrot.slane %v511, 1
      %v638 = vsel %vm600, %v636, %v637
      %v639 = vrot.slane %v512, 1
      %v640 = vsel %vm600, %v637, %v639
      %v641 = vrot.slane %v513, 1
      %v642 = vrot.slane %v514, 1
      %v643 = vsel %vm600, %v641, %v642
      %v644 = vrot.slane %v515, 1
      %v645 = vsel %vm600, %v642, %v644
      %v646 = vrot.slane %v516, 1
      %v647 = vrot.slane %v517, 1
      %v648 = vsel %vm600, %v646, %v647
      %v649 = vrot.slane %v518, 1
      %v650 = vsel %vm600, %v647, %v649
      %v651 = vrot.slane %v519, 1
      %v652 = vrot.slane %v520, 1
      %v653 = vsel %vm600, %v651, %v652
      %v654 = vrot.slane %v521, 1
      %v655 = vsel %vm600, %v652, %v654
      %v656 = vrot.slane %v522, 1
      %v657 = vrot.slane %v523, 1
      %v658 = vsel %vm600, %v656, %v657
      %v659 = vrot.slane %v524, 1
      %v660 = vsel %vm600, %v657, %v659
      %v661 = vrot.slane %v525, 1
      %v662 = vrot.slane %v526, 1
      %v663 = vsel %vm600, %v661, %v662
      %v664 = vrot.slane %v527, 1
      %v665 = vsel %vm600, %v662, %v664
      %v666 = vrot.slane %v528, 1
      %v667 = vrot.slane %v529, 1
      %v668 = vsel %vm600, %v666, %v667
      %v669 = vrot.slane %v530, 1
      %v670 = vsel %vm600, %v667, %v669
      %v671 = vrot.slane %v531, 1
      %v672 = vrot.slane %v532, 1
      %v673 = vsel %vm600, %v671, %v672
      %v674 = vrot.slane %v533, 1
      %v675 = vsel %vm600, %v672, %v674
      %v676 = vrot.slane %v534, 1
      %v677 = vrot.slane %v535, 1
      %v678 = vsel %vm600, %v676, %v677
      %v679 = vrot.slane %v536, 1
      %v680 = vsel %vm600, %v677, %v679
      %v681 = vsel %vm296, %v603, 0
      %v683 = vsel %vm296, %v605, 0
      %v685 = vsel %vm296, %v608, 0
      %v687 = vsel %vm296, %v610, 0
      %v689 = vsel %vm296, %v613, 0
      %v691 = vsel %vm296, %v615, 0
      %v693 = vsel %vm296, %v618, 0
      %v695 = vsel %vm296, %v620, 0
      %v697 = vsel %vm296, %v623, 0
      %v699 = vsel %vm296, %v625, 0
      %v701 = vsel %vm296, %v628, 0
      %v703 = vsel %vm296, %v630, 0
      %v705 = vsel %vm296, %v633, 0
      %v707 = vsel %vm296, %v635, 0
      %v709 = vsel %vm296, %v638, 0
      %v711 = vsel %vm296, %v640, 0
      %v713 = vsel %vm296, %v643, 0
      %v715 = vsel %vm296, %v645, 0
      %v717 = vsel %vm296, %v648, 0
      %v719 = vsel %vm296, %v650, 0
      %v721 = vsel %vm296, %v653, 0
      %v723 = vsel %vm296, %v655, 0
      %v725 = vsel %vm296, %v658, 0
      %v727 = vsel %vm296, %v660, 0
      %v729 = vsel %vm296, %v663, 0
      %v731 = vsel %vm296, %v665, 0
      %v733 = vsel %vm296, %v668, 0
      %v735 = vsel %vm296, %v670, 0
      %v737 = vsel %vm296, %v673, 0
      %v739 = vsel %vm296, %v675, 0
      %v741 = vsel %vm296, %v678, 0
      %v743 = vsel %vm296, %v680, 0
      %745 = vmatpush.msra.mxu0 0.0
      %746 = vmatpush.msra.mxu0 0.0
      %747 = vmatpush.msra.mxu0 0.0
      %748 = vmatpush.msra.mxu0 0.0
      %749 = vmatpush.msra.mxu0 0.0
      %750 = vmatpush.msra.mxu0 0.0
      %751 = vmatpush.msra.mxu0 0.0
      %752 = vmatpush.msra.mxu0 0.0
      %753 = vmatpush.msra.mxu0 0.0
      %754 = vmatpush.msra.mxu0 0.0
      %755 = vmatpush.msra.mxu0 0.0
      %756 = vmatpush.msra.mxu0 0.0
      %757 = vmatpush.msra.mxu0 0.0
      %758 = vmatpush.msra.mxu0 0.0
      %759 = vmatpush.msra.mxu0 0.0
      %760 = vmatpush.msra.mxu0 %v544
      %761 = vmatmul.f32.gmra.mxu0 %v681
      %v762 = vpop.f32.mrf.mxu0
      %v763 = vadd.f32 0.0, %v762
      %764 = vmatmul.f32.gmra.mxu0 %v683
      %v765 = vpop.f32.mrf.mxu0
      %v766 = vadd.f32 0.0, %v765
      %767 = vmatmul.f32.gmra.mxu0 %v685
      %v768 = vpop.f32.mrf.mxu0
      %v769 = vadd.f32 0.0, %v768
      %770 = vmatmul.f32.gmra.mxu0 %v687
      %v771 = vpop.f32.mrf.mxu0
      %v772 = vadd.f32 0.0, %v771
      %773 = vmatmul.f32.gmra.mxu0 %v689
      %v774 = vpop.f32.mrf.mxu0
      %v775 = vadd.f32 0.0, %v774
      %776 = vmatmul.f32.gmra.mxu0 %v691
      %v777 = vpop.f32.mrf.mxu0
      %v778 = vadd.f32 0.0, %v777
      %779 = vmatmul.f32.gmra.mxu0 %v693
      %v780 = vpop.f32.mrf.mxu0
      %v781 = vadd.f32 0.0, %v780
      %782 = vmatmul.f32.gmra.mxu0 %v695
      %v783 = vpop.f32.mrf.mxu0
      %v784 = vadd.f32 0.0, %v783
      %785 = vmatmul.f32.gmra.mxu0 %v697
      %v786 = vpop.f32.mrf.mxu0
      %v787 = vadd.f32 0.0, %v786
      %788 = vmatmul.f32.gmra.mxu0 %v699
      %v789 = vpop.f32.mrf.mxu0
      %v790 = vadd.f32 0.0, %v789
      %791 = vmatmul.f32.gmra.mxu0 %v701
      %v792 = vpop.f32.mrf.mxu0
      %v793 = vadd.f32 0.0, %v792
      %794 = vmatmul.f32.gmra.mxu0 %v703
      %v795 = vpop.f32.mrf.mxu0
      %v796 = vadd.f32 0.0, %v795
      %797 = vmatmul.f32.gmra.mxu0 %v705
      %v798 = vpop.f32.mrf.mxu0
      %v799 = vadd.f32 0.0, %v798
      %800 = vmatmul.f32.gmra.mxu0 %v707
      %v801 = vpop.f32.mrf.mxu0
      %v802 = vadd.f32 0.0, %v801
      %803 = vmatmul.f32.gmra.mxu0 %v709
      %v804 = vpop.f32.mrf.mxu0
      %v805 = vadd.f32 0.0, %v804
      %806 = vmatmul.f32.gmra.mxu0 %v711
      %v807 = vpop.f32.mrf.mxu0
      %v808 = vadd.f32 0.0, %v807
      %809 = vmatmul.f32.gmra.mxu0 %v713
      %v810 = vpop.f32.mrf.mxu0
      %v811 = vadd.f32 0.0, %v810
      %812 = vmatmul.f32.gmra.mxu0 %v715
      %v813 = vpop.f32.mrf.mxu0
      %v814 = vadd.f32 0.0, %v813
      %815 = vmatmul.f32.gmra.mxu0 %v717
      %v816 = vpop.f32.mrf.mxu0
      %v817 = vadd.f32 0.0, %v816
      %818 = vmatmul.f32.gmra.mxu0 %v719
      %v819 = vpop.f32.mrf.mxu0
      %v820 = vadd.f32 0.0, %v819
      %821 = vmatmul.f32.gmra.mxu0 %v721
      %v822 = vpop.f32.mrf.mxu0
      %v823 = vadd.f32 0.0, %v822
      %824 = vmatmul.f32.gmra.mxu0 %v723
      %v825 = vpop.f32.mrf.mxu0
      %v826 = vadd.f32 0.0, %v825
      %827 = vmatmul.f32.gmra.mxu0 %v725
      %v828 = vpop.f32.mrf.mxu0
      %v829 = vadd.f32 0.0, %v828
      %830 = vmatmul.f32.gmra.mxu0 %v727
      %v831 = vpop.f32.mrf.mxu0
      %v832 = vadd.f32 0.0, %v831
      %833 = vmatmul.f32.gmra.mxu0 %v729
      %v834 = vpop.f32.mrf.mxu0
      %v835 = vadd.f32 0.0, %v834
      %836 = vmatmul.f32.gmra.mxu0 %v731
      %v837 = vpop.f32.mrf.mxu0
      %v838 = vadd.f32 0.0, %v837
      %839 = vmatmul.f32.gmra.mxu0 %v733
      %v840 = vpop.f32.mrf.mxu0
      %v841 = vadd.f32 0.0, %v840
      %842 = vmatmul.f32.gmra.mxu0 %v735
      %v843 = vpop.f32.mrf.mxu0
      %v844 = vadd.f32 0.0, %v843
      %845 = vmatmul.f32.gmra.mxu0 %v737
      %v846 = vpop.f32.mrf.mxu0
      %v847 = vadd.f32 0.0, %v846
      %848 = vmatmul.f32.gmra.mxu0 %v739
      %v849 = vpop.f32.mrf.mxu0
      %v850 = vadd.f32 0.0, %v849
      %851 = vmatmul.f32.gmra.mxu0 %v741
      %v852 = vpop.f32.mrf.mxu0
      %v853 = vadd.f32 0.0, %v852
      %854 = vmatmul.f32.gmra.mxu0 %v743
      %v855 = vpop.f32.mrf.mxu0
      %v856 = vadd.f32 0.0, %v855
      %857 = vdwg.mxu0
      %v858 = vsel %vm296, %v489, 0
      %v860 = vsel %vm296, %v490, 0
      %v862 = vsel %vm296, %v492, 0
      %v864 = vsel %vm296, %v493, 0
      %v866 = vsel %vm296, %v495, 0
      %v868 = vsel %vm296, %v496, 0
      %v870 = vsel %vm296, %v498, 0
      %v872 = vsel %vm296, %v499, 0
      %v874 = vsel %vm296, %v501, 0
      %v876 = vsel %vm296, %v502, 0
      %v878 = vsel %vm296, %v504, 0
      %v880 = vsel %vm296, %v505, 0
      %v882 = vsel %vm296, %v507, 0
      %v884 = vsel %vm296, %v508, 0
      %v886 = vsel %vm296, %v510, 0
      %v888 = vsel %vm296, %v511, 0
      %v890 = vsel %vm296, %v513, 0
      %v892 = vsel %vm296, %v514, 0
      %v894 = vsel %vm296, %v516, 0
      %v896 = vsel %vm296, %v517, 0
      %v898 = vsel %vm296, %v519, 0
      %v900 = vsel %vm296, %v520, 0
      %v902 = vsel %vm296, %v522, 0
      %v904 = vsel %vm296, %v523, 0
      %v906 = vsel %vm296, %v525, 0
      %v908 = vsel %vm296, %v526, 0
      %v910 = vsel %vm296, %v528, 0
      %v912 = vsel %vm296, %v529, 0
      %v914 = vsel %vm296, %v531, 0
      %v916 = vsel %vm296, %v532, 0
      %v918 = vsel %vm296, %v534, 0
      %v920 = vsel %vm296, %v535, 0
      %922 = vmatpush.msra.mxu0 0.0
      %923 = vmatpush.msra.mxu0 0.0
      %924 = vmatpush.msra.mxu0 0.0
      %925 = vmatpush.msra.mxu0 0.0
      %926 = vmatpush.msra.mxu0 0.0
      %927 = vmatpush.msra.mxu0 0.0
      %928 = vmatpush.msra.mxu0 0.0
      %929 = vmatpush.msra.mxu0 0.0
      %930 = vmatpush.msra.mxu0 0.0
      %931 = vmatpush.msra.mxu0 0.0
      %932 = vmatpush.msra.mxu0 0.0
      %933 = vmatpush.msra.mxu0 0.0
      %934 = vmatpush.msra.mxu0 0.0
      %935 = vmatpush.msra.mxu0 0.0
      %936 = vmatpush.msra.mxu0 0.0
      %937 = vmatpush.msra.mxu0 %v543
      %938 = vmatmul.f32.gmra.mxu0 %v858
      %v939 = vpop.f32.mrf.mxu0
      %v940 = vadd.f32 %v763, %v939
      %941 = vmatmul.f32.gmra.mxu0 %v860
      %v942 = vpop.f32.mrf.mxu0
      %v943 = vadd.f32 %v766, %v942
      %944 = vmatmul.f32.gmra.mxu0 %v862
      %v945 = vpop.f32.mrf.mxu0
      %v946 = vadd.f32 %v769, %v945
      %947 = vmatmul.f32.gmra.mxu0 %v864
      %v948 = vpop.f32.mrf.mxu0
      %v949 = vadd.f32 %v772, %v948
      %950 = vmatmul.f32.gmra.mxu0 %v866
      %v951 = vpop.f32.mrf.mxu0
      %v952 = vadd.f32 %v775, %v951
      %953 = vmatmul.f32.gmra.mxu0 %v868
      %v954 = vpop.f32.mrf.mxu0
      %v955 = vadd.f32 %v778, %v954
      %956 = vmatmul.f32.gmra.mxu0 %v870
      %v957 = vpop.f32.mrf.mxu0
      %v958 = vadd.f32 %v781, %v957
      %959 = vmatmul.f32.gmra.mxu0 %v872
      %v960 = vpop.f32.mrf.mxu0
      %v961 = vadd.f32 %v784, %v960
      %962 = vmatmul.f32.gmra.mxu0 %v874
      %v963 = vpop.f32.mrf.mxu0
      %v964 = vadd.f32 %v787, %v963
      %965 = vmatmul.f32.gmra.mxu0 %v876
      %v966 = vpop.f32.mrf.mxu0
      %v967 = vadd.f32 %v790, %v966
      %968 = vmatmul.f32.gmra.mxu0 %v878
      %v969 = vpop.f32.mrf.mxu0
      %v970 = vadd.f32 %v793, %v969
      %971 = vmatmul.f32.gmra.mxu0 %v880
      %v972 = vpop.f32.mrf.mxu0
      %v973 = vadd.f32 %v796, %v972
      %974 = vmatmul.f32.gmra.mxu0 %v882
      %v975 = vpop.f32.mrf.mxu0
      %v976 = vadd.f32 %v799, %v975
      %977 = vmatmul.f32.gmra.mxu0 %v884
      %v978 = vpop.f32.mrf.mxu0
      %v979 = vadd.f32 %v802, %v978
      %980 = vmatmul.f32.gmra.mxu0 %v886
      %v981 = vpop.f32.mrf.mxu0
      %v982 = vadd.f32 %v805, %v981
      %983 = vmatmul.f32.gmra.mxu0 %v888
      %v984 = vpop.f32.mrf.mxu0
      %v985 = vadd.f32 %v808, %v984
      %986 = vmatmul.f32.gmra.mxu0 %v890
      %v987 = vpop.f32.mrf.mxu0
      %v988 = vadd.f32 %v811, %v987
      %989 = vmatmul.f32.gmra.mxu0 %v892
      %v990 = vpop.f32.mrf.mxu0
      %v991 = vadd.f32 %v814, %v990
      %992 = vmatmul.f32.gmra.mxu0 %v894
      %v993 = vpop.f32.mrf.mxu0
      %v994 = vadd.f32 %v817, %v993
      %995 = vmatmul.f32.gmra.mxu0 %v896
      %v996 = vpop.f32.mrf.mxu0
      %v997 = vadd.f32 %v820, %v996
      %998 = vmatmul.f32.gmra.mxu0 %v898
      %v999 = vpop.f32.mrf.mxu0
      %v1000 = vadd.f32 %v823, %v999
      %1001 = vmatmul.f32.gmra.mxu0 %v900
      %v1002 = vpop.f32.mrf.mxu0
      %v1003 = vadd.f32 %v826, %v1002
      %1004 = vmatmul.f32.gmra.mxu0 %v902
      %v1005 = vpop.f32.mrf.mxu0
      %v1006 = vadd.f32 %v829, %v1005
      %1007 = vmatmul.f32.gmra.mxu0 %v904
      %v1008 = vpop.f32.mrf.mxu0
      %v1009 = vadd.f32 %v832, %v1008
      %1010 = vmatmul.f32.gmra.mxu0 %v906
      %v1011 = vpop.f32.mrf.mxu0
      %v1012 = vadd.f32 %v835, %v1011
      %1013 = vmatmul.f32.gmra.mxu0 %v908
      %v1014 = vpop.f32.mrf.mxu0
      %v1015 = vadd.f32 %v838, %v1014
      %1016 = vmatmul.f32.gmra.mxu0 %v910
      %v1017 = vpop.f32.mrf.mxu0
      %v1018 = vadd.f32 %v841, %v1017
      %1019 = vmatmul.f32.gmra.mxu0 %v912
      %v1020 = vpop.f32.mrf.mxu0
      %v1021 = vadd.f32 %v844, %v1020
      %1022 = vmatmul.f32.gmra.mxu0 %v914
      %v1023 = vpop.f32.mrf.mxu0
      %v1024 = vadd.f32 %v847, %v1023
      %1025 = vmatmul.f32.gmra.mxu0 %v916
      %v1026 = vpop.f32.mrf.mxu0
      %v1027 = vadd.f32 %v850, %v1026
      %1028 = vmatmul.f32.gmra.mxu0 %v918
      %v1029 = vpop.f32.mrf.mxu0
      %v1030 = vadd.f32 %v853, %v1029
      %1031 = vmatmul.f32.gmra.mxu0 %v920
      %v1032 = vpop.f32.mrf.mxu0
      %v1033 = vadd.f32 %v856, %v1032
      %1034 = vdwg.mxu0
      %vm1035 = vcmask 1045504
      %v1036 = vrot.slane %v489, 2
      %v1037 = vrot.slane %v490, 2
      %v1038 = vsel %vm1035, %v1036, %v1037
      %v1039 = vrot.slane %v491, 2
      %v1040 = vsel %vm1035, %v1037, %v1039
      %v1041 = vrot.slane %v492, 2
      %v1042 = vrot.slane %v493, 2
      %v1043 = vsel %vm1035, %v1041, %v1042
      %v1044 = vrot.slane %v494, 2
      %v1045 = vsel %vm1035, %v1042, %v1044
      %v1046 = vrot.slane %v495, 2
      %v1047 = vrot.slane %v496, 2
      %v1048 = vsel %vm1035, %v1046, %v1047
      %v1049 = vrot.slane %v497, 2
      %v1050 = vsel %vm1035, %v1047, %v1049
      %v1051 = vrot.slane %v498, 2
      %v1052 = vrot.slane %v499, 2
      %v1053 = vsel %vm1035, %v1051, %v1052
      %v1054 = vrot.slane %v500, 2
      %v1055 = vsel %vm1035, %v1052, %v1054
      %v1056 = vrot.slane %v501, 2
      %v1057 = vrot.slane %v502, 2
      %v1058 = vsel %vm1035, %v1056, %v1057
      %v1059 = vrot.slane %v503, 2
      %v1060 = vsel %vm1035, %v1057, %v1059
      %v1061 = vrot.slane %v504, 2
      %v1062 = vrot.slane %v505, 2
      %v1063 = vsel %vm1035, %v1061, %v1062
      %v1064 = vrot.slane %v506, 2
      %v1065 = vsel %vm1035, %v1062, %v1064
      %v1066 = vrot.slane %v507, 2
      %v1067 = vrot.slane %v508, 2
      %v1068 = vsel %vm1035, %v1066, %v1067
      %v1069 = vrot.slane %v509, 2
      %v1070 = vsel %vm1035, %v1067, %v1069
      %v1071 = vrot.slane %v510, 2
      %v1072 = vrot.slane %v511, 2
      %v1073 = vsel %vm1035, %v1071, %v1072
      %v1074 = vrot.slane %v512, 2
      %v1075 = vsel %vm1035, %v1072, %v1074
      %v1076 = vrot.slane %v513, 2
      %v1077 = vrot.slane %v514, 2
      %v1078 = vsel %vm1035, %v1076, %v1077
      %v1079 = vrot.slane %v515, 2
      %v1080 = vsel %vm1035, %v1077, %v1079
      %v1081 = vrot.slane %v516, 2
      %v1082 = vrot.slane %v517, 2
      %v1083 = vsel %vm1035, %v1081, %v1082
      %v1084 = vrot.slane %v518, 2
      %v1085 = vsel %vm1035, %v1082, %v1084
      %v1086 = vrot.slane %v519, 2
      %v1087 = vrot.slane %v520, 2
      %v1088 = vsel %vm1035, %v1086, %v1087
      %v1089 = vrot.slane %v521, 2
      %v1090 = vsel %vm1035, %v1087, %v1089
      %v1091 = vrot.slane %v522, 2
      %v1092 = vrot.slane %v523, 2
      %v1093 = vsel %vm1035, %v1091, %v1092
      %v1094 = vrot.slane %v524, 2
      %v1095 = vsel %vm1035, %v1092, %v1094
      %v1096 = vrot.slane %v525, 2
      %v1097 = vrot.slane %v526, 2
      %v1098 = vsel %vm1035, %v1096, %v1097
      %v1099 = vrot.slane %v527, 2
      %v1100 = vsel %vm1035, %v1097, %v1099
      %v1101 = vrot.slane %v528, 2
      %v1102 = vrot.slane %v529, 2
      %v1103 = vsel %vm1035, %v1101, %v1102
      %v1104 = vrot.slane %v530, 2
      %v1105 = vsel %vm1035, %v1102, %v1104
      %v1106 = vrot.slane %v531, 2
      %v1107 = vrot.slane %v532, 2
      %v1108 = vsel %vm1035, %v1106, %v1107
      %v1109 = vrot.slane %v533, 2
      %v1110 = vsel %vm1035, %v1107, %v1109
      %v1111 = vrot.slane %v534, 2
      %v1112 = vrot.slane %v535, 2
      %v1113 = vsel %vm1035, %v1111, %v1112
      %v1114 = vrot.slane %v536, 2
      %v1115 = vsel %vm1035, %v1112, %v1114
      %v1116 = vsel %vm296, %v1038, 0
      %v1118 = vsel %vm296, %v1040, 0
      %v1120 = vsel %vm296, %v1043, 0
      %v1122 = vsel %vm296, %v1045, 0
      %v1124 = vsel %vm296, %v1048, 0
      %v1126 = vsel %vm296, %v1050, 0
      %v1128 = vsel %vm296, %v1053, 0
      %v1130 = vsel %vm296, %v1055, 0
      %v1132 = vsel %vm296, %v1058, 0
      %v1134 = vsel %vm296, %v1060, 0
      %v1136 = vsel %vm296, %v1063, 0
      %v1138 = vsel %vm296, %v1065, 0
      %v1140 = vsel %vm296, %v1068, 0
      %v1142 = vsel %vm296, %v1070, 0
      %v1144 = vsel %vm296, %v1073, 0
      %v1146 = vsel %vm296, %v1075, 0
      %v1148 = vsel %vm296, %v1078, 0
      %v1150 = vsel %vm296, %v1080, 0
      %v1152 = vsel %vm296, %v1083, 0
      %v1154 = vsel %vm296, %v1085, 0
      %v1156 = vsel %vm296, %v1088, 0
      %v1158 = vsel %vm296, %v1090, 0
      %v1160 = vsel %vm296, %v1093, 0
      %v1162 = vsel %vm296, %v1095, 0
      %v1164 = vsel %vm296, %v1098, 0
      %v1166 = vsel %vm296, %v1100, 0
      %v1168 = vsel %vm296, %v1103, 0
      %v1170 = vsel %vm296, %v1105, 0
      %v1172 = vsel %vm296, %v1108, 0
      %v1174 = vsel %vm296, %v1110, 0
      %v1176 = vsel %vm296, %v1113, 0
      %v1178 = vsel %vm296, %v1115, 0
      %1180 = vmatpush.msra.mxu0 0.0
      %1181 = vmatpush.msra.mxu0 0.0
      %1182 = vmatpush.msra.mxu0 0.0
      %1183 = vmatpush.msra.mxu0 0.0
      %1184 = vmatpush.msra.mxu0 0.0
      %1185 = vmatpush.msra.mxu0 0.0
      %1186 = vmatpush.msra.mxu0 0.0
      %1187 = vmatpush.msra.mxu0 0.0
      %1188 = vmatpush.msra.mxu0 0.0
      %1189 = vmatpush.msra.mxu0 0.0
      %1190 = vmatpush.msra.mxu0 0.0
      %1191 = vmatpush.msra.mxu0 0.0
      %1192 = vmatpush.msra.mxu0 0.0
      %1193 = vmatpush.msra.mxu0 0.0
      %1194 = vmatpush.msra.mxu0 0.0
      %1195 = vmatpush.msra.mxu0 %v545
      %1196 = vmatmul.f32.gmra.mxu0 %v1116
      %v1197 = vpop.f32.mrf.mxu0
      %v1198 = vadd.f32 0.0, %v1197
      %1199 = vmatmul.f32.gmra.mxu0 %v1118
      %v1200 = vpop.f32.mrf.mxu0
      %v1201 = vadd.f32 0.0, %v1200
      %1202 = vmatmul.f32.gmra.mxu0 %v1120
      %v1203 = vpop.f32.mrf.mxu0
      %v1204 = vadd.f32 0.0, %v1203
      %1205 = vmatmul.f32.gmra.mxu0 %v1122
      %v1206 = vpop.f32.mrf.mxu0
      %v1207 = vadd.f32 0.0, %v1206
      %1208 = vmatmul.f32.gmra.mxu0 %v1124
      %v1209 = vpop.f32.mrf.mxu0
      %v1210 = vadd.f32 0.0, %v1209
      %1211 = vmatmul.f32.gmra.mxu0 %v1126
      %v1212 = vpop.f32.mrf.mxu0
      %v1213 = vadd.f32 0.0, %v1212
      %1214 = vmatmul.f32.gmra.mxu0 %v1128
      %v1215 = vpop.f32.mrf.mxu0
      %v1216 = vadd.f32 0.0, %v1215
      %1217 = vmatmul.f32.gmra.mxu0 %v1130
      %v1218 = vpop.f32.mrf.mxu0
      %v1219 = vadd.f32 0.0, %v1218
      %1220 = vmatmul.f32.gmra.mxu0 %v1132
      %v1221 = vpop.f32.mrf.mxu0
      %v1222 = vadd.f32 0.0, %v1221
      %1223 = vmatmul.f32.gmra.mxu0 %v1134
      %v1224 = vpop.f32.mrf.mxu0
      %v1225 = vadd.f32 0.0, %v1224
      %1226 = vmatmul.f32.gmra.mxu0 %v1136
      %v1227 = vpop.f32.mrf.mxu0
      %v1228 = vadd.f32 0.0, %v1227
      %1229 = vmatmul.f32.gmra.mxu0 %v1138
      %v1230 = vpop.f32.mrf.mxu0
      %v1231 = vadd.f32 0.0, %v1230
      %1232 = vmatmul.f32.gmra.mxu0 %v1140
      %v1233 = vpop.f32.mrf.mxu0
      %v1234 = vadd.f32 0.0, %v1233
      %1235 = vmatmul.f32.gmra.mxu0 %v1142
      %v1236 = vpop.f32.mrf.mxu0
      %v1237 = vadd.f32 0.0, %v1236
      %1238 = vmatmul.f32.gmra.mxu0 %v1144
      %v1239 = vpop.f32.mrf.mxu0
      %v1240 = vadd.f32 0.0, %v1239
      %1241 = vmatmul.f32.gmra.mxu0 %v1146
      %v1242 = vpop.f32.mrf.mxu0
      %v1243 = vadd.f32 0.0, %v1242
      %1244 = vmatmul.f32.gmra.mxu0 %v1148
      %v1245 = vpop.f32.mrf.mxu0
      %v1246 = vadd.f32 0.0, %v1245
      %1247 = vmatmul.f32.gmra.mxu0 %v1150
      %v1248 = vpop.f32.mrf.mxu0
      %v1249 = vadd.f32 0.0, %v1248
      %1250 = vmatmul.f32.gmra.mxu0 %v1152
      %v1251 = vpop.f32.mrf.mxu0
      %v1252 = vadd.f32 0.0, %v1251
      %1253 = vmatmul.f32.gmra.mxu0 %v1154
      %v1254 = vpop.f32.mrf.mxu0
      %v1255 = vadd.f32 0.0, %v1254
      %1256 = vmatmul.f32.gmra.mxu0 %v1156
      %v1257 = vpop.f32.mrf.mxu0
      %v1258 = vadd.f32 0.0, %v1257
      %1259 = vmatmul.f32.gmra.mxu0 %v1158
      %v1260 = vpop.f32.mrf.mxu0
      %v1261 = vadd.f32 0.0, %v1260
      %1262 = vmatmul.f32.gmra.mxu0 %v1160
      %v1263 = vpop.f32.mrf.mxu0
      %v1264 = vadd.f32 0.0, %v1263
      %1265 = vmatmul.f32.gmra.mxu0 %v1162
      %v1266 = vpop.f32.mrf.mxu0
      %v1267 = vadd.f32 0.0, %v1266
      %1268 = vmatmul.f32.gmra.mxu0 %v1164
      %v1269 = vpop.f32.mrf.mxu0
      %v1270 = vadd.f32 0.0, %v1269
      %1271 = vmatmul.f32.gmra.mxu0 %v1166
      %v1272 = vpop.f32.mrf.mxu0
      %v1273 = vadd.f32 0.0, %v1272
      %1274 = vmatmul.f32.gmra.mxu0 %v1168
      %v1275 = vpop.f32.mrf.mxu0
      %v1276 = vadd.f32 0.0, %v1275
      %1277 = vmatmul.f32.gmra.mxu0 %v1170
      %v1278 = vpop.f32.mrf.mxu0
      %v1279 = vadd.f32 0.0, %v1278
      %1280 = vmatmul.f32.gmra.mxu0 %v1172
      %v1281 = vpop.f32.mrf.mxu0
      %v1282 = vadd.f32 0.0, %v1281
      %1283 = vmatmul.f32.gmra.mxu0 %v1174
      %v1284 = vpop.f32.mrf.mxu0
      %v1285 = vadd.f32 0.0, %v1284
      %1286 = vmatmul.f32.gmra.mxu0 %v1176
      %v1287 = vpop.f32.mrf.mxu0
      %v1288 = vadd.f32 0.0, %v1287
      %1289 = vmatmul.f32.gmra.mxu0 %v1178
      %v1290 = vpop.f32.mrf.mxu0
      %v1291 = vadd.f32 0.0, %v1290
      %1292 = vdwg.mxu0
      %v1293 = vadd.f32 %v940, %v1198
      %v1294 = vadd.f32 %v943, %v1201
      %v1295 = vadd.f32 %v946, %v1204
      %v1296 = vadd.f32 %v949, %v1207
      %v1297 = vadd.f32 %v952, %v1210
      %v1298 = vadd.f32 %v955, %v1213
      %v1299 = vadd.f32 %v958, %v1216
      %v1300 = vadd.f32 %v961, %v1219
      %v1301 = vadd.f32 %v964, %v1222
      %v1302 = vadd.f32 %v967, %v1225
      %v1303 = vadd.f32 %v970, %v1228
      %v1304 = vadd.f32 %v973, %v1231
      %v1305 = vadd.f32 %v976, %v1234
      %v1306 = vadd.f32 %v979, %v1237
      %v1307 = vadd.f32 %v982, %v1240
      %v1308 = vadd.f32 %v985, %v1243
      %v1309 = vadd.f32 %v988, %v1246
      %v1310 = vadd.f32 %v991, %v1249
      %v1311 = vadd.f32 %v994, %v1252
      %v1312 = vadd.f32 %v997, %v1255
      %v1313 = vadd.f32 %v1000, %v1258
      %v1314 = vadd.f32 %v1003, %v1261
      %v1315 = vadd.f32 %v1006, %v1264
      %v1316 = vadd.f32 %v1009, %v1267
      %v1317 = vadd.f32 %v1012, %v1270
      %v1318 = vadd.f32 %v1015, %v1273
      %v1319 = vadd.f32 %v1018, %v1276
      %v1320 = vadd.f32 %v1021, %v1279
      %v1321 = vadd.f32 %v1024, %v1282
      %v1322 = vadd.f32 %v1027, %v1285
      %v1323 = vadd.f32 %v1030, %v1288
      %v1324 = vadd.f32 %v1033, %v1291
      %v1326 = vsel %vm296, %v537, 0
      %v1329 = vsel %vm296, %v538, 0
      %1331 = vmatpush.msra.mxu0 0.0
      %1332 = vmatpush.msra.mxu0 0.0
      %1333 = vmatpush.msra.mxu0 0.0
      %1334 = vmatpush.msra.mxu0 0.0
      %1335 = vmatpush.msra.mxu0 0.0
      %1336 = vmatpush.msra.mxu0 0.0
      %1337 = vmatpush.msra.mxu0 0.0
      %1338 = vmatpush.msra.mxu0 0.0
      %1339 = vmatpush.msra.mxu0 0.0
      %1340 = vmatpush.msra.mxu0 0.0
      %1341 = vmatpush.msra.mxu0 0.0
      %1342 = vmatpush.msra.mxu0 0.0
      %1343 = vmatpush.msra.mxu0 0.0
      %1344 = vmatpush.msra.mxu0 0.0
      %1345 = vmatpush.msra.mxu0 0.0
      %1346 = vmatpush.msra.mxu0 %v546
      %1347 = vmatmul.f32.gmra.mxu0 %v862
      %v1348 = vpop.f32.mrf.mxu0
      %v1349 = vadd.f32 0.0, %v1348
      %1350 = vmatmul.f32.gmra.mxu0 %v864
      %v1351 = vpop.f32.mrf.mxu0
      %v1352 = vadd.f32 0.0, %v1351
      %1353 = vmatmul.f32.gmra.mxu0 %v866
      %v1354 = vpop.f32.mrf.mxu0
      %v1355 = vadd.f32 0.0, %v1354
      %1356 = vmatmul.f32.gmra.mxu0 %v868
      %v1357 = vpop.f32.mrf.mxu0
      %v1358 = vadd.f32 0.0, %v1357
      %1359 = vmatmul.f32.gmra.mxu0 %v870
      %v1360 = vpop.f32.mrf.mxu0
      %v1361 = vadd.f32 0.0, %v1360
      %1362 = vmatmul.f32.gmra.mxu0 %v872
      %v1363 = vpop.f32.mrf.mxu0
      %v1364 = vadd.f32 0.0, %v1363
      %1365 = vmatmul.f32.gmra.mxu0 %v874
      %v1366 = vpop.f32.mrf.mxu0
      %v1367 = vadd.f32 0.0, %v1366
      %1368 = vmatmul.f32.gmra.mxu0 %v876
      %v1369 = vpop.f32.mrf.mxu0
      %v1370 = vadd.f32 0.0, %v1369
      %1371 = vmatmul.f32.gmra.mxu0 %v878
      %v1372 = vpop.f32.mrf.mxu0
      %v1373 = vadd.f32 0.0, %v1372
      %1374 = vmatmul.f32.gmra.mxu0 %v880
      %v1375 = vpop.f32.mrf.mxu0
      %v1376 = vadd.f32 0.0, %v1375
      %1377 = vmatmul.f32.gmra.mxu0 %v882
      %v1378 = vpop.f32.mrf.mxu0
      %v1379 = vadd.f32 0.0, %v1378
      %1380 = vmatmul.f32.gmra.mxu0 %v884
      %v1381 = vpop.f32.mrf.mxu0
      %v1382 = vadd.f32 0.0, %v1381
      %1383 = vmatmul.f32.gmra.mxu0 %v886
      %v1384 = vpop.f32.mrf.mxu0
      %v1385 = vadd.f32 0.0, %v1384
      %1386 = vmatmul.f32.gmra.mxu0 %v888
      %v1387 = vpop.f32.mrf.mxu0
      %v1388 = vadd.f32 0.0, %v1387
      %1389 = vmatmul.f32.gmra.mxu0 %v890
      %v1390 = vpop.f32.mrf.mxu0
      %v1391 = vadd.f32 0.0, %v1390
      %1392 = vmatmul.f32.gmra.mxu0 %v892
      %v1393 = vpop.f32.mrf.mxu0
      %v1394 = vadd.f32 0.0, %v1393
      %1395 = vmatmul.f32.gmra.mxu0 %v894
      %v1396 = vpop.f32.mrf.mxu0
      %v1397 = vadd.f32 0.0, %v1396
      %1398 = vmatmul.f32.gmra.mxu0 %v896
      %v1399 = vpop.f32.mrf.mxu0
      %v1400 = vadd.f32 0.0, %v1399
      %1401 = vmatmul.f32.gmra.mxu0 %v898
      %v1402 = vpop.f32.mrf.mxu0
      %v1403 = vadd.f32 0.0, %v1402
      %1404 = vmatmul.f32.gmra.mxu0 %v900
      %v1405 = vpop.f32.mrf.mxu0
      %v1406 = vadd.f32 0.0, %v1405
      %1407 = vmatmul.f32.gmra.mxu0 %v902
      %v1408 = vpop.f32.mrf.mxu0
      %v1409 = vadd.f32 0.0, %v1408
      %1410 = vmatmul.f32.gmra.mxu0 %v904
      %v1411 = vpop.f32.mrf.mxu0
      %v1412 = vadd.f32 0.0, %v1411
      %1413 = vmatmul.f32.gmra.mxu0 %v906
      %v1414 = vpop.f32.mrf.mxu0
      %v1415 = vadd.f32 0.0, %v1414
      %1416 = vmatmul.f32.gmra.mxu0 %v908
      %v1417 = vpop.f32.mrf.mxu0
      %v1418 = vadd.f32 0.0, %v1417
      %1419 = vmatmul.f32.gmra.mxu0 %v910
      %v1420 = vpop.f32.mrf.mxu0
      %v1421 = vadd.f32 0.0, %v1420
      %1422 = vmatmul.f32.gmra.mxu0 %v912
      %v1423 = vpop.f32.mrf.mxu0
      %v1424 = vadd.f32 0.0, %v1423
      %1425 = vmatmul.f32.gmra.mxu0 %v914
      %v1426 = vpop.f32.mrf.mxu0
      %v1427 = vadd.f32 0.0, %v1426
      %1428 = vmatmul.f32.gmra.mxu0 %v916
      %v1429 = vpop.f32.mrf.mxu0
      %v1430 = vadd.f32 0.0, %v1429
      %1431 = vmatmul.f32.gmra.mxu0 %v918
      %v1432 = vpop.f32.mrf.mxu0
      %v1433 = vadd.f32 0.0, %v1432
      %1434 = vmatmul.f32.gmra.mxu0 %v920
      %v1435 = vpop.f32.mrf.mxu0
      %v1436 = vadd.f32 0.0, %v1435
      %1437 = vmatmul.f32.gmra.mxu0 %v1326
      %v1438 = vpop.f32.mrf.mxu0
      %v1439 = vadd.f32 0.0, %v1438
      %1440 = vmatmul.f32.gmra.mxu0 %v1329
      %v1441 = vpop.f32.mrf.mxu0
      %v1442 = vadd.f32 0.0, %v1441
      %1443 = vdwg.mxu0
      %v1444 = vadd.f32 %v1293, %v1349
      %v1445 = vadd.f32 %v1294, %v1352
      %v1446 = vadd.f32 %v1295, %v1355
      %v1447 = vadd.f32 %v1296, %v1358
      %v1448 = vadd.f32 %v1297, %v1361
      %v1449 = vadd.f32 %v1298, %v1364
      %v1450 = vadd.f32 %v1299, %v1367
      %v1451 = vadd.f32 %v1300, %v1370
      %v1452 = vadd.f32 %v1301, %v1373
      %v1453 = vadd.f32 %v1302, %v1376
      %v1454 = vadd.f32 %v1303, %v1379
      %v1455 = vadd.f32 %v1304, %v1382
      %v1456 = vadd.f32 %v1305, %v1385
      %v1457 = vadd.f32 %v1306, %v1388
      %v1458 = vadd.f32 %v1307, %v1391
      %v1459 = vadd.f32 %v1308, %v1394
      %v1460 = vadd.f32 %v1309, %v1397
      %v1461 = vadd.f32 %v1310, %v1400
      %v1462 = vadd.f32 %v1311, %v1403
      %v1463 = vadd.f32 %v1312, %v1406
      %v1464 = vadd.f32 %v1313, %v1409
      %v1465 = vadd.f32 %v1314, %v1412
      %v1466 = vadd.f32 %v1315, %v1415
      %v1467 = vadd.f32 %v1316, %v1418
      %v1468 = vadd.f32 %v1317, %v1421
      %v1469 = vadd.f32 %v1318, %v1424
      %v1470 = vadd.f32 %v1319, %v1427
      %v1471 = vadd.f32 %v1320, %v1430
      %v1472 = vadd.f32 %v1321, %v1433
      %v1473 = vadd.f32 %v1322, %v1436
      %v1474 = vadd.f32 %v1323, %v1439
      %v1475 = vadd.f32 %v1324, %v1442
      %v1477 = vrot.slane %v537, 1
      %v1478 = vrot.slane %v538, 1
      %v1479 = vsel %vm600, %v1477, %v1478
      %v1480 = vrot.slane %v539, 1
      %v1481 = vsel %vm600, %v1478, %v1480
      %v1482 = vsel %vm296, %v1479, 0
      %v1484 = vsel %vm296, %v1481, 0
      %1486 = vmatpush.msra.mxu0 0.0
      %1487 = vmatpush.msra.mxu0 0.0
      %1488 = vmatpush.msra.mxu0 0.0
      %1489 = vmatpush.msra.mxu0 0.0
      %1490 = vmatpush.msra.mxu0 0.0
      %1491 = vmatpush.msra.mxu0 0.0
      %1492 = vmatpush.msra.mxu0 0.0
      %1493 = vmatpush.msra.mxu0 0.0
      %1494 = vmatpush.msra.mxu0 0.0
      %1495 = vmatpush.msra.mxu0 0.0
      %1496 = vmatpush.msra.mxu0 0.0
      %1497 = vmatpush.msra.mxu0 0.0
      %1498 = vmatpush.msra.mxu0 0.0
      %1499 = vmatpush.msra.mxu0 0.0
      %1500 = vmatpush.msra.mxu0 0.0
      %1501 = vmatpush.msra.mxu0 %v547
      %1502 = vmatmul.f32.gmra.mxu0 %v685
      %v1503 = vpop.f32.mrf.mxu0
      %v1504 = vadd.f32 0.0, %v1503
      %1505 = vmatmul.f32.gmra.mxu0 %v687
      %v1506 = vpop.f32.mrf.mxu0
      %v1507 = vadd.f32 0.0, %v1506
      %1508 = vmatmul.f32.gmra.mxu0 %v689
      %v1509 = vpop.f32.mrf.mxu0
      %v1510 = vadd.f32 0.0, %v1509
      %1511 = vmatmul.f32.gmra.mxu0 %v691
      %v1512 = vpop.f32.mrf.mxu0
      %v1513 = vadd.f32 0.0, %v1512
      %1514 = vmatmul.f32.gmra.mxu0 %v693
      %v1515 = vpop.f32.mrf.mxu0
      %v1516 = vadd.f32 0.0, %v1515
      %1517 = vmatmul.f32.gmra.mxu0 %v695
      %v1518 = vpop.f32.mrf.mxu0
      %v1519 = vadd.f32 0.0, %v1518
      %1520 = vmatmul.f32.gmra.mxu0 %v697
      %v1521 = vpop.f32.mrf.mxu0
      %v1522 = vadd.f32 0.0, %v1521
      %1523 = vmatmul.f32.gmra.mxu0 %v699
      %v1524 = vpop.f32.mrf.mxu0
      %v1525 = vadd.f32 0.0, %v1524
      %1526 = vmatmul.f32.gmra.mxu0 %v701
      %v1527 = vpop.f32.mrf.mxu0
      %v1528 = vadd.f32 0.0, %v1527
      %1529 = vmatmul.f32.gmra.mxu0 %v703
      %v1530 = vpop.f32.mrf.mxu0
      %v1531 = vadd.f32 0.0, %v1530
      %1532 = vmatmul.f32.gmra.mxu0 %v705
      %v1533 = vpop.f32.mrf.mxu0
      %v1534 = vadd.f32 0.0, %v1533
      %1535 = vmatmul.f32.gmra.mxu0 %v707
      %v1536 = vpop.f32.mrf.mxu0
      %v1537 = vadd.f32 0.0, %v1536
      %1538 = vmatmul.f32.gmra.mxu0 %v709
      %v1539 = vpop.f32.mrf.mxu0
      %v1540 = vadd.f32 0.0, %v1539
      %1541 = vmatmul.f32.gmra.mxu0 %v711
      %v1542 = vpop.f32.mrf.mxu0
      %v1543 = vadd.f32 0.0, %v1542
      %1544 = vmatmul.f32.gmra.mxu0 %v713
      %v1545 = vpop.f32.mrf.mxu0
      %v1546 = vadd.f32 0.0, %v1545
      %1547 = vmatmul.f32.gmra.mxu0 %v715
      %v1548 = vpop.f32.mrf.mxu0
      %v1549 = vadd.f32 0.0, %v1548
      %1550 = vmatmul.f32.gmra.mxu0 %v717
      %v1551 = vpop.f32.mrf.mxu0
      %v1552 = vadd.f32 0.0, %v1551
      %1553 = vmatmul.f32.gmra.mxu0 %v719
      %v1554 = vpop.f32.mrf.mxu0
      %v1555 = vadd.f32 0.0, %v1554
      %1556 = vmatmul.f32.gmra.mxu0 %v721
      %v1557 = vpop.f32.mrf.mxu0
      %v1558 = vadd.f32 0.0, %v1557
      %1559 = vmatmul.f32.gmra.mxu0 %v723
      %v1560 = vpop.f32.mrf.mxu0
      %v1561 = vadd.f32 0.0, %v1560
      %1562 = vmatmul.f32.gmra.mxu0 %v725
      %v1563 = vpop.f32.mrf.mxu0
      %v1564 = vadd.f32 0.0, %v1563
      %1565 = vmatmul.f32.gmra.mxu0 %v727
      %v1566 = vpop.f32.mrf.mxu0
      %v1567 = vadd.f32 0.0, %v1566
      %1568 = vmatmul.f32.gmra.mxu0 %v729
      %v1569 = vpop.f32.mrf.mxu0
      %v1570 = vadd.f32 0.0, %v1569
      %1571 = vmatmul.f32.gmra.mxu0 %v731
      %v1572 = vpop.f32.mrf.mxu0
      %v1573 = vadd.f32 0.0, %v1572
      %1574 = vmatmul.f32.gmra.mxu0 %v733
      %v1575 = vpop.f32.mrf.mxu0
      %v1576 = vadd.f32 0.0, %v1575
      %1577 = vmatmul.f32.gmra.mxu0 %v735
      %v1578 = vpop.f32.mrf.mxu0
      %v1579 = vadd.f32 0.0, %v1578
      %1580 = vmatmul.f32.gmra.mxu0 %v737
      %v1581 = vpop.f32.mrf.mxu0
      %v1582 = vadd.f32 0.0, %v1581
      %1583 = vmatmul.f32.gmra.mxu0 %v739
      %v1584 = vpop.f32.mrf.mxu0
      %v1585 = vadd.f32 0.0, %v1584
      %1586 = vmatmul.f32.gmra.mxu0 %v741
      %v1587 = vpop.f32.mrf.mxu0
      %v1588 = vadd.f32 0.0, %v1587
      %1589 = vmatmul.f32.gmra.mxu0 %v743
      %v1590 = vpop.f32.mrf.mxu0
      %v1591 = vadd.f32 0.0, %v1590
      %1592 = vmatmul.f32.gmra.mxu0 %v1482
      %v1593 = vpop.f32.mrf.mxu0
      %v1594 = vadd.f32 0.0, %v1593
      %1595 = vmatmul.f32.gmra.mxu0 %v1484
      %v1596 = vpop.f32.mrf.mxu0
      %v1597 = vadd.f32 0.0, %v1596
      %1598 = vdwg.mxu0
      %v1599 = vadd.f32 %v1444, %v1504
      %v1600 = vadd.f32 %v1445, %v1507
      %v1601 = vadd.f32 %v1446, %v1510
      %v1602 = vadd.f32 %v1447, %v1513
      %v1603 = vadd.f32 %v1448, %v1516
      %v1604 = vadd.f32 %v1449, %v1519
      %v1605 = vadd.f32 %v1450, %v1522
      %v1606 = vadd.f32 %v1451, %v1525
      %v1607 = vadd.f32 %v1452, %v1528
      %v1608 = vadd.f32 %v1453, %v1531
      %v1609 = vadd.f32 %v1454, %v1534
      %v1610 = vadd.f32 %v1455, %v1537
      %v1611 = vadd.f32 %v1456, %v1540
      %v1612 = vadd.f32 %v1457, %v1543
      %v1613 = vadd.f32 %v1458, %v1546
      %v1614 = vadd.f32 %v1459, %v1549
      %v1615 = vadd.f32 %v1460, %v1552
      %v1616 = vadd.f32 %v1461, %v1555
      %v1617 = vadd.f32 %v1462, %v1558
      %v1618 = vadd.f32 %v1463, %v1561
      %v1619 = vadd.f32 %v1464, %v1564
      %v1620 = vadd.f32 %v1465, %v1567
      %v1621 = vadd.f32 %v1466, %v1570
      %v1622 = vadd.f32 %v1467, %v1573
      %v1623 = vadd.f32 %v1468, %v1576
      %v1624 = vadd.f32 %v1469, %v1579
      %v1625 = vadd.f32 %v1470, %v1582
      %v1626 = vadd.f32 %v1471, %v1585
      %v1627 = vadd.f32 %v1472, %v1588
      %v1628 = vadd.f32 %v1473, %v1591
      %v1629 = vadd.f32 %v1474, %v1594
      %v1630 = vadd.f32 %v1475, %v1597
      %v1631 = vrot.slane %v537, 2
      %v1632 = vrot.slane %v538, 2
      %v1633 = vsel %vm1035, %v1631, %v1632
      %v1634 = vrot.slane %v539, 2
      %v1635 = vsel %vm1035, %v1632, %v1634
      %v1636 = vsel %vm296, %v1633, 0
      %v1638 = vsel %vm296, %v1635, 0
      %1640 = vmatpush.msra.mxu0 0.0
      %1641 = vmatpush.msra.mxu0 0.0
      %1642 = vmatpush.msra.mxu0 0.0
      %1643 = vmatpush.msra.mxu0 0.0
      %1644 = vmatpush.msra.mxu0 0.0
      %1645 = vmatpush.msra.mxu0 0.0
      %1646 = vmatpush.msra.mxu0 0.0
      %1647 = vmatpush.msra.mxu0 0.0
      %1648 = vmatpush.msra.mxu0 0.0
      %1649 = vmatpush.msra.mxu0 0.0
      %1650 = vmatpush.msra.mxu0 0.0
      %1651 = vmatpush.msra.mxu0 0.0
      %1652 = vmatpush.msra.mxu0 0.0
      %1653 = vmatpush.msra.mxu0 0.0
      %1654 = vmatpush.msra.mxu0 0.0
      %1655 = vmatpush.msra.mxu0 %v548
      %1656 = vmatmul.f32.gmra.mxu0 %v1120
      %v1657 = vpop.f32.mrf.mxu0
      %v1658 = vadd.f32 0.0, %v1657
      %1659 = vmatmul.f32.gmra.mxu0 %v1122
      %v1660 = vpop.f32.mrf.mxu0
      %v1661 = vadd.f32 0.0, %v1660
      %1662 = vmatmul.f32.gmra.mxu0 %v1124
      %v1663 = vpop.f32.mrf.mxu0
      %v1664 = vadd.f32 0.0, %v1663
      %1665 = vmatmul.f32.gmra.mxu0 %v1126
      %v1666 = vpop.f32.mrf.mxu0
      %v1667 = vadd.f32 0.0, %v1666
      %1668 = vmatmul.f32.gmra.mxu0 %v1128
      %v1669 = vpop.f32.mrf.mxu0
      %v1670 = vadd.f32 0.0, %v1669
      %1671 = vmatmul.f32.gmra.mxu0 %v1130
      %v1672 = vpop.f32.mrf.mxu0
      %v1673 = vadd.f32 0.0, %v1672
      %1674 = vmatmul.f32.gmra.mxu0 %v1132
      %v1675 = vpop.f32.mrf.mxu0
      %v1676 = vadd.f32 0.0, %v1675
      %1677 = vmatmul.f32.gmra.mxu0 %v1134
      %v1678 = vpop.f32.mrf.mxu0
      %v1679 = vadd.f32 0.0, %v1678
      %1680 = vmatmul.f32.gmra.mxu0 %v1136
      %v1681 = vpop.f32.mrf.mxu0
      %v1682 = vadd.f32 0.0, %v1681
      %1683 = vmatmul.f32.gmra.mxu0 %v1138
      %v1684 = vpop.f32.mrf.mxu0
      %v1685 = vadd.f32 0.0, %v1684
      %1686 = vmatmul.f32.gmra.mxu0 %v1140
      %v1687 = vpop.f32.mrf.mxu0
      %v1688 = vadd.f32 0.0, %v1687
      %1689 = vmatmul.f32.gmra.mxu0 %v1142
      %v1690 = vpop.f32.mrf.mxu0
      %v1691 = vadd.f32 0.0, %v1690
      %1692 = vmatmul.f32.gmra.mxu0 %v1144
      %v1693 = vpop.f32.mrf.mxu0
      %v1694 = vadd.f32 0.0, %v1693
      %1695 = vmatmul.f32.gmra.mxu0 %v1146
      %v1696 = vpop.f32.mrf.mxu0
      %v1697 = vadd.f32 0.0, %v1696
      %1698 = vmatmul.f32.gmra.mxu0 %v1148
      %v1699 = vpop.f32.mrf.mxu0
      %v1700 = vadd.f32 0.0, %v1699
      %1701 = vmatmul.f32.gmra.mxu0 %v1150
      %v1702 = vpop.f32.mrf.mxu0
      %v1703 = vadd.f32 0.0, %v1702
      %1704 = vmatmul.f32.gmra.mxu0 %v1152
      %v1705 = vpop.f32.mrf.mxu0
      %v1706 = vadd.f32 0.0, %v1705
      %1707 = vmatmul.f32.gmra.mxu0 %v1154
      %v1708 = vpop.f32.mrf.mxu0
      %v1709 = vadd.f32 0.0, %v1708
      %1710 = vmatmul.f32.gmra.mxu0 %v1156
      %v1711 = vpop.f32.mrf.mxu0
      %v1712 = vadd.f32 0.0, %v1711
      %1713 = vmatmul.f32.gmra.mxu0 %v1158
      %v1714 = vpop.f32.mrf.mxu0
      %v1715 = vadd.f32 0.0, %v1714
      %1716 = vmatmul.f32.gmra.mxu0 %v1160
      %v1717 = vpop.f32.mrf.mxu0
      %v1718 = vadd.f32 0.0, %v1717
      %1719 = vmatmul.f32.gmra.mxu0 %v1162
      %v1720 = vpop.f32.mrf.mxu0
      %v1721 = vadd.f32 0.0, %v1720
      %1722 = vmatmul.f32.gmra.mxu0 %v1164
      %v1723 = vpop.f32.mrf.mxu0
      %v1724 = vadd.f32 0.0, %v1723
      %1725 = vmatmul.f32.gmra.mxu0 %v1166
      %v1726 = vpop.f32.mrf.mxu0
      %v1727 = vadd.f32 0.0, %v1726
      %1728 = vmatmul.f32.gmra.mxu0 %v1168
      %v1729 = vpop.f32.mrf.mxu0
      %v1730 = vadd.f32 0.0, %v1729
      %1731 = vmatmul.f32.gmra.mxu0 %v1170
      %v1732 = vpop.f32.mrf.mxu0
      %v1733 = vadd.f32 0.0, %v1732
      %1734 = vmatmul.f32.gmra.mxu0 %v1172
      %v1735 = vpop.f32.mrf.mxu0
      %v1736 = vadd.f32 0.0, %v1735
      %1737 = vmatmul.f32.gmra.mxu0 %v1174
      %v1738 = vpop.f32.mrf.mxu0
      %v1739 = vadd.f32 0.0, %v1738
      %1740 = vmatmul.f32.gmra.mxu0 %v1176
      %v1741 = vpop.f32.mrf.mxu0
      %v1742 = vadd.f32 0.0, %v1741
      %1743 = vmatmul.f32.gmra.mxu0 %v1178
      %v1744 = vpop.f32.mrf.mxu0
      %v1745 = vadd.f32 0.0, %v1744
      %1746 = vmatmul.f32.gmra.mxu0 %v1636
      %v1747 = vpop.f32.mrf.mxu0
      %v1748 = vadd.f32 0.0, %v1747
      %1749 = vmatmul.f32.gmra.mxu0 %v1638
      %v1750 = vpop.f32.mrf.mxu0
      %v1751 = vadd.f32 0.0, %v1750
      %1752 = vdwg.mxu0
      %v1753 = vadd.f32 %v1599, %v1658
      %v1754 = vadd.f32 %v1600, %v1661
      %v1755 = vadd.f32 %v1601, %v1664
      %v1756 = vadd.f32 %v1602, %v1667
      %v1757 = vadd.f32 %v1603, %v1670
      %v1758 = vadd.f32 %v1604, %v1673
      %v1759 = vadd.f32 %v1605, %v1676
      %v1760 = vadd.f32 %v1606, %v1679
      %v1761 = vadd.f32 %v1607, %v1682
      %v1762 = vadd.f32 %v1608, %v1685
      %v1763 = vadd.f32 %v1609, %v1688
      %v1764 = vadd.f32 %v1610, %v1691
      %v1765 = vadd.f32 %v1611, %v1694
      %v1766 = vadd.f32 %v1612, %v1697
      %v1767 = vadd.f32 %v1613, %v1700
      %v1768 = vadd.f32 %v1614, %v1703
      %v1769 = vadd.f32 %v1615, %v1706
      %v1770 = vadd.f32 %v1616, %v1709
      %v1771 = vadd.f32 %v1617, %v1712
      %v1772 = vadd.f32 %v1618, %v1715
      %v1773 = vadd.f32 %v1619, %v1718
      %v1774 = vadd.f32 %v1620, %v1721
      %v1775 = vadd.f32 %v1621, %v1724
      %v1776 = vadd.f32 %v1622, %v1727
      %v1777 = vadd.f32 %v1623, %v1730
      %v1778 = vadd.f32 %v1624, %v1733
      %v1779 = vadd.f32 %v1625, %v1736
      %v1780 = vadd.f32 %v1626, %v1739
      %v1781 = vadd.f32 %v1627, %v1742
      %v1782 = vadd.f32 %v1628, %v1745
      %v1783 = vadd.f32 %v1629, %v1748
      %v1784 = vadd.f32 %v1630, %v1751
      %v1786 = vsel %vm296, %v540, 0
      %v1789 = vsel %vm296, %v541, 0
      %1791 = vmatpush.msra.mxu0 0.0
      %1792 = vmatpush.msra.mxu0 0.0
      %1793 = vmatpush.msra.mxu0 0.0
      %1794 = vmatpush.msra.mxu0 0.0
      %1795 = vmatpush.msra.mxu0 0.0
      %1796 = vmatpush.msra.mxu0 0.0
      %1797 = vmatpush.msra.mxu0 0.0
      %1798 = vmatpush.msra.mxu0 0.0
      %1799 = vmatpush.msra.mxu0 0.0
      %1800 = vmatpush.msra.mxu0 0.0
      %1801 = vmatpush.msra.mxu0 0.0
      %1802 = vmatpush.msra.mxu0 0.0
      %1803 = vmatpush.msra.mxu0 0.0
      %1804 = vmatpush.msra.mxu0 0.0
      %1805 = vmatpush.msra.mxu0 0.0
      %1806 = vmatpush.msra.mxu0 %v549
      %1807 = vmatmul.f32.gmra.mxu0 %v866
      %v1808 = vpop.f32.mrf.mxu0
      %v1809 = vadd.f32 0.0, %v1808
      %1810 = vmatmul.f32.gmra.mxu0 %v868
      %v1811 = vpop.f32.mrf.mxu0
      %v1812 = vadd.f32 0.0, %v1811
      %1813 = vmatmul.f32.gmra.mxu0 %v870
      %v1814 = vpop.f32.mrf.mxu0
      %v1815 = vadd.f32 0.0, %v1814
      %1816 = vmatmul.f32.gmra.mxu0 %v872
      %v1817 = vpop.f32.mrf.mxu0
      %v1818 = vadd.f32 0.0, %v1817
      %1819 = vmatmul.f32.gmra.mxu0 %v874
      %v1820 = vpop.f32.mrf.mxu0
      %v1821 = vadd.f32 0.0, %v1820
      %1822 = vmatmul.f32.gmra.mxu0 %v876
      %v1823 = vpop.f32.mrf.mxu0
      %v1824 = vadd.f32 0.0, %v1823
      %1825 = vmatmul.f32.gmra.mxu0 %v878
      %v1826 = vpop.f32.mrf.mxu0
      %v1827 = vadd.f32 0.0, %v1826
      %1828 = vmatmul.f32.gmra.mxu0 %v880
      %v1829 = vpop.f32.mrf.mxu0
      %v1830 = vadd.f32 0.0, %v1829
      %1831 = vmatmul.f32.gmra.mxu0 %v882
      %v1832 = vpop.f32.mrf.mxu0
      %v1833 = vadd.f32 0.0, %v1832
      %1834 = vmatmul.f32.gmra.mxu0 %v884
      %v1835 = vpop.f32.mrf.mxu0
      %v1836 = vadd.f32 0.0, %v1835
      %1837 = vmatmul.f32.gmra.mxu0 %v886
      %v1838 = vpop.f32.mrf.mxu0
      %v1839 = vadd.f32 0.0, %v1838
      %1840 = vmatmul.f32.gmra.mxu0 %v888
      %v1841 = vpop.f32.mrf.mxu0
      %v1842 = vadd.f32 0.0, %v1841
      %1843 = vmatmul.f32.gmra.mxu0 %v890
      %v1844 = vpop.f32.mrf.mxu0
      %v1845 = vadd.f32 0.0, %v1844
      %1846 = vmatmul.f32.gmra.mxu0 %v892
      %v1847 = vpop.f32.mrf.mxu0
      %v1848 = vadd.f32 0.0, %v1847
      %1849 = vmatmul.f32.gmra.mxu0 %v894
      %v1850 = vpop.f32.mrf.mxu0
      %v1851 = vadd.f32 0.0, %v1850
      %1852 = vmatmul.f32.gmra.mxu0 %v896
      %v1853 = vpop.f32.mrf.mxu0
      %v1854 = vadd.f32 0.0, %v1853
      %1855 = vmatmul.f32.gmra.mxu0 %v898
      %v1856 = vpop.f32.mrf.mxu0
      %v1857 = vadd.f32 0.0, %v1856
      %1858 = vmatmul.f32.gmra.mxu0 %v900
      %v1859 = vpop.f32.mrf.mxu0
      %v1860 = vadd.f32 0.0, %v1859
      %1861 = vmatmul.f32.gmra.mxu0 %v902
      %v1862 = vpop.f32.mrf.mxu0
      %v1863 = vadd.f32 0.0, %v1862
      %1864 = vmatmul.f32.gmra.mxu0 %v904
      %v1865 = vpop.f32.mrf.mxu0
      %v1866 = vadd.f32 0.0, %v1865
      %1867 = vmatmul.f32.gmra.mxu0 %v906
      %v1868 = vpop.f32.mrf.mxu0
      %v1869 = vadd.f32 0.0, %v1868
      %1870 = vmatmul.f32.gmra.mxu0 %v908
      %v1871 = vpop.f32.mrf.mxu0
      %v1872 = vadd.f32 0.0, %v1871
      %1873 = vmatmul.f32.gmra.mxu0 %v910
      %v1874 = vpop.f32.mrf.mxu0
      %v1875 = vadd.f32 0.0, %v1874
      %1876 = vmatmul.f32.gmra.mxu0 %v912
      %v1877 = vpop.f32.mrf.mxu0
      %v1878 = vadd.f32 0.0, %v1877
      %1879 = vmatmul.f32.gmra.mxu0 %v914
      %v1880 = vpop.f32.mrf.mxu0
      %v1881 = vadd.f32 0.0, %v1880
      %1882 = vmatmul.f32.gmra.mxu0 %v916
      %v1883 = vpop.f32.mrf.mxu0
      %v1884 = vadd.f32 0.0, %v1883
      %1885 = vmatmul.f32.gmra.mxu0 %v918
      %v1886 = vpop.f32.mrf.mxu0
      %v1887 = vadd.f32 0.0, %v1886
      %1888 = vmatmul.f32.gmra.mxu0 %v920
      %v1889 = vpop.f32.mrf.mxu0
      %v1890 = vadd.f32 0.0, %v1889
      %1891 = vmatmul.f32.gmra.mxu0 %v1326
      %v1892 = vpop.f32.mrf.mxu0
      %v1893 = vadd.f32 0.0, %v1892
      %1894 = vmatmul.f32.gmra.mxu0 %v1329
      %v1895 = vpop.f32.mrf.mxu0
      %v1896 = vadd.f32 0.0, %v1895
      %1897 = vmatmul.f32.gmra.mxu0 %v1786
      %v1898 = vpop.f32.mrf.mxu0
      %v1899 = vadd.f32 0.0, %v1898
      %1900 = vmatmul.f32.gmra.mxu0 %v1789
      %v1901 = vpop.f32.mrf.mxu0
      %v1902 = vadd.f32 0.0, %v1901
      %1903 = vdwg.mxu0
      %v1904 = vadd.f32 %v1753, %v1809
      %v1905 = vadd.f32 %v1754, %v1812
      %v1906 = vadd.f32 %v1755, %v1815
      %v1907 = vadd.f32 %v1756, %v1818
      %v1908 = vadd.f32 %v1757, %v1821
      %v1909 = vadd.f32 %v1758, %v1824
      %v1910 = vadd.f32 %v1759, %v1827
      %v1911 = vadd.f32 %v1760, %v1830
      %v1912 = vadd.f32 %v1761, %v1833
      %v1913 = vadd.f32 %v1762, %v1836
      %v1914 = vadd.f32 %v1763, %v1839
      %v1915 = vadd.f32 %v1764, %v1842
      %v1916 = vadd.f32 %v1765, %v1845
      %v1917 = vadd.f32 %v1766, %v1848
      %v1918 = vadd.f32 %v1767, %v1851
      %v1919 = vadd.f32 %v1768, %v1854
      %v1920 = vadd.f32 %v1769, %v1857
      %v1921 = vadd.f32 %v1770, %v1860
      %v1922 = vadd.f32 %v1771, %v1863
      %v1923 = vadd.f32 %v1772, %v1866
      %v1924 = vadd.f32 %v1773, %v1869
      %v1925 = vadd.f32 %v1774, %v1872
      %v1926 = vadd.f32 %v1775, %v1875
      %v1927 = vadd.f32 %v1776, %v1878
      %v1928 = vadd.f32 %v1777, %v1881
      %v1929 = vadd.f32 %v1778, %v1884
      %v1930 = vadd.f32 %v1779, %v1887
      %v1931 = vadd.f32 %v1780, %v1890
      %v1932 = vadd.f32 %v1781, %v1893
      %v1933 = vadd.f32 %v1782, %v1896
      %v1934 = vadd.f32 %v1783, %v1899
      %v1935 = vadd.f32 %v1784, %v1902
      %v1937 = vrot.slane %v540, 1
      %v1938 = vrot.slane %v541, 1
      %v1939 = vsel %vm600, %v1937, %v1938
      %v1940 = vrot.slane %v542, 1
      %v1941 = vsel %vm600, %v1938, %v1940
      %v1942 = vsel %vm296, %v1939, 0
      %v1944 = vsel %vm296, %v1941, 0
      %1946 = vmatpush.msra.mxu0 0.0
      %1947 = vmatpush.msra.mxu0 0.0
      %1948 = vmatpush.msra.mxu0 0.0
      %1949 = vmatpush.msra.mxu0 0.0
      %1950 = vmatpush.msra.mxu0 0.0
      %1951 = vmatpush.msra.mxu0 0.0
      %1952 = vmatpush.msra.mxu0 0.0
      %1953 = vmatpush.msra.mxu0 0.0
      %1954 = vmatpush.msra.mxu0 0.0
      %1955 = vmatpush.msra.mxu0 0.0
      %1956 = vmatpush.msra.mxu0 0.0
      %1957 = vmatpush.msra.mxu0 0.0
      %1958 = vmatpush.msra.mxu0 0.0
      %1959 = vmatpush.msra.mxu0 0.0
      %1960 = vmatpush.msra.mxu0 0.0
      %1961 = vmatpush.msra.mxu0 %v550
      %1962 = vmatmul.f32.gmra.mxu0 %v689
      %v1963 = vpop.f32.mrf.mxu0
      %v1964 = vadd.f32 0.0, %v1963
      %1965 = vmatmul.f32.gmra.mxu0 %v691
      %v1966 = vpop.f32.mrf.mxu0
      %v1967 = vadd.f32 0.0, %v1966
      %1968 = vmatmul.f32.gmra.mxu0 %v693
      %v1969 = vpop.f32.mrf.mxu0
      %v1970 = vadd.f32 0.0, %v1969
      %1971 = vmatmul.f32.gmra.mxu0 %v695
      %v1972 = vpop.f32.mrf.mxu0
      %v1973 = vadd.f32 0.0, %v1972
      %1974 = vmatmul.f32.gmra.mxu0 %v697
      %v1975 = vpop.f32.mrf.mxu0
      %v1976 = vadd.f32 0.0, %v1975
      %1977 = vmatmul.f32.gmra.mxu0 %v699
      %v1978 = vpop.f32.mrf.mxu0
      %v1979 = vadd.f32 0.0, %v1978
      %1980 = vmatmul.f32.gmra.mxu0 %v701
      %v1981 = vpop.f32.mrf.mxu0
      %v1982 = vadd.f32 0.0, %v1981
      %1983 = vmatmul.f32.gmra.mxu0 %v703
      %v1984 = vpop.f32.mrf.mxu0
      %v1985 = vadd.f32 0.0, %v1984
      %1986 = vmatmul.f32.gmra.mxu0 %v705
      %v1987 = vpop.f32.mrf.mxu0
      %v1988 = vadd.f32 0.0, %v1987
      %1989 = vmatmul.f32.gmra.mxu0 %v707
      %v1990 = vpop.f32.mrf.mxu0
      %v1991 = vadd.f32 0.0, %v1990
      %1992 = vmatmul.f32.gmra.mxu0 %v709
      %v1993 = vpop.f32.mrf.mxu0
      %v1994 = vadd.f32 0.0, %v1993
      %1995 = vmatmul.f32.gmra.mxu0 %v711
      %v1996 = vpop.f32.mrf.mxu0
      %v1997 = vadd.f32 0.0, %v1996
      %1998 = vmatmul.f32.gmra.mxu0 %v713
      %v1999 = vpop.f32.mrf.mxu0
      %v2000 = vadd.f32 0.0, %v1999
      %2001 = vmatmul.f32.gmra.mxu0 %v715
      %v2002 = vpop.f32.mrf.mxu0
      %v2003 = vadd.f32 0.0, %v2002
      %2004 = vmatmul.f32.gmra.mxu0 %v717
      %v2005 = vpop.f32.mrf.mxu0
      %v2006 = vadd.f32 0.0, %v2005
      %2007 = vmatmul.f32.gmra.mxu0 %v719
      %v2008 = vpop.f32.mrf.mxu0
      %v2009 = vadd.f32 0.0, %v2008
      %2010 = vmatmul.f32.gmra.mxu0 %v721
      %v2011 = vpop.f32.mrf.mxu0
      %v2012 = vadd.f32 0.0, %v2011
      %2013 = vmatmul.f32.gmra.mxu0 %v723
      %v2014 = vpop.f32.mrf.mxu0
      %v2015 = vadd.f32 0.0, %v2014
      %2016 = vmatmul.f32.gmra.mxu0 %v725
      %v2017 = vpop.f32.mrf.mxu0
      %v2018 = vadd.f32 0.0, %v2017
      %2019 = vmatmul.f32.gmra.mxu0 %v727
      %v2020 = vpop.f32.mrf.mxu0
      %v2021 = vadd.f32 0.0, %v2020
      %2022 = vmatmul.f32.gmra.mxu0 %v729
      %v2023 = vpop.f32.mrf.mxu0
      %v2024 = vadd.f32 0.0, %v2023
      %2025 = vmatmul.f32.gmra.mxu0 %v731
      %v2026 = vpop.f32.mrf.mxu0
      %v2027 = vadd.f32 0.0, %v2026
      %2028 = vmatmul.f32.gmra.mxu0 %v733
      %v2029 = vpop.f32.mrf.mxu0
      %v2030 = vadd.f32 0.0, %v2029
      %2031 = vmatmul.f32.gmra.mxu0 %v735
      %v2032 = vpop.f32.mrf.mxu0
      %v2033 = vadd.f32 0.0, %v2032
      %2034 = vmatmul.f32.gmra.mxu0 %v737
      %v2035 = vpop.f32.mrf.mxu0
      %v2036 = vadd.f32 0.0, %v2035
      %2037 = vmatmul.f32.gmra.mxu0 %v739
      %v2038 = vpop.f32.mrf.mxu0
      %v2039 = vadd.f32 0.0, %v2038
      %2040 = vmatmul.f32.gmra.mxu0 %v741
      %v2041 = vpop.f32.mrf.mxu0
      %v2042 = vadd.f32 0.0, %v2041
      %2043 = vmatmul.f32.gmra.mxu0 %v743
      %v2044 = vpop.f32.mrf.mxu0
      %v2045 = vadd.f32 0.0, %v2044
      %2046 = vmatmul.f32.gmra.mxu0 %v1482
      %v2047 = vpop.f32.mrf.mxu0
      %v2048 = vadd.f32 0.0, %v2047
      %2049 = vmatmul.f32.gmra.mxu0 %v1484
      %v2050 = vpop.f32.mrf.mxu0
      %v2051 = vadd.f32 0.0, %v2050
      %2052 = vmatmul.f32.gmra.mxu0 %v1942
      %v2053 = vpop.f32.mrf.mxu0
      %v2054 = vadd.f32 0.0, %v2053
      %2055 = vmatmul.f32.gmra.mxu0 %v1944
      %v2056 = vpop.f32.mrf.mxu0
      %v2057 = vadd.f32 0.0, %v2056
      %2058 = vdwg.mxu0
      %v2059 = vadd.f32 %v1904, %v1964
      %v2060 = vadd.f32 %v1905, %v1967
      %v2061 = vadd.f32 %v1906, %v1970
      %v2062 = vadd.f32 %v1907, %v1973
      %v2063 = vadd.f32 %v1908, %v1976
      %v2064 = vadd.f32 %v1909, %v1979
      %v2065 = vadd.f32 %v1910, %v1982
      %v2066 = vadd.f32 %v1911, %v1985
      %v2067 = vadd.f32 %v1912, %v1988
      %v2068 = vadd.f32 %v1913, %v1991
      %v2069 = vadd.f32 %v1914, %v1994
      %v2070 = vadd.f32 %v1915, %v1997
      %v2071 = vadd.f32 %v1916, %v2000
      %v2072 = vadd.f32 %v1917, %v2003
      %v2073 = vadd.f32 %v1918, %v2006
      %v2074 = vadd.f32 %v1919, %v2009
      %v2075 = vadd.f32 %v1920, %v2012
      %v2076 = vadd.f32 %v1921, %v2015
      %v2077 = vadd.f32 %v1922, %v2018
      %v2078 = vadd.f32 %v1923, %v2021
      %v2079 = vadd.f32 %v1924, %v2024
      %v2080 = vadd.f32 %v1925, %v2027
      %v2081 = vadd.f32 %v1926, %v2030
      %v2082 = vadd.f32 %v1927, %v2033
      %v2083 = vadd.f32 %v1928, %v2036
      %v2084 = vadd.f32 %v1929, %v2039
      %v2085 = vadd.f32 %v1930, %v2042
      %v2086 = vadd.f32 %v1931, %v2045
      %v2087 = vadd.f32 %v1932, %v2048
      %v2088 = vadd.f32 %v1933, %v2051
      %v2089 = vadd.f32 %v1934, %v2054
      %v2090 = vadd.f32 %v1935, %v2057
      %v2091 = vrot.slane %v540, 2
      %v2092 = vrot.slane %v541, 2
      %v2093 = vsel %vm1035, %v2091, %v2092
      %v2094 = vrot.slane %v542, 2
      %v2095 = vsel %vm1035, %v2092, %v2094
      %v2096 = vsel %vm296, %v2093, 0
      %v2098 = vsel %vm296, %v2095, 0
      %2100 = vmatpush.msra.mxu0 0.0
      %2101 = vmatpush.msra.mxu0 0.0
      %2102 = vmatpush.msra.mxu0 0.0
      %2103 = vmatpush.msra.mxu0 0.0
      %2104 = vmatpush.msra.mxu0 0.0
      %2105 = vmatpush.msra.mxu0 0.0
      %2106 = vmatpush.msra.mxu0 0.0
      %2107 = vmatpush.msra.mxu0 0.0
      %2108 = vmatpush.msra.mxu0 0.0
      %2109 = vmatpush.msra.mxu0 0.0
      %2110 = vmatpush.msra.mxu0 0.0
      %2111 = vmatpush.msra.mxu0 0.0
      %2112 = vmatpush.msra.mxu0 0.0
      %2113 = vmatpush.msra.mxu0 0.0
      %2114 = vmatpush.msra.mxu0 0.0
      %2115 = vmatpush.msra.mxu0 %v551
      %2116 = vmatmul.f32.gmra.mxu0 %v1124
      %v2117 = vpop.f32.mrf.mxu0
      %v2118 = vadd.f32 0.0, %v2117
      %2119 = vmatmul.f32.gmra.mxu0 %v1126
      %v2120 = vpop.f32.mrf.mxu0
      %v2121 = vadd.f32 0.0, %v2120
      %2122 = vmatmul.f32.gmra.mxu0 %v1128
      %v2123 = vpop.f32.mrf.mxu0
      %v2124 = vadd.f32 0.0, %v2123
      %2125 = vmatmul.f32.gmra.mxu0 %v1130
      %v2126 = vpop.f32.mrf.mxu0
      %v2127 = vadd.f32 0.0, %v2126
      %2128 = vmatmul.f32.gmra.mxu0 %v1132
      %v2129 = vpop.f32.mrf.mxu0
      %v2130 = vadd.f32 0.0, %v2129
      %2131 = vmatmul.f32.gmra.mxu0 %v1134
      %v2132 = vpop.f32.mrf.mxu0
      %v2133 = vadd.f32 0.0, %v2132
      %2134 = vmatmul.f32.gmra.mxu0 %v1136
      %v2135 = vpop.f32.mrf.mxu0
      %v2136 = vadd.f32 0.0, %v2135
      %2137 = vmatmul.f32.gmra.mxu0 %v1138
      %v2138 = vpop.f32.mrf.mxu0
      %v2139 = vadd.f32 0.0, %v2138
      %2140 = vmatmul.f32.gmra.mxu0 %v1140
      %v2141 = vpop.f32.mrf.mxu0
      %v2142 = vadd.f32 0.0, %v2141
      %2143 = vmatmul.f32.gmra.mxu0 %v1142
      %v2144 = vpop.f32.mrf.mxu0
      %v2145 = vadd.f32 0.0, %v2144
      %2146 = vmatmul.f32.gmra.mxu0 %v1144
      %v2147 = vpop.f32.mrf.mxu0
      %v2148 = vadd.f32 0.0, %v2147
      %2149 = vmatmul.f32.gmra.mxu0 %v1146
      %v2150 = vpop.f32.mrf.mxu0
      %v2151 = vadd.f32 0.0, %v2150
      %2152 = vmatmul.f32.gmra.mxu0 %v1148
      %v2153 = vpop.f32.mrf.mxu0
      %v2154 = vadd.f32 0.0, %v2153
      %2155 = vmatmul.f32.gmra.mxu0 %v1150
      %v2156 = vpop.f32.mrf.mxu0
      %v2157 = vadd.f32 0.0, %v2156
      %2158 = vmatmul.f32.gmra.mxu0 %v1152
      %v2159 = vpop.f32.mrf.mxu0
      %v2160 = vadd.f32 0.0, %v2159
      %2161 = vmatmul.f32.gmra.mxu0 %v1154
      %v2162 = vpop.f32.mrf.mxu0
      %v2163 = vadd.f32 0.0, %v2162
      %2164 = vmatmul.f32.gmra.mxu0 %v1156
      %v2165 = vpop.f32.mrf.mxu0
      %v2166 = vadd.f32 0.0, %v2165
      %2167 = vmatmul.f32.gmra.mxu0 %v1158
      %v2168 = vpop.f32.mrf.mxu0
      %v2169 = vadd.f32 0.0, %v2168
      %2170 = vmatmul.f32.gmra.mxu0 %v1160
      %v2171 = vpop.f32.mrf.mxu0
      %v2172 = vadd.f32 0.0, %v2171
      %2173 = vmatmul.f32.gmra.mxu0 %v1162
      %v2174 = vpop.f32.mrf.mxu0
      %v2175 = vadd.f32 0.0, %v2174
      %2176 = vmatmul.f32.gmra.mxu0 %v1164
      %v2177 = vpop.f32.mrf.mxu0
      %v2178 = vadd.f32 0.0, %v2177
      %2179 = vmatmul.f32.gmra.mxu0 %v1166
      %v2180 = vpop.f32.mrf.mxu0
      %v2181 = vadd.f32 0.0, %v2180
      %2182 = vmatmul.f32.gmra.mxu0 %v1168
      %v2183 = vpop.f32.mrf.mxu0
      %v2184 = vadd.f32 0.0, %v2183
      %2185 = vmatmul.f32.gmra.mxu0 %v1170
      %v2186 = vpop.f32.mrf.mxu0
      %v2187 = vadd.f32 0.0, %v2186
      %2188 = vmatmul.f32.gmra.mxu0 %v1172
      %v2189 = vpop.f32.mrf.mxu0
      %v2190 = vadd.f32 0.0, %v2189
      %2191 = vmatmul.f32.gmra.mxu0 %v1174
      %v2192 = vpop.f32.mrf.mxu0
      %v2193 = vadd.f32 0.0, %v2192
      %2194 = vmatmul.f32.gmra.mxu0 %v1176
      %v2195 = vpop.f32.mrf.mxu0
      %v2196 = vadd.f32 0.0, %v2195
      %2197 = vmatmul.f32.gmra.mxu0 %v1178
      %v2198 = vpop.f32.mrf.mxu0
      %v2199 = vadd.f32 0.0, %v2198
      %2200 = vmatmul.f32.gmra.mxu0 %v1636
      %v2201 = vpop.f32.mrf.mxu0
      %v2202 = vadd.f32 0.0, %v2201
      %2203 = vmatmul.f32.gmra.mxu0 %v1638
      %v2204 = vpop.f32.mrf.mxu0
      %v2205 = vadd.f32 0.0, %v2204
      %2206 = vmatmul.f32.gmra.mxu0 %v2096
      %v2207 = vpop.f32.mrf.mxu0
      %v2208 = vadd.f32 0.0, %v2207
      %2209 = vmatmul.f32.gmra.mxu0 %v2098
      %v2210 = vpop.f32.mrf.mxu0
      %v2211 = vadd.f32 0.0, %v2210
      %2212 = vdwg.mxu0
      %v2213 = vadd.f32 %v2059, %v2118
      %v2214 = vadd.f32 %v2060, %v2121
      %v2215 = vadd.f32 %v2061, %v2124
      %v2216 = vadd.f32 %v2062, %v2127
      %v2217 = vadd.f32 %v2063, %v2130
      %v2218 = vadd.f32 %v2064, %v2133
      %v2219 = vadd.f32 %v2065, %v2136
      %v2220 = vadd.f32 %v2066, %v2139
      %v2221 = vadd.f32 %v2067, %v2142
      %v2222 = vadd.f32 %v2068, %v2145
      %v2223 = vadd.f32 %v2069, %v2148
      %v2224 = vadd.f32 %v2070, %v2151
      %v2225 = vadd.f32 %v2071, %v2154
      %v2226 = vadd.f32 %v2072, %v2157
      %v2227 = vadd.f32 %v2073, %v2160
      %v2228 = vadd.f32 %v2074, %v2163
      %v2229 = vadd.f32 %v2075, %v2166
      %v2230 = vadd.f32 %v2076, %v2169
      %v2231 = vadd.f32 %v2077, %v2172
      %v2232 = vadd.f32 %v2078, %v2175
      %v2233 = vadd.f32 %v2079, %v2178
      %v2234 = vadd.f32 %v2080, %v2181
      %v2235 = vadd.f32 %v2081, %v2184
      %v2236 = vadd.f32 %v2082, %v2187
      %v2237 = vadd.f32 %v2083, %v2190
      %v2238 = vadd.f32 %v2084, %v2193
      %v2239 = vadd.f32 %v2085, %v2196
      %v2240 = vadd.f32 %v2086, %v2199
      %v2241 = vadd.f32 %v2087, %v2202
      %v2242 = vadd.f32 %v2088, %v2205
      %v2243 = vadd.f32 %v2089, %v2208
      %v2244 = vadd.f32 %v2090, %v2211
      %v2245 = vld [vmem:[%s4] sm:$0x1]
      %v2247 = vperm.slane %v2245, 0
      %v2249 = vadd.f32 %v2213, %v2247
      %v2250 = vadd.f32 %v2214, %v2247
      %v2251 = vadd.f32 %v2215, %v2247
      %v2252 = vadd.f32 %v2216, %v2247
      %v2253 = vadd.f32 %v2217, %v2247
      %v2254 = vadd.f32 %v2218, %v2247
      %v2255 = vadd.f32 %v2219, %v2247
      %v2256 = vadd.f32 %v2220, %v2247
      %v2257 = vadd.f32 %v2221, %v2247
      %v2258 = vadd.f32 %v2222, %v2247
      %v2259 = vadd.f32 %v2223, %v2247
      %v2260 = vadd.f32 %v2224, %v2247
      %v2261 = vadd.f32 %v2225, %v2247
      %v2262 = vadd.f32 %v2226, %v2247
      %v2263 = vadd.f32 %v2227, %v2247
      %v2264 = vadd.f32 %v2228, %v2247
      %v2265 = vadd.f32 %v2229, %v2247
      %v2266 = vadd.f32 %v2230, %v2247
      %v2267 = vadd.f32 %v2231, %v2247
      %v2268 = vadd.f32 %v2232, %v2247
      %v2269 = vadd.f32 %v2233, %v2247
      %v2270 = vadd.f32 %v2234, %v2247
      %v2271 = vadd.f32 %v2235, %v2247
      %v2272 = vadd.f32 %v2236, %v2247
      %v2273 = vadd.f32 %v2237, %v2247
      %v2274 = vadd.f32 %v2238, %v2247
      %v2275 = vadd.f32 %v2239, %v2247
      %v2276 = vadd.f32 %v2240, %v2247
      %v2277 = vadd.f32 %v2241, %v2247
      %v2278 = vadd.f32 %v2242, %v2247
      %v2279 = vadd.f32 %v2243, %v2247
      %v2280 = vadd.f32 %v2244, %v2247
      %v2281 = vmax.f32 %v2249, 0.0
      %v2282 = vmax.f32 %v2250, 0.0
      %v2283 = vmax.f32 %v2251, 0.0
      %v2284 = vmax.f32 %v2252, 0.0
      %v2285 = vmax.f32 %v2253, 0.0
      %v2286 = vmax.f32 %v2254, 0.0
      %v2287 = vmax.f32 %v2255, 0.0
      %v2288 = vmax.f32 %v2256, 0.0
      %v2289 = vmax.f32 %v2257, 0.0
      %v2290 = vmax.f32 %v2258, 0.0
      %v2291 = vmax.f32 %v2259, 0.0
      %v2292 = vmax.f32 %v2260, 0.0
      %v2293 = vmax.f32 %v2261, 0.0
      %v2294 = vmax.f32 %v2262, 0.0
      %v2295 = vmax.f32 %v2263, 0.0
      %v2296 = vmax.f32 %v2264, 0.0
      %v2297 = vmax.f32 %v2265, 0.0
      %v2298 = vmax.f32 %v2266, 0.0
      %v2299 = vmax.f32 %v2267, 0.0
      %v2300 = vmax.f32 %v2268, 0.0
      %v2301 = vmax.f32 %v2269, 0.0
      %v2302 = vmax.f32 %v2270, 0.0
      %v2303 = vmax.f32 %v2271, 0.0
      %v2304 = vmax.f32 %v2272, 0.0
      %v2305 = vmax.f32 %v2273, 0.0
      %v2306 = vmax.f32 %v2274, 0.0
      %v2307 = vmax.f32 %v2275, 0.0
      %v2308 = vmax.f32 %v2276, 0.0
      %v2309 = vmax.f32 %v2277, 0.0
      %v2310 = vmax.f32 %v2278, 0.0
      %v2311 = vmax.f32 %v2279, 0.0
      %v2312 = vmax.f32 %v2280, 0.0
      %2313 = vst.msk [vmem:[%s289] sm:$0xff] %vm296, %v2281
      %2314 = vst.msk [vmem:[%s289 + $0x8] sm:$0xff] %vm296, %v2282
      %2315 = vst.msk [vmem:[%s289 + $0x10] sm:$0xff] %vm296, %v2283
      %2316 = vst.msk [vmem:[%s289 + $0x18] sm:$0xff] %vm296, %v2284
      %2317 = vst.msk [vmem:[%s289 + $0x20] sm:$0xff] %vm296, %v2285
      %2318 = vst.msk [vmem:[%s289 + $0x28] sm:$0xff] %vm296, %v2286
      %2319 = vst.msk [vmem:[%s289 + $0x30] sm:$0xff] %vm296, %v2287
      %2320 = vst.msk [vmem:[%s289 + $0x38] sm:$0xff] %vm296, %v2288
      %2321 = vst.msk [vmem:[%s289 + $0x40] sm:$0xff] %vm296, %v2289
      %2322 = vst.msk [vmem:[%s289 + $0x48] sm:$0xff] %vm296, %v2290
      %2323 = vst.msk [vmem:[%s289 + $0x50] sm:$0xff] %vm296, %v2291
      %2324 = vst.msk [vmem:[%s289 + $0x58] sm:$0xff] %vm296, %v2292
      %2325 = vst.msk [vmem:[%s289 + $0x60] sm:$0xff] %vm296, %v2293
      %2326 = vst.msk [vmem:[%s289 + $0x68] sm:$0xff] %vm296, %v2294
      %2327 = vst.msk [vmem:[%s289 + $0x70] sm:$0xff] %vm296, %v2295
      %2328 = vst.msk [vmem:[%s289 + $0x78] sm:$0xff] %vm296, %v2296
      %2329 = vst.msk [vmem:[%s289 + $0x80] sm:$0xff] %vm296, %v2297
      %2330 = vst.msk [vmem:[%s289 + $0x88] sm:$0xff] %vm296, %v2298
      %2331 = vst.msk [vmem:[%s289 + $0x90] sm:$0xff] %vm296, %v2299
      %2332 = vst.msk [vmem:[%s289 + $0x98] sm:$0xff] %vm296, %v2300
      %2333 = vst.msk [vmem:[%s289 + $0xa0] sm:$0xff] %vm296, %v2301
      %2334 = vst.msk [vmem:[%s289 + $0xa8] sm:$0xff] %vm296, %v2302
      %2335 = vst.msk [vmem:[%s289 + $0xb0] sm:$0xff] %vm296, %v2303
      %2336 = vst.msk [vmem:[%s289 + $0xb8] sm:$0xff] %vm296, %v2304
      %2337 = vst.msk [vmem:[%s289 + $0xc0] sm:$0xff] %vm296, %v2305
      %2338 = vst.msk [vmem:[%s289 + $0xc8] sm:$0xff] %vm296, %v2306
      %2339 = vst.msk [vmem:[%s289 + $0xd0] sm:$0xff] %vm296, %v2307
      %2340 = vst.msk [vmem:[%s289 + $0xd8] sm:$0xff] %vm296, %v2308
      %2341 = vst.msk [vmem:[%s289 + $0xe0] sm:$0xff] %vm296, %v2309
      %2342 = vst.msk [vmem:[%s289 + $0xe8] sm:$0xff] %vm296, %v2310
      %2343 = vst.msk [vmem:[%s289 + $0xf0] sm:$0xff] %vm296, %v2311
      %2344 = vst.msk [vmem:[%s289 + $0xf8] sm:$0xff] %vm296, %v2312
      %v2345 = vsel %vm296, %v2281, 0.0
      %v2346 = vsel %vm296, %v2282, 0.0
      %v2347 = vadd.f32 %v2345, %v2346
      %v2348 = vsel %vm296, %v2283, 0.0
      %v2349 = vadd.f32 %v2347, %v2348
      %v2350 = vsel %vm296, %v2284, 0.0
      %v2351 = vadd.f32 %v2349, %v2350
      %v2352 = vsel %vm296, %v2285, 0.0
      %v2353 = vadd.f32 %v2351, %v2352
      %v2354 = vsel %vm296, %v2286, 0.0
      %v2355 = vadd.f32 %v2353, %v2354
      %v2356 = vsel %vm296, %v2287, 0.0
      %v2357 = vadd.f32 %v2355, %v2356
      %v2358 = vsel %vm296, %v2288, 0.0
      %v2359 = vadd.f32 %v2357, %v2358
      %v2360 = vsel %vm296, %v2289, 0.0
      %v2361 = vadd.f32 %v2359, %v2360
      %v2362 = vsel %vm296, %v2290, 0.0
      %v2363 = vadd.f32 %v2361, %v2362
      %v2364 = vsel %vm296, %v2291, 0.0
      %v2365 = vadd.f32 %v2363, %v2364
      %v2366 = vsel %vm296, %v2292, 0.0
      %v2367 = vadd.f32 %v2365, %v2366
      %v2368 = vsel %vm296, %v2293, 0.0
      %v2369 = vadd.f32 %v2367, %v2368
      %v2370 = vsel %vm296, %v2294, 0.0
      %v2371 = vadd.f32 %v2369, %v2370
      %v2372 = vsel %vm296, %v2295, 0.0
      %v2373 = vadd.f32 %v2371, %v2372
      %v2374 = vsel %vm296, %v2296, 0.0
      %v2375 = vadd.f32 %v2373, %v2374
      %v2376 = vsel %vm296, %v2297, 0.0
      %v2377 = vadd.f32 %v2375, %v2376
      %v2378 = vsel %vm296, %v2298, 0.0
      %v2379 = vadd.f32 %v2377, %v2378
      %v2380 = vsel %vm296, %v2299, 0.0
      %v2381 = vadd.f32 %v2379, %v2380
      %v2382 = vsel %vm296, %v2300, 0.0
      %v2383 = vadd.f32 %v2381, %v2382
      %v2384 = vsel %vm296, %v2301, 0.0
      %v2385 = vadd.f32 %v2383, %v2384
      %v2386 = vsel %vm296, %v2302, 0.0
      %v2387 = vadd.f32 %v2385, %v2386
      %v2388 = vsel %vm296, %v2303, 0.0
      %v2389 = vadd.f32 %v2387, %v2388
      %v2390 = vsel %vm296, %v2304, 0.0
      %v2391 = vadd.f32 %v2389, %v2390
      %v2392 = vsel %vm296, %v2305, 0.0
      %v2393 = vadd.f32 %v2391, %v2392
      %v2394 = vsel %vm296, %v2306, 0.0
      %v2395 = vadd.f32 %v2393, %v2394
      %v2396 = vsel %vm296, %v2307, 0.0
      %v2397 = vadd.f32 %v2395, %v2396
      %v2398 = vsel %vm296, %v2308, 0.0
      %v2399 = vadd.f32 %v2397, %v2398
      %v2400 = vsel %vm296, %v2309, 0.0
      %v2401 = vadd.f32 %v2399, %v2400
      %v2402 = vsel %vm296, %v2310, 0.0
      %v2403 = vadd.f32 %v2401, %v2402
      %v2404 = vsel %vm296, %v2311, 0.0
      %v2405 = vadd.f32 %v2403, %v2404
      %v2406 = vsel %vm296, %v2312, 0.0
      %v2407 = vadd.f32 %v2405, %v2406
      %v2408 = vrot.slane %v2407, 4
      %v2409 = vadd.f32 %v2407, %v2408
      %v2410 = vrot.slane %v2409, 2
      %v2411 = vadd.f32 %v2409, %v2410
      %v2412 = vrot.slane %v2411, 1
      %v2413 = vadd.f32 %v2411, %v2412
      %vm2414 = vcmask 57344
      %2415 = vst.msk [vmem:[%s292] sm:$0x1] %vm2414, %v2413
      %v2416 = vmul.f32 %v2281, %v2281
      %v2417 = vmul.f32 %v2282, %v2282
      %v2418 = vmul.f32 %v2283, %v2283
      %v2419 = vmul.f32 %v2284, %v2284
      %v2420 = vmul.f32 %v2285, %v2285
      %v2421 = vmul.f32 %v2286, %v2286
      %v2422 = vmul.f32 %v2287, %v2287
      %v2423 = vmul.f32 %v2288, %v2288
      %v2424 = vmul.f32 %v2289, %v2289
      %v2425 = vmul.f32 %v2290, %v2290
      %v2426 = vmul.f32 %v2291, %v2291
      %v2427 = vmul.f32 %v2292, %v2292
      %v2428 = vmul.f32 %v2293, %v2293
      %v2429 = vmul.f32 %v2294, %v2294
      %v2430 = vmul.f32 %v2295, %v2295
      %v2431 = vmul.f32 %v2296, %v2296
      %v2432 = vmul.f32 %v2297, %v2297
      %v2433 = vmul.f32 %v2298, %v2298
      %v2434 = vmul.f32 %v2299, %v2299
      %v2435 = vmul.f32 %v2300, %v2300
      %v2436 = vmul.f32 %v2301, %v2301
      %v2437 = vmul.f32 %v2302, %v2302
      %v2438 = vmul.f32 %v2303, %v2303
      %v2439 = vmul.f32 %v2304, %v2304
      %v2440 = vmul.f32 %v2305, %v2305
      %v2441 = vmul.f32 %v2306, %v2306
      %v2442 = vmul.f32 %v2307, %v2307
      %v2443 = vmul.f32 %v2308, %v2308
      %v2444 = vmul.f32 %v2309, %v2309
      %v2445 = vmul.f32 %v2310, %v2310
      %v2446 = vmul.f32 %v2311, %v2311
      %v2447 = vmul.f32 %v2312, %v2312
      %v2448 = vsel %vm296, %v2416, 0.0
      %v2449 = vsel %vm296, %v2417, 0.0
      %v2450 = vadd.f32 %v2448, %v2449
      %v2451 = vsel %vm296, %v2418, 0.0
      %v2452 = vadd.f32 %v2450, %v2451
      %v2453 = vsel %vm296, %v2419, 0.0
      %v2454 = vadd.f32 %v2452, %v2453
      %v2455 = vsel %vm296, %v2420, 0.0
      %v2456 = vadd.f32 %v2454, %v2455
      %v2457 = vsel %vm296, %v2421, 0.0
      %v2458 = vadd.f32 %v2456, %v2457
      %v2459 = vsel %vm296, %v2422, 0.0
      %v2460 = vadd.f32 %v2458, %v2459
      %v2461 = vsel %vm296, %v2423, 0.0
      %v2462 = vadd.f32 %v2460, %v2461
      %v2463 = vsel %vm296, %v2424, 0.0
      %v2464 = vadd.f32 %v2462, %v2463
      %v2465 = vsel %vm296, %v2425, 0.0
      %v2466 = vadd.f32 %v2464, %v2465
      %v2467 = vsel %vm296, %v2426, 0.0
      %v2468 = vadd.f32 %v2466, %v2467
      %v2469 = vsel %vm296, %v2427, 0.0
      %v2470 = vadd.f32 %v2468, %v2469
      %v2471 = vsel %vm296, %v2428, 0.0
      %v2472 = vadd.f32 %v2470, %v2471
      %v2473 = vsel %vm296, %v2429, 0.0
      %v2474 = vadd.f32 %v2472, %v2473
      %v2475 = vsel %vm296, %v2430, 0.0
      %v2476 = vadd.f32 %v2474, %v2475
      %v2477 = vsel %vm296, %v2431, 0.0
      %v2478 = vadd.f32 %v2476, %v2477
      %v2479 = vsel %vm296, %v2432, 0.0
      %v2480 = vadd.f32 %v2478, %v2479
      %v2481 = vsel %vm296, %v2433, 0.0
      %v2482 = vadd.f32 %v2480, %v2481
      %v2483 = vsel %vm296, %v2434, 0.0
      %v2484 = vadd.f32 %v2482, %v2483
      %v2485 = vsel %vm296, %v2435, 0.0
      %v2486 = vadd.f32 %v2484, %v2485
      %v2487 = vsel %vm296, %v2436, 0.0
      %v2488 = vadd.f32 %v2486, %v2487
      %v2489 = vsel %vm296, %v2437, 0.0
      %v2490 = vadd.f32 %v2488, %v2489
      %v2491 = vsel %vm296, %v2438, 0.0
      %v2492 = vadd.f32 %v2490, %v2491
      %v2493 = vsel %vm296, %v2439, 0.0
      %v2494 = vadd.f32 %v2492, %v2493
      %v2495 = vsel %vm296, %v2440, 0.0
      %v2496 = vadd.f32 %v2494, %v2495
      %v2497 = vsel %vm296, %v2441, 0.0
      %v2498 = vadd.f32 %v2496, %v2497
      %v2499 = vsel %vm296, %v2442, 0.0
      %v2500 = vadd.f32 %v2498, %v2499
      %v2501 = vsel %vm296, %v2443, 0.0
      %v2502 = vadd.f32 %v2500, %v2501
      %v2503 = vsel %vm296, %v2444, 0.0
      %v2504 = vadd.f32 %v2502, %v2503
      %v2505 = vsel %vm296, %v2445, 0.0
      %v2506 = vadd.f32 %v2504, %v2505
      %v2507 = vsel %vm296, %v2446, 0.0
      %v2508 = vadd.f32 %v2506, %v2507
      %v2509 = vsel %vm296, %v2447, 0.0
      %v2510 = vadd.f32 %v2508, %v2509
      %v2511 = vrot.slane %v2510, 4
      %v2512 = vadd.f32 %v2510, %v2511
      %v2513 = vrot.slane %v2512, 2
      %v2514 = vadd.f32 %v2512, %v2513
      %v2515 = vrot.slane %v2514, 1
      %v2516 = vadd.f32 %v2514, %v2515
      %2517 = vst.msk [vmem:[%s295] sm:$0x1] %vm2414, %v2516
      %p2518 = scmp.lt.s32.totalorder %s19, 1
      %s2519 = scalar_select %p2518, %s19, 1
      %s2520 = smul.addr %s2519, 32
      %s2521 = smul.addr %s2520, 8
      %s2522 = scalar_lea.vmem %s5, %s2521
      %p2523 = scmp.lt.s32.totalorder %s19, 1
      %s2524 = scalar_select %p2523, %s19, 1
      %s2525 = scalar_lea.vmem %s6, %s2524
      %p2526 = scmp.lt.s32.totalorder %s19, 1
      %s2527 = scalar_select %p2526, %s19, 1
      %s2528 = scalar_lea.vmem %s7, %s2527
      // Predicated region
      $region41: #{resnet_bottleneck_block.5} parent=39 // pred_check
        %p2529 = pneg %p147
      $region42: #{resnet_bottleneck_block.5} parent=39 // pred_check_branch
        %2531 = sbr.rel (%p2529) target = $region44
      $region43: #{resnet_bottleneck_block.5} parent=39 // pred_region
        _
      $region44: #{resnet_bottleneck_block.5} parent=39 // pred_fallthru
        _
      // Predicated region
      $region45: #{resnet_bottleneck_block.5} parent=39 // pred_check
        %p2532 = pneg %p173
      $region46: #{resnet_bottleneck_block.5} parent=39 // pred_check_branch
        %2534 = sbr.rel (%p2532) target = $region48
      $region47: #{resnet_bottleneck_block.5} parent=39 // pred_region
        _
      $region48: #{resnet_bottleneck_block.5} parent=39 // pred_fallthru
        _
      // Predicated region
      $region49: #{resnet_bottleneck_block.5} parent=39 // pred_check
        %p2535 = pneg %p199
      $region50: #{resnet_bottleneck_block.5} parent=39 // pred_check_branch
        %2537 = sbr.rel (%p2535) target = $region52
      $region51: #{resnet_bottleneck_block.5} parent=39 // pred_region
        _
      $region52: #{resnet_bottleneck_block.5} parent=39 // pred_fallthru
        _
    $region40: #{resnet_bottleneck_block.5} parent=5 // pred_fallthru
      _
    %p2538 = scmp.le.s32.totalorder 2, %s14
    // Predicated region
    $region53: #{resnet_bottleneck_block.5} parent=5 // pred_check
      %p2539 = pneg %p2538
    $region54: #{resnet_bottleneck_block.5} parent=5 // pred_check_branch
      %2541 = sbr.rel (%p2539) target = $region56
    $region55: #{resnet_bottleneck_block.5} parent=5 // pred_region
      %s2542 = ssub.s32 %s14, 2
      // Predicated region
      $region57: #{resnet_bottleneck_block.5} parent=55 // pred_check
        %p2543 = pneg %p153
      $region58: #{resnet_bottleneck_block.5} parent=55 // pred_check_branch
        %2545 = sbr.rel (%p2543) target = $region60
      $region59: #{resnet_bottleneck_block.5} parent=55 // pred_region
        %p2546 = scmp.lt.s32.totalorder %s20, 1
        %s2547 = scalar_select %p2546, %s20, 1
        %s2548 = smul.addr %s2547, 32
        %s2549 = smul.addr %s2548, 8
        %s2550 = scalar_lea.vmem %s5, %s2549
      $region60: #{resnet_bottleneck_block.5} parent=55 // pred_fallthru
        _
      // Predicated region
      $region61: #{resnet_bottleneck_block.5} parent=55 // pred_check
        %p2551 = pneg %p179
      $region62: #{resnet_bottleneck_block.5} parent=55 // pred_check_branch
        %2553 = sbr.rel (%p2551) target = $region64
      $region63: #{resnet_bottleneck_block.5} parent=55 // pred_region
        %p2554 = scmp.lt.s32.totalorder %s20, 1
        %s2555 = scalar_select %p2554, %s20, 1
        %s2556 = scalar_lea.vmem %s6, %s2555
      $region64: #{resnet_bottleneck_block.5} parent=55 // pred_fallthru
        _
      // Predicated region
      $region65: #{resnet_bottleneck_block.5} parent=55 // pred_check
        %p2557 = pneg %p205
      $region66: #{resnet_bottleneck_block.5} parent=55 // pred_check_branch
        %2559 = sbr.rel (%p2557) target = $region68
      $region67: #{resnet_bottleneck_block.5} parent=55 // pred_region
        %p2560 = scmp.lt.s32.totalorder %s20, 1
        %s2561 = scalar_select %p2560, %s20, 1
        %s2562 = scalar_lea.vmem %s7, %s2561
      $region68: #{resnet_bottleneck_block.5} parent=55 // pred_fallthru
        _
    $region56: #{resnet_bottleneck_block.5} parent=5 // pred_fallthru
      _
  $region6: #{resnet_bottleneck_block.5} parent=0 // loop_footer
    %s18 = sadd.s32 1, %s14
  $region7: #{resnet_bottleneck_block.5} parent=0 // loop_footer_branch
    %13 = sbr.rel target = $region3
  $region8: #{resnet_bottleneck_block.5} parent=0 // loop_exit
    _

</llo_original>
